<compile_context>
chip_gen: v7x
topology: tpu7x:2x2x1
jax: 0.10.0
libtpu: 0.0.40
codegen_flags: <defaults>
</compile_context>

<pallas_src>
import functools

import jax
import jax.numpy as jnp
from jax.experimental import pallas as pl
from jax.experimental.pallas import tpu as pltpu


# ----------------------------------------------------------------------------
# Kernel 1: fused 3x3 conv (pad=1) + bias + ReLU + 2x2/2 maxpool.
# One merged MXU matmul per grid step over a block of `nb` images.
# ----------------------------------------------------------------------------
def _conv_relu_pool_kernel(x_ref, w_ref, b_ref, o_ref, *, nb, h, w2, cout):
    """x_ref : (nb*2*h*w2, 9*cin) bf16, rows ordered (img, col-parity, h, j).
       w_ref : (9*cin, cout)      bf16, K ordered (kh, kw, cin).
       b_ref : (1, cout)          f32.
       o_ref : (nb*h2, w2, cout)  pooled output tile (bf16)."""
    h2 = h // 2
    # Single merged matmul: all 9 taps along K, even/odd output columns and
    # all nb images along M.  f32 accumulation happens on the MXU itself.
    y = jnp.dot(x_ref[...], w_ref[...], preferred_element_type=jnp.float32)
    y = jnp.maximum(y + b_ref[...], 0.0)                 # bias + ReLU (f32)

    # maxpool along W: even output columns vs odd output columns (elementwise).
    y = y.reshape(nb, 2, h * w2, cout)
    y = jnp.maximum(y[:, 0], y[:, 1])                    # (nb, h*w2, cout)

    # maxpool along H: adjacent row-blocks of w2 rows (sublane-aligned slices).
    y = y.reshape(nb * h2, 2 * w2, cout)
    y = jnp.maximum(y[:, :w2, :], y[:, w2:, :])          # (nb*h2, w2, cout)

    o_ref[...] = y.astype(o_ref.dtype)                   # one vectorized store


def conv_relu_pool(x_nhwc, w_col, bias_row, *, out_dtype=jnp.bfloat16):
    """3x3 conv (padding=1) + bias + ReLU + 2x2/2 maxpool.  NHWC in / out.
       w_col is the pre-packed (9*Cin, Cout) bf16 weight; bias_row is (1,Cout) f32."""
    B, H, W, C = x_nhwc.shape
    O = w_col.shape[1]
    assert w_col.shape[0] == 9 * C, (w_col.shape, C)
    assert H % 2 == 0 and W % 2 == 0, (H, W)
    H2, W2 = H // 2, W // 2

    # Wrapper-side parity-split im2col (tiny: 9x of a few-KB input per image).
    xp = jnp.pad(x_nhwc.astype(jnp.bfloat16), ((0, 0), (1, 1), (1, 1), (0, 0)))
    taps = [xp[:, kh:kh + H, kw:kw + W, :] for kh in range(3) for kw in range(3)]
    t = jnp.stack(taps, axis=3).reshape(B, H, W, 9 * C)        # K = (kh,kw,cin)
    x_col = jnp.stack([t[:, :, 0::2, :],                        # even output cols
                       t[:, :, 1::2, :]], axis=1)               # odd  output cols
    x_col = x_col.reshape(B * 2 * H * W2, 9 * C)                # (img,parity,h,j)

    # Images per grid step: amortize per-step overhead but keep >= 2 grid steps
    # (both v7x TensorCores get work) and a few-MB per-step VMEM footprint.
    nb = 1
    for cand in (4, 2):
        if B % cand == 0 and B // cand >= 2:
            nb = cand
            break

    rows_in = nb * 2 * H * W2
    kernel = functools.partial(_conv_relu_pool_kernel, nb=nb, h=H, w2=W2, cout=O)
    out = pl.pallas_call(
        kernel,
        out_shape=jax.ShapeDtypeStruct((B * H2, W2, O), out_dtype),
        grid_spec=pltpu.PrefetchScalarGridSpec(
            num_scalar_prefetch=0,
            grid=(B // nb,),
            in_specs=[
                pl.BlockSpec((rows_in, 9 * C), lambda i: (i, 0)),
                pl.BlockSpec((9 * C, O), lambda i: (0, 0)),
                pl.BlockSpec((1, O), lambda i: (0, 0)),
            ],
            out_specs=pl.BlockSpec((nb * H2, W2, O), lambda i: (i, 0, 0)),
        ),
        compiler_params=pltpu.CompilerParams(
            dimension_semantics=("parallel",),
            vmem_limit_bytes=32 * 1024 * 1024),
    )(x_col, w_col, bias_row)
    return out.reshape(B, H2, W2, O)


# ----------------------------------------------------------------------------
# Kernel 2: fused fc1 + ReLU + fc2 (both weight matrices VMEM-resident)
# ----------------------------------------------------------------------------
def _fc_relu_fc_kernel(x_ref, w1_ref, b1_ref, w2_ref, b2_ref, o_ref):
    h = jnp.dot(x_ref[...], w1_ref[...], preferred_element_type=jnp.float32)
    h = jnp.maximum(h + b1_ref[...], 0.0)
    out = jnp.dot(h.astype(w2_ref.dtype), w2_ref[...],
                  preferred_element_type=jnp.float32)
    o_ref[...] = (out + b2_ref[...]).astype(o_ref.dtype)


def fc1_relu_fc2(x, w1, b1, w2, b2):
    B, K = x.shape
    N1 = w1.shape[1]
    N2 = w2.shape[1]
    # Split the batch into >= 2 parallel grid steps when it divides cleanly.
    tb = next((t for t in (256, 128, 64, 32, 16, 8)
               if B % t == 0 and B // t >= 2), B)
    return pl.pallas_call(
        _fc_relu_fc_kernel,
        out_shape=jax.ShapeDtypeStruct((B, N2), jnp.float32),
        grid_spec=pltpu.PrefetchScalarGridSpec(
            num_scalar_prefetch=0,
            grid=(B // tb,),
            in_specs=[
                pl.BlockSpec((tb, K), lambda i: (i, 0)),
                pl.BlockSpec((K, N1), lambda i: (0, 0)),
                pl.BlockSpec((1, N1), lambda i: (0, 0)),
                pl.BlockSpec((N1, N2), lambda i: (0, 0)),
                pl.BlockSpec((1, N2), lambda i: (0, 0)),
            ],
            out_specs=pl.BlockSpec((tb, N2), lambda i: (i, 0)),
        ),
        compiler_params=pltpu.CompilerParams(
            dimension_semantics=("parallel",)),
    )(x.astype(jnp.bfloat16), w1, b1, w2, b2)


# ----------------------------------------------------------------------------
# One-time parameter preprocessing (hoisted out of the per-call forward).
# ----------------------------------------------------------------------------
def prepare_params(params):
    def conv_w(w):  # (O, I, 3, 3) OIHW -> (9*I, O) bf16, K ordered (kh, kw, i)
        o, i = w.shape[0], w.shape[1]
        return jnp.transpose(w, (2, 3, 1, 0)).reshape(9 * i, o).astype(jnp.bfloat16)

    # torch flattens the pooled NCHW tensor as (c, h, w): permute fc1's weight
    # ROWS once so the NHWC flatten in the Pallas path is a free reshape.
    C2, H2, W2 = 32, 8, 8
    w1 = params["fc1_w"].reshape(C2, H2, W2, -1)
    w1 = jnp.transpose(w1, (1, 2, 0, 3)).reshape(C2 * H2 * W2, -1)

    return {
        "conv1_w": conv_w(params["conv1_w"]),
        "conv1_b": params["conv1_b"].reshape(1, -1).astype(jnp.float32),
        "conv2_w": conv_w(params["conv2_w"]),
        "conv2_b": params["conv2_b"].reshape(1, -1).astype(jnp.float32),
        "fc1_w": w1.astype(jnp.bfloat16),
        "fc1_b": params["fc1_b"].reshape(1, -1).astype(jnp.float32),
        "fc2_w": params["fc2_w"].astype(jnp.bfloat16),
        "fc2_b": params["fc2_b"].reshape(1, -1).astype(jnp.float32),
    }


# ----------------------------------------------------------------------------
# Full forward pass (matches torch Net.forward semantics)
# ----------------------------------------------------------------------------
def net_forward(x_nchw, p):
    x = jnp.transpose(x_nchw, (0, 2, 3, 1))                      # NCHW -> NHWC
    x = conv_relu_pool(x, p["conv1_w"], p["conv1_b"])             # (B,16,16,16)
    x = conv_relu_pool(x, p["conv2_w"], p["conv2_b"])             # (B, 8, 8,32)
    B = x.shape[0]
    x_flat = x.reshape(B, -1)                                     # (h, w, c) order
    return fc1_relu_fc2(x_flat, p["fc1_w"], p["fc1_b"],
                        p["fc2_w"], p["fc2_b"])                   # (B, 10) f32


# ----------------------------------------------------------------------------
# Pure-JAX f32 reference (for validation of the bf16 Pallas path)
# ----------------------------------------------------------------------------
def net_forward_reference(x_nchw, params):
    def conv(x, w, b):
        y = jax.lax.conv_general_dilated(
            x, w, window_strides=(1, 1), padding=((1, 1), (1, 1)),
            dimension_numbers=("NCHW", "OIHW", "NCHW"))
        return y + b[None, :, None, None]

    def pool(x):
        return jax.lax.reduce_window(x, -jnp.inf, jax.lax.max,
                                     (1, 1, 2, 2), (1, 1, 2, 2), "VALID")

    x = pool(jax.nn.relu(conv(x_nchw, params["conv1_w"], params["conv1_b"])))
    x = pool(jax.nn.relu(conv(x, params["conv2_w"], params["conv2_b"])))
    x = x.reshape(x.shape[0], -1)
    x = jax.nn.relu(x @ params["fc1_w"] + params["fc1_b"])
    return x @ params["fc2_w"] + params["fc2_b"]


# ----------------------------------------------------------------------------
# Deterministic torch-like init: uniform(-1/sqrt(fan_in), +1/sqrt(fan_in)).
# fc weights are stored already transposed as (in, out).
# ----------------------------------------------------------------------------
def init_params(key):
    ks = jax.random.split(key, 8)

    def u(k, shape, fan_in):
        bound = 1.0 / jnp.sqrt(jnp.float32(fan_in))
        return jax.random.uniform(k, shape, jnp.float32, -bound, bound)

    return {
        "conv1_w": u(ks[0], (16, 3, 3, 3), 3 * 9),
        "conv1_b": u(ks[1], (16,), 3 * 9),
        "conv2_w": u(ks[2], (32, 16, 3, 3), 16 * 9),
        "conv2_b": u(ks[3], (32,), 16 * 9),
        "fc1_w":   u(ks[4], (32 * 8 * 8, 128), 32 * 8 * 8),
        "fc1_b":   u(ks[5], (128,), 32 * 8 * 8),
        "fc2_w":   u(ks[6], (128, 10), 128),
        "fc2_b":   u(ks[7], (10,), 128),
    }


if __name__ == "__main__":
    # Net's fc1 (32*8*8) implies 32x32 spatial input with 3 channels.
    x = jax.random.normal(jax.random.PRNGKey(0), (2, 3, 32, 32), jnp.float32)
    params = init_params(jax.random.PRNGKey(42))
    prepped = prepare_params(params)      # one-time weight packing (not per call)

    out = jax.block_until_ready(jax.jit(net_forward)(x, prepped))
    assert out.shape == (2, 10), out.shape
    assert out.dtype == jnp.float32, out.dtype

    # Validate against the f32 reference (loose tolerance: bf16 kernel path).
    ref = jax.block_until_ready(jax.jit(net_forward_reference)(x, params))
    err = float(jnp.max(jnp.abs(out - ref)))
    scale = float(jnp.max(jnp.abs(ref)))
    assert err <= 3e-2 + 5e-2 * scale, (err, scale)

    print("KERNEL_OK")
</pallas_src>

<mosaic_0001>
module attributes {stable_mosaic.version = 11 : i64} {
  func.func @_conv_relu_pool_kernel(%arg0: i32, %arg1: memref<1024x27xbf16, #tpu.memory_space<vmem>>, %arg2: memref<27x16xbf16, #tpu.memory_space<vmem>>, %arg3: memref<1x16xf32, #tpu.memory_space<vmem>>, %arg4: memref<16x16x16xbf16, #tpu.memory_space<vmem>>) attributes {dimension_semantics = [#tpu.dimension_semantics<parallel>], iteration_bounds = array<i64: 2>, scalar_prefetch = 0 : i64, scratch_operands = 0 : i64, tpu.core_type = #tpu.core_type<tc>, window_params = [{transform_indices = @transform_0, window_bounds = array<i64: 1024, 27>}, {pipeline_mode = #tpu.pipeline_mode<synchronous>, transform_indices = @transform_1, window_bounds = array<i64: 27, 16>}, {pipeline_mode = #tpu.pipeline_mode<synchronous>, transform_indices = @transform_2, window_bounds = array<i64: 1, 16>}, {transform_indices = @transform_3, window_bounds = array<i64: 16, 16, 16>}]} {
    %c0 = arith.constant 0 : index
    %c0_0 = arith.constant 0 : index
    %0 = vector.load %arg1[%c0, %c0_0] : memref<1024x27xbf16, #tpu.memory_space<vmem>>, vector<1024x27xbf16>
    %c0_1 = arith.constant 0 : index
    %c0_2 = arith.constant 0 : index
    %1 = vector.load %arg2[%c0_1, %c0_2] : memref<27x16xbf16, #tpu.memory_space<vmem>>, vector<27x16xbf16>
    %cst = arith.constant dense<0.000000e+00> : vector<1024x16xf32>
    %2 = tpu.matmul %0, %1, %cst {dimension_numbers = #tpu.dot_dimension_numbers<[1], [0], [0], [1], [0, 0, 1, 1], [], []>} : vector<1024x27xbf16>, vector<27x16xbf16>, vector<1024x16xf32> -> vector<1024x16xf32>
    %c0_3 = arith.constant 0 : index
    %c0_4 = arith.constant 0 : index
    %3 = vector.load %arg3[%c0_3, %c0_4] : memref<1x16xf32, #tpu.memory_space<vmem>>, vector<1x16xf32>
    %4 = vector.broadcast %3 : vector<1x16xf32> to vector<1024x16xf32>
    %5 = arith.addf %2, %4 : vector<1024x16xf32>
    %cst_5 = arith.constant 0.000000e+00 : f32
    %6 = vector.broadcast %cst_5 : f32 to vector<1024x16xf32>
    %7 = arith.maximumf %5, %6 : vector<1024x16xf32>
    %8 = vector.shape_cast %7 : vector<1024x16xf32> to vector<1x2x512x16xf32>
    %9 = vector.extract_strided_slice %8 {offsets = [0, 0, 0, 0], sizes = [1, 1, 512, 16], strides = [1, 1, 1, 1]} : vector<1x2x512x16xf32> to vector<1x1x512x16xf32>
    %10 = vector.shape_cast %9 : vector<1x1x512x16xf32> to vector<1x512x16xf32>
    %11 = vector.extract_strided_slice %8 {offsets = [0, 1, 0, 0], sizes = [1, 1, 512, 16], strides = [1, 1, 1, 1]} : vector<1x2x512x16xf32> to vector<1x1x512x16xf32>
    %12 = vector.shape_cast %11 : vector<1x1x512x16xf32> to vector<1x512x16xf32>
    %13 = arith.maximumf %10, %12 : vector<1x512x16xf32>
    %14 = vector.shape_cast %13 : vector<1x512x16xf32> to vector<16x32x16xf32>
    %15 = vector.extract_strided_slice %14 {offsets = [0, 0, 0], sizes = [16, 16, 16], strides = [1, 1, 1]} : vector<16x32x16xf32> to vector<16x16x16xf32>
    %16 = vector.extract_strided_slice %14 {offsets = [0, 16, 0], sizes = [16, 16, 16], strides = [1, 1, 1]} : vector<16x32x16xf32> to vector<16x16x16xf32>
    %17 = arith.maximumf %15, %16 : vector<16x16x16xf32>
    %18 = arith.truncf %17 : vector<16x16x16xf32> to vector<16x16x16xbf16>
    %c0_6 = arith.constant 0 : index
    %c0_7 = arith.constant 0 : index
    %c0_8 = arith.constant 0 : index
    %19 = vector.load %arg4[%c0_6, %c0_7, %c0_8] : memref<16x16x16xbf16, #tpu.memory_space<vmem>>, vector<16x16x16xbf16>
    tpu.vector_store %arg4[%c0_6, %c0_7, %c0_8], %18 {strides = array<i32>} : memref<16x16x16xbf16, #tpu.memory_space<vmem>>, vector<16x16x16xbf16>,
    return
  }
  func.func @transform_0(%arg0: i32) -> (i32, i32) {
    %c0_i32 = arith.constant 0 : i32
    %c0_i32_0 = arith.constant 0 : i32
    return %arg0, %c0_i32 : i32, i32
  }
  func.func @transform_1(%arg0: i32) -> (i32, i32) {
    %c0_i32 = arith.constant 0 : i32
    %c0_i32_0 = arith.constant 0 : i32
    %c0_i32_1 = arith.constant 0 : i32
    return %c0_i32, %c0_i32_0 : i32, i32
  }
  func.func @transform_2(%arg0: i32) -> (i32, i32) {
    %c0_i32 = arith.constant 0 : i32
    %c0_i32_0 = arith.constant 0 : i32
    %c0_i32_1 = arith.constant 0 : i32
    return %c0_i32, %c0_i32_0 : i32, i32
  }
  func.func @transform_3(%arg0: i32) -> (i32, i32, i32) {
    %c0_i32 = arith.constant 0 : i32
    %c0_i32_0 = arith.constant 0 : i32
    %c0_i32_1 = arith.constant 0 : i32
    return %arg0, %c0_i32, %c0_i32_0 : i32, i32, i32
  }
}

module attributes {stable_mosaic.version = 11 : i64} {
  func.func @_conv_relu_pool_kernel(%arg0: i32, %arg1: memref<256x144xbf16, #tpu.memory_space<vmem>>, %arg2: memref<144x32xbf16, #tpu.memory_space<vmem>>, %arg3: memref<1x32xf32, #tpu.memory_space<vmem>>, %arg4: memref<8x8x32xbf16, #tpu.memory_space<vmem>>) attributes {dimension_semantics = [#tpu.dimension_semantics<parallel>], iteration_bounds = array<i64: 2>, scalar_prefetch = 0 : i64, scratch_operands = 0 : i64, tpu.core_type = #tpu.core_type<tc>, window_params = [{transform_indices = @transform_0, window_bounds = array<i64: 256, 144>}, {pipeline_mode = #tpu.pipeline_mode<synchronous>, transform_indices = @transform_1, window_bounds = array<i64: 144, 32>}, {pipeline_mode = #tpu.pipeline_mode<synchronous>, transform_indices = @transform_2, window_bounds = array<i64: 1, 32>}, {transform_indices = @transform_3, window_bounds = array<i64: 8, 8, 32>}]} {
    %c0 = arith.constant 0 : index
    %c0_0 = arith.constant 0 : index
    %0 = vector.load %arg1[%c0, %c0_0] : memref<256x144xbf16, #tpu.memory_space<vmem>>, vector<256x144xbf16>
    %c0_1 = arith.constant 0 : index
    %c0_2 = arith.constant 0 : index
    %1 = vector.load %arg2[%c0_1, %c0_2] : memref<144x32xbf16, #tpu.memory_space<vmem>>, vector<144x32xbf16>
    %cst = arith.constant dense<0.000000e+00> : vector<256x32xf32>
    %2 = tpu.matmul %0, %1, %cst {dimension_numbers = #tpu.dot_dimension_numbers<[1], [0], [0], [1], [0, 0, 1, 1], [], []>} : vector<256x144xbf16>, vector<144x32xbf16>, vector<256x32xf32> -> vector<256x32xf32>
    %c0_3 = arith.constant 0 : index
    %c0_4 = arith.constant 0 : index
    %3 = vector.load %arg3[%c0_3, %c0_4] : memref<1x32xf32, #tpu.memory_space<vmem>>, vector<1x32xf32>
    %4 = vector.broadcast %3 : vector<1x32xf32> to vector<256x32xf32>
    %5 = arith.addf %2, %4 : vector<256x32xf32>
    %cst_5 = arith.constant 0.000000e+00 : f32
    %6 = vector.broadcast %cst_5 : f32 to vector<256x32xf32>
    %7 = arith.maximumf %5, %6 : vector<256x32xf32>
    %8 = vector.shape_cast %7 : vector<256x32xf32> to vector<1x2x128x32xf32>
    %9 = vector.extract_strided_slice %8 {offsets = [0, 0, 0, 0], sizes = [1, 1, 128, 32], strides = [1, 1, 1, 1]} : vector<1x2x128x32xf32> to vector<1x1x128x32xf32>
    %10 = vector.shape_cast %9 : vector<1x1x128x32xf32> to vector<1x128x32xf32>
    %11 = vector.extract_strided_slice %8 {offsets = [0, 1, 0, 0], sizes = [1, 1, 128, 32], strides = [1, 1, 1, 1]} : vector<1x2x128x32xf32> to vector<1x1x128x32xf32>
    %12 = vector.shape_cast %11 : vector<1x1x128x32xf32> to vector<1x128x32xf32>
    %13 = arith.maximumf %10, %12 : vector<1x128x32xf32>
    %14 = vector.shape_cast %13 : vector<1x128x32xf32> to vector<8x16x32xf32>
    %15 = vector.extract_strided_slice %14 {offsets = [0, 0, 0], sizes = [8, 8, 32], strides = [1, 1, 1]} : vector<8x16x32xf32> to vector<8x8x32xf32>
    %16 = vector.extract_strided_slice %14 {offsets = [0, 8, 0], sizes = [8, 8, 32], strides = [1, 1, 1]} : vector<8x16x32xf32> to vector<8x8x32xf32>
    %17 = arith.maximumf %15, %16 : vector<8x8x32xf32>
    %18 = arith.truncf %17 : vector<8x8x32xf32> to vector<8x8x32xbf16>
    %c0_6 = arith.constant 0 : index
    %c0_7 = arith.constant 0 : index
    %c0_8 = arith.constant 0 : index
    %19 = vector.load %arg4[%c0_6, %c0_7, %c0_8] : memref<8x8x32xbf16, #tpu.memory_space<vmem>>, vector<8x8x32xbf16>
    tpu.vector_store %arg4[%c0_6, %c0_7, %c0_8], %18 {strides = array<i32>} : memref<8x8x32xbf16, #tpu.memory_space<vmem>>, vector<8x8x32xbf16>,
    return
  }
  func.func @transform_0(%arg0: i32) -> (i32, i32) {
    %c0_i32 = arith.constant 0 : i32
    %c0_i32_0 = arith.constant 0 : i32
    return %arg0, %c0_i32 : i32, i32
  }
  func.func @transform_1(%arg0: i32) -> (i32, i32) {
    %c0_i32 = arith.constant 0 : i32
    %c0_i32_0 = arith.constant 0 : i32
    %c0_i32_1 = arith.constant 0 : i32
    return %c0_i32, %c0_i32_0 : i32, i32
  }
  func.func @transform_2(%arg0: i32) -> (i32, i32) {
    %c0_i32 = arith.constant 0 : i32
    %c0_i32_0 = arith.constant 0 : i32
    %c0_i32_1 = arith.constant 0 : i32
    return %c0_i32, %c0_i32_0 : i32, i32
  }
  func.func @transform_3(%arg0: i32) -> (i32, i32, i32) {
    %c0_i32 = arith.constant 0 : i32
    %c0_i32_0 = arith.constant 0 : i32
    %c0_i32_1 = arith.constant 0 : i32
    return %arg0, %c0_i32, %c0_i32_0 : i32, i32, i32
  }
}

module attributes {stable_mosaic.version = 11 : i64} {
  func.func @_fc_relu_fc_kernel(%arg0: i32, %arg1: memref<2x2048xbf16, #tpu.memory_space<vmem>>, %arg2: memref<2048x128xbf16, #tpu.memory_space<vmem>>, %arg3: memref<1x128xf32, #tpu.memory_space<vmem>>, %arg4: memref<128x10xbf16, #tpu.memory_space<vmem>>, %arg5: memref<1x10xf32, #tpu.memory_space<vmem>>, %arg6: memref<2x10xf32, #tpu.memory_space<vmem>>) attributes {dimension_semantics = [#tpu.dimension_semantics<parallel>], iteration_bounds = array<i64: 1>, scalar_prefetch = 0 : i64, scratch_operands = 0 : i64, tpu.core_type = #tpu.core_type<tc>, window_params = [{transform_indices = @transform_0, window_bounds = array<i64: 2, 2048>}, {pipeline_mode = #tpu.pipeline_mode<synchronous>, transform_indices = @transform_1, window_bounds = array<i64: 2048, 128>}, {pipeline_mode = #tpu.pipeline_mode<synchronous>, transform_indices = @transform_2, window_bounds = array<i64: 1, 128>}, {pipeline_mode = #tpu.pipeline_mode<synchronous>, transform_indices = @transform_3, window_bounds = array<i64: 128, 10>}, {pipeline_mode = #tpu.pipeline_mode<synchronous>, transform_indices = @transform_4, window_bounds = array<i64: 1, 10>}, {transform_indices = @transform_5, window_bounds = array<i64: 2, 10>}]} {
    %c0 = arith.constant 0 : index
    %c0_0 = arith.constant 0 : index
    %0 = vector.load %arg1[%c0, %c0_0] : memref<2x2048xbf16, #tpu.memory_space<vmem>>, vector<2x2048xbf16>
    %c0_1 = arith.constant 0 : index
    %c0_2 = arith.constant 0 : index
    %1 = vector.load %arg2[%c0_1, %c0_2] : memref<2048x128xbf16, #tpu.memory_space<vmem>>, vector<2048x128xbf16>
    %cst = arith.constant dense<0.000000e+00> : vector<2x128xf32>
    %2 = tpu.matmul %0, %1, %cst {dimension_numbers = #tpu.dot_dimension_numbers<[1], [0], [0], [1], [0, 0, 1, 1], [], []>} : vector<2x2048xbf16>, vector<2048x128xbf16>, vector<2x128xf32> -> vector<2x128xf32>
    %c0_3 = arith.constant 0 : index
    %c0_4 = arith.constant 0 : index
    %3 = vector.load %arg3[%c0_3, %c0_4] : memref<1x128xf32, #tpu.memory_space<vmem>>, vector<1x128xf32>
    %4 = vector.broadcast %3 : vector<1x128xf32> to vector<2x128xf32>
    %5 = arith.addf %2, %4 : vector<2x128xf32>
    %cst_5 = arith.constant 0.000000e+00 : f32
    %6 = vector.broadcast %cst_5 : f32 to vector<2x128xf32>
    %7 = arith.maximumf %5, %6 : vector<2x128xf32>
    %8 = arith.truncf %7 : vector<2x128xf32> to vector<2x128xbf16>
    %c0_6 = arith.constant 0 : index
    %c0_7 = arith.constant 0 : index
    %9 = vector.load %arg4[%c0_6, %c0_7] : memref<128x10xbf16, #tpu.memory_space<vmem>>, vector<128x10xbf16>
    %cst_8 = arith.constant dense<0.000000e+00> : vector<2x10xf32>
    %10 = tpu.matmul %8, %9, %cst_8 {dimension_numbers = #tpu.dot_dimension_numbers<[1], [0], [0], [1], [0, 0, 1, 1], [], []>} : vector<2x128xbf16>, vector<128x10xbf16>, vector<2x10xf32> -> vector<2x10xf32>
    %c0_9 = arith.constant 0 : index
    %c0_10 = arith.constant 0 : index
    %11 = vector.load %arg5[%c0_9, %c0_10] : memref<1x10xf32, #tpu.memory_space<vmem>>, vector<1x10xf32>
    %12 = vector.broadcast %11 : vector<1x10xf32> to vector<2x10xf32>
    %13 = arith.addf %10, %12 : vector<2x10xf32>
    %c0_11 = arith.constant 0 : index
    %c0_12 = arith.constant 0 : index
    %14 = vector.load %arg6[%c0_11, %c0_12] : memref<2x10xf32, #tpu.memory_space<vmem>>, vector<2x10xf32>
    tpu.vector_store %arg6[%c0_11, %c0_12], %13 {strides = array<i32>} : memref<2x10xf32, #tpu.memory_space<vmem>>, vector<2x10xf32>,
    return
  }
  func.func @transform_0(%arg0: i32) -> (i32, i32) {
    %c0_i32 = arith.constant 0 : i32
    %c0_i32_0 = arith.constant 0 : i32
    return %arg0, %c0_i32 : i32, i32
  }
  func.func @transform_1(%arg0: i32) -> (i32, i32) {
    %c0_i32 = arith.constant 0 : i32
    %c0_i32_0 = arith.constant 0 : i32
    %c0_i32_1 = arith.constant 0 : i32
    return %c0_i32, %c0_i32_0 : i32, i32
  }
  func.func @transform_2(%arg0: i32) -> (i32, i32) {
    %c0_i32 = arith.constant 0 : i32
    %c0_i32_0 = arith.constant 0 : i32
    %c0_i32_1 = arith.constant 0 : i32
    return %c0_i32, %c0_i32_0 : i32, i32
  }
  func.func @transform_3(%arg0: i32) -> (i32, i32) {
    %c0_i32 = arith.constant 0 : i32
    %c0_i32_0 = arith.constant 0 : i32
    %c0_i32_1 = arith.constant 0 : i32
    return %c0_i32, %c0_i32_0 : i32, i32
  }
  func.func @transform_4(%arg0: i32) -> (i32, i32) {
    %c0_i32 = arith.constant 0 : i32
    %c0_i32_0 = arith.constant 0 : i32
    %c0_i32_1 = arith.constant 0 : i32
    return %c0_i32, %c0_i32_0 : i32, i32
  }
  func.func @transform_5(%arg0: i32) -> (i32, i32) {
    %c0_i32 = arith.constant 0 : i32
    %c0_i32_0 = arith.constant 0 : i32
    return %arg0, %c0_i32 : i32, i32
  }
}

</mosaic_0001>

<llo_original>
// kernel: net_forward.3
$region0: #{net_forward.3}
  #allocation0 [shape = 'u32[]', space=smem, size = 0x4, offset = 0x4, fixed_abs, tag = 'smem constant byte address 0x4 - core index']
  #allocation1 [shape = 'u32[144,128]{1,0:T(1,128)}', space=vmem, size = 0x12000, scoped, tag = 'internal scratch']
  %s0 = inlined_call_operand.vmem [shape: bf16[2048,27], index: 0, kind: input, shape index: {}]
  %s1 = inlined_call_operand.vmem [shape: bf16[27,16], index: 1, kind: input, shape index: {}]
  %s2 = inlined_call_operand.vmem [shape: f32[1,16], index: 2, kind: input, shape index: {}]
  %s3 = inlined_call_operand.vmem [shape: bf16[32,16,16], index: 3, kind: output, shape index: {}]
  %s4 = sld [smem:[#allocation0]]
  $region45: #{net_forward.3} parent=0
    _
  %s6 = ssub.s32 1, %s4
  %s7 = scalar_select 0, %s6, %s4
  loop: start=0, step=1, limit=4
  $region2: #{net_forward.3} parent=0 // loop_pre_header
    _
  $region3: #{net_forward.3} parent=0 // loop_header
    %s9 = sphi 0, %s13
    %p10 = scmp.ge.s32.totalorder %s9, 4
    %s19 = sphi 0, %s21
    %s22 = sphi 0, %s19
    %s23 = sphi 0, %s22
    %s39 = sphi 0, %s23
    %s43 = sphi 0, %s43
    %s45 = sphi 0, %s43
    %s46 = sphi 0, %s45
    %s60 = sphi 0, %s46
    %s64 = sphi 0, %s64
    %s66 = sphi 0, %s64
    %s67 = sphi 0, %s66
    %s81 = sphi 0, %s67
    %s87 = sphi 0, %s89
    %s90 = sphi 0, %s87
    %s91 = sphi 0, %s90
    %s107 = sphi 0, %s91
  $region4: #{net_forward.3} parent=0 // loop_header_branch
    %12 = sbr.rel (%p10) target = $region8
  $region5: #{net_forward.3} parent=0 // loop_body
    %s14 = ssub.s32 %s9, 1
    %s15 = ssub.s32 %s9, 2
    %s16 = sadd.s32 %s9, 1
    %s17 = ssub.s32 %s9, %s16
    %p18 = scmp.eq.s32.totalorder %s17, 0
    %s20 = sadd.s32 %s19, 1
    %s21 = scalar_select %p18, %s19, %s20
    %p24 = pneg %p18
    %p25 = scmp.eq.s32.totalorder %s9, 1
    %p26 = por %p24, %p25
    %p27 = scmp.ne.s32.totalorder %s19, %s22
    %p28 = scmp.eq.s32.totalorder %s9, 0
    %p29 = por %p27, %p28
    %p30 = scmp.ne.s32.totalorder %s19, %s22
    %p31 = scmp.eq.s32.totalorder %s14, 1
    %p32 = por %p30, %p31
    %p33 = scmp.ne.s32.totalorder %s22, %s23
    %p34 = scmp.eq.s32.totalorder %s14, 0
    %p35 = por %p33, %p34
    %p36 = scmp.ne.s32.totalorder %s22, %s23
    %p37 = scmp.eq.s32.totalorder %s15, 1
    %p38 = por %p36, %p37
    %p40 = scmp.ne.s32.totalorder %s23, %s39
    %p41 = scmp.eq.s32.totalorder %s15, 0
    %p42 = por %p40, %p41
    %s44 = sadd.s32 %s43, 1
    %p47 = scmp.eq.s32.totalorder %s9, 1
    %p48 = scmp.ne.s32.totalorder %s43, %s45
    %p49 = scmp.eq.s32.totalorder %s9, 0
    %p50 = por %p48, %p49
    %p51 = scmp.ne.s32.totalorder %s43, %s45
    %p52 = scmp.eq.s32.totalorder %s14, 1
    %p53 = por %p51, %p52
    %p54 = scmp.ne.s32.totalorder %s45, %s46
    %p55 = scmp.eq.s32.totalorder %s14, 0
    %p56 = por %p54, %p55
    %p57 = scmp.ne.s32.totalorder %s45, %s46
    %p58 = scmp.eq.s32.totalorder %s15, 1
    %p59 = por %p57, %p58
    %p61 = scmp.ne.s32.totalorder %s46, %s60
    %p62 = scmp.eq.s32.totalorder %s15, 0
    %p63 = por %p61, %p62
    %s65 = sadd.s32 %s64, 1
    %p68 = scmp.eq.s32.totalorder %s9, 1
    %p69 = scmp.ne.s32.totalorder %s64, %s66
    %p70 = scmp.eq.s32.totalorder %s9, 0
    %p71 = por %p69, %p70
    %p72 = scmp.ne.s32.totalorder %s64, %s66
    %p73 = scmp.eq.s32.totalorder %s14, 1
    %p74 = por %p72, %p73
    %p75 = scmp.ne.s32.totalorder %s66, %s67
    %p76 = scmp.eq.s32.totalorder %s14, 0
    %p77 = por %p75, %p76
    %p78 = scmp.ne.s32.totalorder %s66, %s67
    %p79 = scmp.eq.s32.totalorder %s15, 1
    %p80 = por %p78, %p79
    %p82 = scmp.ne.s32.totalorder %s67, %s81
    %p83 = scmp.eq.s32.totalorder %s15, 0
    %p84 = por %p82, %p83
    %s85 = ssub.s32 %s9, %s16
    %p86 = scmp.eq.s32.totalorder %s85, 0
    %s88 = sadd.s32 %s87, 1
    %s89 = scalar_select %p86, %s87, %s88
    %p92 = pneg %p86
    %p93 = scmp.eq.s32.totalorder %s9, 1
    %p94 = por %p92, %p93
    %p95 = scmp.ne.s32.totalorder %s87, %s90
    %p96 = scmp.eq.s32.totalorder %s9, 0
    %p97 = por %p95, %p96
    %p98 = scmp.ne.s32.totalorder %s87, %s90
    %p99 = scmp.eq.s32.totalorder %s14, 1
    %p100 = por %p98, %p99
    %p101 = scmp.ne.s32.totalorder %s90, %s91
    %p102 = scmp.eq.s32.totalorder %s14, 0
    %p103 = por %p101, %p102
    %p104 = scmp.ne.s32.totalorder %s90, %s91
    %p105 = scmp.eq.s32.totalorder %s15, 1
    %p106 = por %p104, %p105
    %p108 = scmp.ne.s32.totalorder %s91, %s107
    %p109 = scmp.eq.s32.totalorder %s15, 0
    %p110 = por %p108, %p109
    %p111 = scmp.le.s32.totalorder 1, %s9
    %p112 = scmp.lt.s32.totalorder %s9, 3
    %p113 = pnand %p111, %p112
    %p114 = pneg %p113
    // Predicated region
    $region9: #{net_forward.3} parent=5 // pred_check
      _
    $region10: #{net_forward.3} parent=5 // pred_check_branch
      %116 = sbr.rel (%p113) target = $region12
    $region11: #{net_forward.3} parent=5 // pred_region
      %s117 = ssub.s32 %s9, 1
      // Predicated region
      $region13: #{net_forward.3} parent=11 // pred_check
        %p118 = pneg %p56
      $region14: #{net_forward.3} parent=11 // pred_check_branch
        %120 = sbr.rel (%p118) target = $region16
      $region15: #{net_forward.3} parent=11 // pred_region
        _
      $region16: #{net_forward.3} parent=11 // pred_fallthru
        _
      // Predicated region
      $region17: #{net_forward.3} parent=11 // pred_check
        %p121 = pneg %p77
      $region18: #{net_forward.3} parent=11 // pred_check_branch
        %123 = sbr.rel (%p121) target = $region20
      $region19: #{net_forward.3} parent=11 // pred_region
        _
      $region20: #{net_forward.3} parent=11 // pred_fallthru
        _
    $region12: #{net_forward.3} parent=5 // pred_fallthru
      _
    %p124 = scmp.lt.s32.totalorder %s9, 2
    // Predicated region
    $region21: #{net_forward.3} parent=5 // pred_check
      %p125 = pneg %p124
    $region22: #{net_forward.3} parent=5 // pred_check_branch
      %127 = sbr.rel (%p125) target = $region24
    $region23: #{net_forward.3} parent=5 // pred_region
      // Predicated region
      $region25: #{net_forward.3} parent=23 // pred_check
        %p128 = pneg %p29
      $region26: #{net_forward.3} parent=23 // pred_check_branch
        %130 = sbr.rel (%p128) target = $region28
      $region27: #{net_forward.3} parent=23 // pred_region
        %s131 = smul.u32 128, %s9
        %p132 = scmp.lt.s32.totalorder %s131, 255
        %s133 = scalar_select %p132, %s131, 255
        %s134 = smul.addr %s133, 4
        %s135 = scalar_lea.vmem %s0, %s134
        %s136 = smul.u32 128, %s9
      $region28: #{net_forward.3} parent=23 // pred_fallthru
        _
    $region24: #{net_forward.3} parent=5 // pred_fallthru
      _
    %p137 = scmp.le.s32.totalorder 1, %s9
    %p138 = scmp.lt.s32.totalorder %s9, 3
    %p139 = pnand %p137, %p138
    %p140 = pneg %p139
    // Predicated region
    $region29: #{net_forward.3} parent=5 // pred_check
      _
    $region30: #{net_forward.3} parent=5 // pred_check_branch
      %142 = sbr.rel (%p139) target = $region32
    $region31: #{net_forward.3} parent=5 // pred_region
      %s143 = ssub.s32 %s9, 1
      %s144 = smul.u32 128, %s14
      %p145 = scmp.lt.s32.totalorder %s144, 255
      %s146 = scalar_select %p145, %s144, 255
      %s147 = smul.addr %s146, 4
      %s148 = scalar_lea.vmem %s0, %s147
      %p149 = pneg %p35
      %p150 = pneg %p32
      %p151 = pneg %p56
      %p152 = pneg %p53
      %p153 = pneg %p77
      %p154 = pneg %p74
      %p155 = pneg %p103
      %p156 = pneg %p100
      %s157 = smul.u32 16, %s14
      %p158 = scmp.lt.s32.totalorder %s157, 31
      %s159 = scalar_select %p158, %s157, 31
      %s160 = smul.addr %s159, 2
      %s161 = smul.addr %s160, 4
      %s162 = scalar_lea.vmem %s3, %s161
      %s163 = smul.u32 128, %s14
      %p164 = scmp.lt.s32.totalorder %s163, 255
      %s165 = scalar_select %p164, %s163, 255
      %s166 = smul.addr %s165, 4
      %s167 = scalar_lea.vmem %s0, %s166
      %s168 = smul.u32 128, %s14
      %s169 = smul.u32 16, %s14
      %p170 = scmp.lt.s32.totalorder %s169, 31
      %s171 = scalar_select %p170, %s169, 31
      %s172 = smul.addr %s171, 2
      %s173 = smul.addr %s172, 4
      %s174 = scalar_lea.vmem %s3, %s173
      %s175 = smul.u32 16, %s14
      %v177 = vld [vmem:[%s167] sm:$0xf]
      %v178 = vld [vmem:[%s167 + $0x4] sm:$0xf]
      %v179 = vld [vmem:[%s167 + $0x8] sm:$0xf]
      %v180 = vld [vmem:[%s167 + $0xc] sm:$0xf]
      %v181 = vld [vmem:[%s167 + $0x10] sm:$0xf]
      %v182 = vld [vmem:[%s167 + $0x14] sm:$0xf]
      %v183 = vld [vmem:[%s167 + $0x18] sm:$0xf]
      %v184 = vld [vmem:[%s167 + $0x1c] sm:$0xf]
      %v185 = vld [vmem:[%s167 + $0x20] sm:$0xf]
      %v186 = vld [vmem:[%s167 + $0x24] sm:$0xf]
      %v187 = vld [vmem:[%s167 + $0x28] sm:$0xf]
      %v188 = vld [vmem:[%s167 + $0x2c] sm:$0xf]
      %v189 = vld [vmem:[%s167 + $0x30] sm:$0xf]
      %v190 = vld [vmem:[%s167 + $0x34] sm:$0xf]
      %v191 = vld [vmem:[%s167 + $0x38] sm:$0xf]
      %v192 = vld [vmem:[%s167 + $0x3c] sm:$0xf]
      %v193 = vld [vmem:[%s167 + $0x40] sm:$0xf]
      %v194 = vld [vmem:[%s167 + $0x44] sm:$0xf]
      %v195 = vld [vmem:[%s167 + $0x48] sm:$0xf]
      %v196 = vld [vmem:[%s167 + $0x4c] sm:$0xf]
      %v197 = vld [vmem:[%s167 + $0x50] sm:$0xf]
      %v198 = vld [vmem:[%s167 + $0x54] sm:$0xf]
      %v199 = vld [vmem:[%s167 + $0x58] sm:$0xf]
      %v200 = vld [vmem:[%s167 + $0x5c] sm:$0xf]
      %v201 = vld [vmem:[%s167 + $0x60] sm:$0xf]
      %v202 = vld [vmem:[%s167 + $0x64] sm:$0xf]
      %v203 = vld [vmem:[%s167 + $0x68] sm:$0xf]
      %v204 = vld [vmem:[%s167 + $0x6c] sm:$0xf]
      %v205 = vld [vmem:[%s167 + $0x70] sm:$0xf]
      %v206 = vld [vmem:[%s167 + $0x74] sm:$0xf]
      %v207 = vld [vmem:[%s167 + $0x78] sm:$0xf]
      %v208 = vld [vmem:[%s167 + $0x7c] sm:$0xf]
      %v209 = vld [vmem:[%s167 + $0x80] sm:$0xf]
      %v210 = vld [vmem:[%s167 + $0x84] sm:$0xf]
      %v211 = vld [vmem:[%s167 + $0x88] sm:$0xf]
      %v212 = vld [vmem:[%s167 + $0x8c] sm:$0xf]
      %v213 = vld [vmem:[%s167 + $0x90] sm:$0xf]
      %v214 = vld [vmem:[%s167 + $0x94] sm:$0xf]
      %v215 = vld [vmem:[%s167 + $0x98] sm:$0xf]
      %v216 = vld [vmem:[%s167 + $0x9c] sm:$0xf]
      %v217 = vld [vmem:[%s167 + $0xa0] sm:$0xf]
      %v218 = vld [vmem:[%s167 + $0xa4] sm:$0xf]
      %v219 = vld [vmem:[%s167 + $0xa8] sm:$0xf]
      %v220 = vld [vmem:[%s167 + $0xac] sm:$0xf]
      %v221 = vld [vmem:[%s167 + $0xb0] sm:$0xf]
      %v222 = vld [vmem:[%s167 + $0xb4] sm:$0xf]
      %v223 = vld [vmem:[%s167 + $0xb8] sm:$0xf]
      %v224 = vld [vmem:[%s167 + $0xbc] sm:$0xf]
      %v225 = vld [vmem:[%s167 + $0xc0] sm:$0xf]
      %v226 = vld [vmem:[%s167 + $0xc4] sm:$0xf]
      %v227 = vld [vmem:[%s167 + $0xc8] sm:$0xf]
      %v228 = vld [vmem:[%s167 + $0xcc] sm:$0xf]
      %v229 = vld [vmem:[%s167 + $0xd0] sm:$0xf]
      %v230 = vld [vmem:[%s167 + $0xd4] sm:$0xf]
      %v231 = vld [vmem:[%s167 + $0xd8] sm:$0xf]
      %v232 = vld [vmem:[%s167 + $0xdc] sm:$0xf]
      %v233 = vld [vmem:[%s167 + $0xe0] sm:$0xf]
      %v234 = vld [vmem:[%s167 + $0xe4] sm:$0xf]
      %v235 = vld [vmem:[%s167 + $0xe8] sm:$0xf]
      %v236 = vld [vmem:[%s167 + $0xec] sm:$0xf]
      %v237 = vld [vmem:[%s167 + $0xf0] sm:$0xf]
      %v238 = vld [vmem:[%s167 + $0xf4] sm:$0xf]
      %v239 = vld [vmem:[%s167 + $0xf8] sm:$0xf]
      %v240 = vld [vmem:[%s167 + $0xfc] sm:$0xf]
      %v241 = vld [vmem:[%s167 + $0x100] sm:$0xf]
      %v242 = vld [vmem:[%s167 + $0x104] sm:$0xf]
      %v243 = vld [vmem:[%s167 + $0x108] sm:$0xf]
      %v244 = vld [vmem:[%s167 + $0x10c] sm:$0xf]
      %v245 = vld [vmem:[%s167 + $0x110] sm:$0xf]
      %v246 = vld [vmem:[%s167 + $0x114] sm:$0xf]
      %v247 = vld [vmem:[%s167 + $0x118] sm:$0xf]
      %v248 = vld [vmem:[%s167 + $0x11c] sm:$0xf]
      %v249 = vld [vmem:[%s167 + $0x120] sm:$0xf]
      %v250 = vld [vmem:[%s167 + $0x124] sm:$0xf]
      %v251 = vld [vmem:[%s167 + $0x128] sm:$0xf]
      %v252 = vld [vmem:[%s167 + $0x12c] sm:$0xf]
      %v253 = vld [vmem:[%s167 + $0x130] sm:$0xf]
      %v254 = vld [vmem:[%s167 + $0x134] sm:$0xf]
      %v255 = vld [vmem:[%s167 + $0x138] sm:$0xf]
      %v256 = vld [vmem:[%s167 + $0x13c] sm:$0xf]
      %v257 = vld [vmem:[%s167 + $0x140] sm:$0xf]
      %v258 = vld [vmem:[%s167 + $0x144] sm:$0xf]
      %v259 = vld [vmem:[%s167 + $0x148] sm:$0xf]
      %v260 = vld [vmem:[%s167 + $0x14c] sm:$0xf]
      %v261 = vld [vmem:[%s167 + $0x150] sm:$0xf]
      %v262 = vld [vmem:[%s167 + $0x154] sm:$0xf]
      %v263 = vld [vmem:[%s167 + $0x158] sm:$0xf]
      %v264 = vld [vmem:[%s167 + $0x15c] sm:$0xf]
      %v265 = vld [vmem:[%s167 + $0x160] sm:$0xf]
      %v266 = vld [vmem:[%s167 + $0x164] sm:$0xf]
      %v267 = vld [vmem:[%s167 + $0x168] sm:$0xf]
      %v268 = vld [vmem:[%s167 + $0x16c] sm:$0xf]
      %v269 = vld [vmem:[%s167 + $0x170] sm:$0xf]
      %v270 = vld [vmem:[%s167 + $0x174] sm:$0xf]
      %v271 = vld [vmem:[%s167 + $0x178] sm:$0xf]
      %v272 = vld [vmem:[%s167 + $0x17c] sm:$0xf]
      %v273 = vld [vmem:[%s167 + $0x180] sm:$0xf]
      %v274 = vld [vmem:[%s167 + $0x184] sm:$0xf]
      %v275 = vld [vmem:[%s167 + $0x188] sm:$0xf]
      %v276 = vld [vmem:[%s167 + $0x18c] sm:$0xf]
      %v277 = vld [vmem:[%s167 + $0x190] sm:$0xf]
      %v278 = vld [vmem:[%s167 + $0x194] sm:$0xf]
      %v279 = vld [vmem:[%s167 + $0x198] sm:$0xf]
      %v280 = vld [vmem:[%s167 + $0x19c] sm:$0xf]
      %v281 = vld [vmem:[%s167 + $0x1a0] sm:$0xf]
      %v282 = vld [vmem:[%s167 + $0x1a4] sm:$0xf]
      %v283 = vld [vmem:[%s167 + $0x1a8] sm:$0xf]
      %v284 = vld [vmem:[%s167 + $0x1ac] sm:$0xf]
      %v285 = vld [vmem:[%s167 + $0x1b0] sm:$0xf]
      %v286 = vld [vmem:[%s167 + $0x1b4] sm:$0xf]
      %v287 = vld [vmem:[%s167 + $0x1b8] sm:$0xf]
      %v288 = vld [vmem:[%s167 + $0x1bc] sm:$0xf]
      %v289 = vld [vmem:[%s167 + $0x1c0] sm:$0xf]
      %v290 = vld [vmem:[%s167 + $0x1c4] sm:$0xf]
      %v291 = vld [vmem:[%s167 + $0x1c8] sm:$0xf]
      %v292 = vld [vmem:[%s167 + $0x1cc] sm:$0xf]
      %v293 = vld [vmem:[%s167 + $0x1d0] sm:$0xf]
      %v294 = vld [vmem:[%s167 + $0x1d4] sm:$0xf]
      %v295 = vld [vmem:[%s167 + $0x1d8] sm:$0xf]
      %v296 = vld [vmem:[%s167 + $0x1dc] sm:$0xf]
      %v297 = vld [vmem:[%s167 + $0x1e0] sm:$0xf]
      %v298 = vld [vmem:[%s167 + $0x1e4] sm:$0xf]
      %v299 = vld [vmem:[%s167 + $0x1e8] sm:$0xf]
      %v300 = vld [vmem:[%s167 + $0x1ec] sm:$0xf]
      %v301 = vld [vmem:[%s167 + $0x1f0] sm:$0xf]
      %v302 = vld [vmem:[%s167 + $0x1f4] sm:$0xf]
      %v303 = vld [vmem:[%s167 + $0x1f8] sm:$0xf]
      %v304 = vld [vmem:[%s167 + $0x1fc] sm:$0xf]
      %v305 = vld [vmem:[%s1] sm:$0xf]
      %v306 = vld [vmem:[%s1 + $0x4] sm:$0xf]
      %v307 = vld [vmem:[%s1 + $0x8] sm:$0xf]
      %v308 = vld [vmem:[%s1 + $0xc] sm:$0x3]
      %v309 = vld [vmem:[%s2] sm:$0x1]
      %v311 = vlaneseq
      %v312 = vshrl.u32 %v311, 7
      %v313 = vsub.s32 0, %v312
      %v314 = vrot.slane %v309, %v313
      %v444 = vunpack.c.l.b16 %v177
      %v445 = vunpack.c.l.b16 %v178
      %v446 = vunpack.c.l.b16 %v179
      %v447 = vunpack.c.l.b16 %v180
      %v448 = vunpack.c.l.b16 %v181
      %v449 = vunpack.c.l.b16 %v182
      %v450 = vunpack.c.l.b16 %v183
      %v451 = vunpack.c.l.b16 %v184
      %v452 = vunpack.c.l.b16 %v185
      %v453 = vunpack.c.l.b16 %v186
      %v454 = vunpack.c.l.b16 %v187
      %v455 = vunpack.c.l.b16 %v188
      %v456 = vunpack.c.l.b16 %v189
      %v457 = vunpack.c.l.b16 %v190
      %v458 = vunpack.c.l.b16 %v191
      %v459 = vunpack.c.l.b16 %v192
      %v460 = vunpack.c.l.b16 %v193
      %v461 = vunpack.c.l.b16 %v194
      %v462 = vunpack.c.l.b16 %v195
      %v463 = vunpack.c.l.b16 %v196
      %v464 = vunpack.c.l.b16 %v197
      %v465 = vunpack.c.l.b16 %v198
      %v466 = vunpack.c.l.b16 %v199
      %v467 = vunpack.c.l.b16 %v200
      %v468 = vunpack.c.l.b16 %v201
      %v469 = vunpack.c.l.b16 %v202
      %v470 = vunpack.c.l.b16 %v203
      %v471 = vunpack.c.l.b16 %v204
      %v472 = vunpack.c.l.b16 %v205
      %v473 = vunpack.c.l.b16 %v206
      %v474 = vunpack.c.l.b16 %v207
      %v475 = vunpack.c.l.b16 %v208
      %v476 = vunpack.c.l.b16 %v209
      %v477 = vunpack.c.l.b16 %v210
      %v478 = vunpack.c.l.b16 %v211
      %v479 = vunpack.c.l.b16 %v212
      %v480 = vunpack.c.l.b16 %v213
      %v481 = vunpack.c.l.b16 %v214
      %v482 = vunpack.c.l.b16 %v215
      %v483 = vunpack.c.l.b16 %v216
      %v484 = vunpack.c.l.b16 %v217
      %v485 = vunpack.c.l.b16 %v218
      %v486 = vunpack.c.l.b16 %v219
      %v487 = vunpack.c.l.b16 %v220
      %v488 = vunpack.c.l.b16 %v221
      %v489 = vunpack.c.l.b16 %v222
      %v490 = vunpack.c.l.b16 %v223
      %v491 = vunpack.c.l.b16 %v224
      %v492 = vunpack.c.l.b16 %v225
      %v493 = vunpack.c.l.b16 %v226
      %v494 = vunpack.c.l.b16 %v227
      %v495 = vunpack.c.l.b16 %v228
      %v496 = vunpack.c.l.b16 %v229
      %v497 = vunpack.c.l.b16 %v230
      %v498 = vunpack.c.l.b16 %v231
      %v499 = vunpack.c.l.b16 %v232
      %v500 = vunpack.c.l.b16 %v233
      %v501 = vunpack.c.l.b16 %v234
      %v502 = vunpack.c.l.b16 %v235
      %v503 = vunpack.c.l.b16 %v236
      %v504 = vunpack.c.l.b16 %v237
      %v505 = vunpack.c.l.b16 %v238
      %v506 = vunpack.c.l.b16 %v239
      %v507 = vunpack.c.l.b16 %v240
      %v508 = vunpack.c.l.b16 %v241
      %v509 = vunpack.c.l.b16 %v242
      %v510 = vunpack.c.l.b16 %v243
      %v511 = vunpack.c.l.b16 %v244
      %v512 = vunpack.c.l.b16 %v245
      %v513 = vunpack.c.l.b16 %v246
      %v514 = vunpack.c.l.b16 %v247
      %v515 = vunpack.c.l.b16 %v248
      %v516 = vunpack.c.l.b16 %v249
      %v517 = vunpack.c.l.b16 %v250
      %v518 = vunpack.c.l.b16 %v251
      %v519 = vunpack.c.l.b16 %v252
      %v520 = vunpack.c.l.b16 %v253
      %v521 = vunpack.c.l.b16 %v254
      %v522 = vunpack.c.l.b16 %v255
      %v523 = vunpack.c.l.b16 %v256
      %v524 = vunpack.c.l.b16 %v257
      %v525 = vunpack.c.l.b16 %v258
      %v526 = vunpack.c.l.b16 %v259
      %v527 = vunpack.c.l.b16 %v260
      %v528 = vunpack.c.l.b16 %v261
      %v529 = vunpack.c.l.b16 %v262
      %v530 = vunpack.c.l.b16 %v263
      %v531 = vunpack.c.l.b16 %v264
      %v532 = vunpack.c.l.b16 %v265
      %v533 = vunpack.c.l.b16 %v266
      %v534 = vunpack.c.l.b16 %v267
      %v535 = vunpack.c.l.b16 %v268
      %v536 = vunpack.c.l.b16 %v269
      %v537 = vunpack.c.l.b16 %v270
      %v538 = vunpack.c.l.b16 %v271
      %v539 = vunpack.c.l.b16 %v272
      %v540 = vunpack.c.l.b16 %v273
      %v541 = vunpack.c.l.b16 %v274
      %v542 = vunpack.c.l.b16 %v275
      %v543 = vunpack.c.l.b16 %v276
      %v544 = vunpack.c.l.b16 %v277
      %v545 = vunpack.c.l.b16 %v278
      %v546 = vunpack.c.l.b16 %v279
      %v547 = vunpack.c.l.b16 %v280
      %v548 = vunpack.c.l.b16 %v281
      %v549 = vunpack.c.l.b16 %v282
      %v550 = vunpack.c.l.b16 %v283
      %v551 = vunpack.c.l.b16 %v284
      %v552 = vunpack.c.l.b16 %v285
      %v553 = vunpack.c.l.b16 %v286
      %v554 = vunpack.c.l.b16 %v287
      %v555 = vunpack.c.l.b16 %v288
      %v556 = vunpack.c.l.b16 %v289
      %v557 = vunpack.c.l.b16 %v290
      %v558 = vunpack.c.l.b16 %v291
      %v559 = vunpack.c.l.b16 %v292
      %v560 = vunpack.c.l.b16 %v293
      %v561 = vunpack.c.l.b16 %v294
      %v562 = vunpack.c.l.b16 %v295
      %v563 = vunpack.c.l.b16 %v296
      %v564 = vunpack.c.l.b16 %v297
      %v565 = vunpack.c.l.b16 %v298
      %v566 = vunpack.c.l.b16 %v299
      %v567 = vunpack.c.l.b16 %v300
      %v568 = vunpack.c.l.b16 %v301
      %v569 = vunpack.c.l.b16 %v302
      %v570 = vunpack.c.l.b16 %v303
      %v571 = vunpack.c.l.b16 %v304
      %v572 = vpack.c.b16 %v445, %v444
      %v573 = vpack.c.b16 %v447, %v446
      %v574 = vpack.c.b16 %v449, %v448
      %v575 = vpack.c.b16 %v451, %v450
      %v576 = vpack.c.b16 %v453, %v452
      %v577 = vpack.c.b16 %v455, %v454
      %v578 = vpack.c.b16 %v457, %v456
      %v579 = vpack.c.b16 %v459, %v458
      %v580 = vpack.c.b16 %v461, %v460
      %v581 = vpack.c.b16 %v463, %v462
      %v582 = vpack.c.b16 %v465, %v464
      %v583 = vpack.c.b16 %v467, %v466
      %v584 = vpack.c.b16 %v469, %v468
      %v585 = vpack.c.b16 %v471, %v470
      %v586 = vpack.c.b16 %v473, %v472
      %v587 = vpack.c.b16 %v475, %v474
      %v588 = vpack.c.b16 %v477, %v476
      %v589 = vpack.c.b16 %v479, %v478
      %v590 = vpack.c.b16 %v481, %v480
      %v591 = vpack.c.b16 %v483, %v482
      %v592 = vpack.c.b16 %v485, %v484
      %v593 = vpack.c.b16 %v487, %v486
      %v594 = vpack.c.b16 %v489, %v488
      %v595 = vpack.c.b16 %v491, %v490
      %v596 = vpack.c.b16 %v493, %v492
      %v597 = vpack.c.b16 %v495, %v494
      %v598 = vpack.c.b16 %v497, %v496
      %v599 = vpack.c.b16 %v499, %v498
      %v600 = vpack.c.b16 %v501, %v500
      %v601 = vpack.c.b16 %v503, %v502
      %v602 = vpack.c.b16 %v505, %v504
      %v603 = vpack.c.b16 %v507, %v506
      %v604 = vpack.c.b16 %v509, %v508
      %v605 = vpack.c.b16 %v511, %v510
      %v606 = vpack.c.b16 %v513, %v512
      %v607 = vpack.c.b16 %v515, %v514
      %v608 = vpack.c.b16 %v517, %v516
      %v609 = vpack.c.b16 %v519, %v518
      %v610 = vpack.c.b16 %v521, %v520
      %v611 = vpack.c.b16 %v523, %v522
      %v612 = vpack.c.b16 %v525, %v524
      %v613 = vpack.c.b16 %v527, %v526
      %v614 = vpack.c.b16 %v529, %v528
      %v615 = vpack.c.b16 %v531, %v530
      %v616 = vpack.c.b16 %v533, %v532
      %v617 = vpack.c.b16 %v535, %v534
      %v618 = vpack.c.b16 %v537, %v536
      %v619 = vpack.c.b16 %v539, %v538
      %v620 = vpack.c.b16 %v541, %v540
      %v621 = vpack.c.b16 %v543, %v542
      %v622 = vpack.c.b16 %v545, %v544
      %v623 = vpack.c.b16 %v547, %v546
      %v624 = vpack.c.b16 %v549, %v548
      %v625 = vpack.c.b16 %v551, %v550
      %v626 = vpack.c.b16 %v553, %v552
      %v627 = vpack.c.b16 %v555, %v554
      %v628 = vpack.c.b16 %v557, %v556
      %v629 = vpack.c.b16 %v559, %v558
      %v630 = vpack.c.b16 %v561, %v560
      %v631 = vpack.c.b16 %v563, %v562
      %v632 = vpack.c.b16 %v565, %v564
      %v633 = vpack.c.b16 %v567, %v566
      %v634 = vpack.c.b16 %v569, %v568
      %v635 = vpack.c.b16 %v571, %v570
      %v640 = vunpack.c.l.b16 %v305
      %v641 = vunpack.c.l.b16 %v306
      %v642 = vunpack.c.l.b16 %v307
      %v643 = vunpack.c.l.b16 %v308
      %v644 = vpack.c.b16 %v641, %v640
      %v645 = vpack.c.b16 %v643, %v642
      %vm647 = vcmask 220160
      %v649 = vsel %vm647, %v572, 0
      %v652 = vsel %vm647, %v573, 0
      %v655 = vsel %vm647, %v574, 0
      %v658 = vsel %vm647, %v575, 0
      %v661 = vsel %vm647, %v576, 0
      %v664 = vsel %vm647, %v577, 0
      %v667 = vsel %vm647, %v578, 0
      %v670 = vsel %vm647, %v579, 0
      %v673 = vsel %vm647, %v580, 0
      %v676 = vsel %vm647, %v581, 0
      %v679 = vsel %vm647, %v582, 0
      %v682 = vsel %vm647, %v583, 0
      %v685 = vsel %vm647, %v584, 0
      %v688 = vsel %vm647, %v585, 0
      %v691 = vsel %vm647, %v586, 0
      %v694 = vsel %vm647, %v587, 0
      %v697 = vsel %vm647, %v588, 0
      %v700 = vsel %vm647, %v589, 0
      %v703 = vsel %vm647, %v590, 0
      %v706 = vsel %vm647, %v591, 0
      %v709 = vsel %vm647, %v592, 0
      %v712 = vsel %vm647, %v593, 0
      %v715 = vsel %vm647, %v594, 0
      %v718 = vsel %vm647, %v595, 0
      %v721 = vsel %vm647, %v596, 0
      %v724 = vsel %vm647, %v597, 0
      %v727 = vsel %vm647, %v598, 0
      %v730 = vsel %vm647, %v599, 0
      %v733 = vsel %vm647, %v600, 0
      %v736 = vsel %vm647, %v601, 0
      %v739 = vsel %vm647, %v602, 0
      %v742 = vsel %vm647, %v603, 0
      %v745 = vsel %vm647, %v604, 0
      %v748 = vsel %vm647, %v605, 0
      %v751 = vsel %vm647, %v606, 0
      %v754 = vsel %vm647, %v607, 0
      %v757 = vsel %vm647, %v608, 0
      %v760 = vsel %vm647, %v609, 0
      %v763 = vsel %vm647, %v610, 0
      %v766 = vsel %vm647, %v611, 0
      %v769 = vsel %vm647, %v612, 0
      %v772 = vsel %vm647, %v613, 0
      %v775 = vsel %vm647, %v614, 0
      %v778 = vsel %vm647, %v615, 0
      %v781 = vsel %vm647, %v616, 0
      %v784 = vsel %vm647, %v617, 0
      %v787 = vsel %vm647, %v618, 0
      %v790 = vsel %vm647, %v619, 0
      %v793 = vsel %vm647, %v620, 0
      %v796 = vsel %vm647, %v621, 0
      %v799 = vsel %vm647, %v622, 0
      %v802 = vsel %vm647, %v623, 0
      %v805 = vsel %vm647, %v624, 0
      %v808 = vsel %vm647, %v625, 0
      %v811 = vsel %vm647, %v626, 0
      %v814 = vsel %vm647, %v627, 0
      %v817 = vsel %vm647, %v628, 0
      %v820 = vsel %vm647, %v629, 0
      %v823 = vsel %vm647, %v630, 0
      %v826 = vsel %vm647, %v631, 0
      %v829 = vsel %vm647, %v632, 0
      %v832 = vsel %vm647, %v633, 0
      %v835 = vsel %vm647, %v634, 0
      %v838 = vsel %vm647, %v635, 0
      %vm840 = vcmask 1044480
      %vm841 = vcmask 1045504
      %v842 = vsel %vm840, 4294967295, 65535
      %v843 = vsel %vm841, %v842, 0
      %v845 = vand.u32 %v645, %v843
      %847 = vmatprep.subr.bf16.mxu0 0
      %848 = vmatpush1.bf16.msra.mxu0 %v644
      %849 = vmatprep.subr.bf16.mxu0 0
      %850 = vmatpush1.bf16.msra.mxu0 %v845
      %851 = vmatprep.subr.bf16.mxu0 0
      %852 = vmatpush1.bf16.msra.mxu0 0
      %853 = vmatprep.subr.bf16.mxu0 0
      %854 = vmatpush1.bf16.msra.mxu0 0
      %855 = vmatprep.subr.bf16.mxu0 0
      %856 = vmatpush1.bf16.msra.mxu0 0
      %857 = vmatprep.subr.bf16.mxu0 0
      %858 = vmatpush1.bf16.msra.mxu0 0
      %859 = vmatprep.subr.bf16.mxu0 0
      %860 = vmatpush1.bf16.msra.mxu0 0
      %861 = vmatprep.subr.bf16.mxu0 0
      %862 = vmatpush1.bf16.msra.mxu0 0
      %863 = vmatprep.subr.bf16.mxu0 0
      %864 = vmatpush1.bf16.msra.mxu0 0
      %865 = vmatprep.subr.bf16.mxu0 0
      %866 = vmatpush1.bf16.msra.mxu0 0
      %867 = vmatprep.subr.bf16.mxu0 0
      %868 = vmatpush1.bf16.msra.mxu0 0
      %869 = vmatprep.subr.bf16.mxu0 0
      %870 = vmatpush1.bf16.msra.mxu0 0
      %871 = vmatprep.subr.bf16.mxu0 0
      %872 = vmatpush1.bf16.msra.mxu0 0
      %873 = vmatprep.subr.bf16.mxu0 0
      %874 = vmatpush1.bf16.msra.mxu0 0
      %875 = vmatprep.subr.bf16.mxu0 0
      %876 = vmatpush1.bf16.msra.mxu0 0
      %877 = vmatprep.subr.bf16.mxu0 0
      %878 = vmatpush1.bf16.msra.mxu0 0
      %879 = vmatprep.mubr.bf16.mxu0 0
      %880 = vmatmul.mubr.bf16.gmra.mrb[0].mxu0 %v649
      %v881 = vpop.f32.mrb[0].mxu0
      %v882 = vadd.f32 %v314, %v881
      %v883 = vpop.f32.mrb[0].mxu0
      %v884 = vpop.f32.mrb[0].mxu0
      %v885 = vadd.f32 %v314, %v884
      %v886 = vpop.f32.mrb[0].mxu0
      %887 = vmatprep.mubr.bf16.mxu0 0
      %888 = vmatmul.mubr.bf16.gmra.mrb[0].mxu0 %v652
      %v889 = vpop.f32.mrb[0].mxu0
      %v890 = vadd.f32 %v314, %v889
      %v891 = vpop.f32.mrb[0].mxu0
      %v892 = vpop.f32.mrb[0].mxu0
      %v893 = vadd.f32 %v314, %v892
      %v894 = vpop.f32.mrb[0].mxu0
      %895 = vmatprep.mubr.bf16.mxu0 0
      %896 = vmatmul.mubr.bf16.gmra.mrb[0].mxu0 %v655
      %v897 = vpop.f32.mrb[0].mxu0
      %v898 = vadd.f32 %v314, %v897
      %v899 = vpop.f32.mrb[0].mxu0
      %v900 = vpop.f32.mrb[0].mxu0
      %v901 = vadd.f32 %v314, %v900
      %v902 = vpop.f32.mrb[0].mxu0
      %903 = vmatprep.mubr.bf16.mxu0 0
      %904 = vmatmul.mubr.bf16.gmra.mrb[0].mxu0 %v658
      %v905 = vpop.f32.mrb[0].mxu0
      %v906 = vadd.f32 %v314, %v905
      %v907 = vpop.f32.mrb[0].mxu0
      %v908 = vpop.f32.mrb[0].mxu0
      %v909 = vadd.f32 %v314, %v908
      %v910 = vpop.f32.mrb[0].mxu0
      %911 = vmatprep.mubr.bf16.mxu0 0
      %912 = vmatmul.mubr.bf16.gmra.mrb[0].mxu0 %v661
      %v913 = vpop.f32.mrb[0].mxu0
      %v914 = vadd.f32 %v314, %v913
      %v915 = vpop.f32.mrb[0].mxu0
      %v916 = vpop.f32.mrb[0].mxu0
      %v917 = vadd.f32 %v314, %v916
      %v918 = vpop.f32.mrb[0].mxu0
      %919 = vmatprep.mubr.bf16.mxu0 0
      %920 = vmatmul.mubr.bf16.gmra.mrb[0].mxu0 %v664
      %v921 = vpop.f32.mrb[0].mxu0
      %v922 = vadd.f32 %v314, %v921
      %v923 = vpop.f32.mrb[0].mxu0
      %v924 = vpop.f32.mrb[0].mxu0
      %v925 = vadd.f32 %v314, %v924
      %v926 = vpop.f32.mrb[0].mxu0
      %927 = vmatprep.mubr.bf16.mxu0 0
      %928 = vmatmul.mubr.bf16.gmra.mrb[0].mxu0 %v667
      %v929 = vpop.f32.mrb[0].mxu0
      %v930 = vadd.f32 %v314, %v929
      %v931 = vpop.f32.mrb[0].mxu0
      %v932 = vpop.f32.mrb[0].mxu0
      %v933 = vadd.f32 %v314, %v932
      %v934 = vpop.f32.mrb[0].mxu0
      %935 = vmatprep.mubr.bf16.mxu0 0
      %936 = vmatmul.mubr.bf16.gmra.mrb[0].mxu0 %v670
      %v937 = vpop.f32.mrb[0].mxu0
      %v938 = vadd.f32 %v314, %v937
      %v939 = vpop.f32.mrb[0].mxu0
      %v940 = vpop.f32.mrb[0].mxu0
      %v941 = vadd.f32 %v314, %v940
      %v942 = vpop.f32.mrb[0].mxu0
      %943 = vmatprep.mubr.bf16.mxu0 0
      %944 = vmatmul.mubr.bf16.gmra.mrb[0].mxu0 %v673
      %v945 = vpop.f32.mrb[0].mxu0
      %v946 = vadd.f32 %v314, %v945
      %v947 = vpop.f32.mrb[0].mxu0
      %v948 = vpop.f32.mrb[0].mxu0
      %v949 = vadd.f32 %v314, %v948
      %v950 = vpop.f32.mrb[0].mxu0
      %951 = vmatprep.mubr.bf16.mxu0 0
      %952 = vmatmul.mubr.bf16.gmra.mrb[0].mxu0 %v676
      %v953 = vpop.f32.mrb[0].mxu0
      %v954 = vadd.f32 %v314, %v953
      %v955 = vpop.f32.mrb[0].mxu0
      %v956 = vpop.f32.mrb[0].mxu0
      %v957 = vadd.f32 %v314, %v956
      %v958 = vpop.f32.mrb[0].mxu0
      %959 = vmatprep.mubr.bf16.mxu0 0
      %960 = vmatmul.mubr.bf16.gmra.mrb[0].mxu0 %v679
      %v961 = vpop.f32.mrb[0].mxu0
      %v962 = vadd.f32 %v314, %v961
      %v963 = vpop.f32.mrb[0].mxu0
      %v964 = vpop.f32.mrb[0].mxu0
      %v965 = vadd.f32 %v314, %v964
      %v966 = vpop.f32.mrb[0].mxu0
      %967 = vmatprep.mubr.bf16.mxu0 0
      %968 = vmatmul.mubr.bf16.gmra.mrb[0].mxu0 %v682
      %v969 = vpop.f32.mrb[0].mxu0
      %v970 = vadd.f32 %v314, %v969
      %v971 = vpop.f32.mrb[0].mxu0
      %v972 = vpop.f32.mrb[0].mxu0
      %v973 = vadd.f32 %v314, %v972
      %v974 = vpop.f32.mrb[0].mxu0
      %975 = vmatprep.mubr.bf16.mxu0 0
      %976 = vmatmul.mubr.bf16.gmra.mrb[0].mxu0 %v685
      %v977 = vpop.f32.mrb[0].mxu0
      %v978 = vadd.f32 %v314, %v977
      %v979 = vpop.f32.mrb[0].mxu0
      %v980 = vpop.f32.mrb[0].mxu0
      %v981 = vadd.f32 %v314, %v980
      %v982 = vpop.f32.mrb[0].mxu0
      %983 = vmatprep.mubr.bf16.mxu0 0
      %984 = vmatmul.mubr.bf16.gmra.mrb[0].mxu0 %v688
      %v985 = vpop.f32.mrb[0].mxu0
      %v986 = vadd.f32 %v314, %v985
      %v987 = vpop.f32.mrb[0].mxu0
      %v988 = vpop.f32.mrb[0].mxu0
      %v989 = vadd.f32 %v314, %v988
      %v990 = vpop.f32.mrb[0].mxu0
      %991 = vmatprep.mubr.bf16.mxu0 0
      %992 = vmatmul.mubr.bf16.gmra.mrb[0].mxu0 %v691
      %v993 = vpop.f32.mrb[0].mxu0
      %v994 = vadd.f32 %v314, %v993
      %v995 = vpop.f32.mrb[0].mxu0
      %v996 = vpop.f32.mrb[0].mxu0
      %v997 = vadd.f32 %v314, %v996
      %v998 = vpop.f32.mrb[0].mxu0
      %999 = vmatprep.mubr.bf16.mxu0 0
      %1000 = vmatmul.mubr.bf16.gmra.mrb[0].mxu0 %v694
      %v1001 = vpop.f32.mrb[0].mxu0
      %v1002 = vadd.f32 %v314, %v1001
      %v1003 = vpop.f32.mrb[0].mxu0
      %v1004 = vpop.f32.mrb[0].mxu0
      %v1005 = vadd.f32 %v314, %v1004
      %v1006 = vpop.f32.mrb[0].mxu0
      %1007 = vmatprep.mubr.bf16.mxu0 0
      %1008 = vmatmul.mubr.bf16.gmra.mrb[0].mxu0 %v697
      %v1009 = vpop.f32.mrb[0].mxu0
      %v1010 = vadd.f32 %v314, %v1009
      %v1011 = vpop.f32.mrb[0].mxu0
      %v1012 = vpop.f32.mrb[0].mxu0
      %v1013 = vadd.f32 %v314, %v1012
      %v1014 = vpop.f32.mrb[0].mxu0
      %1015 = vmatprep.mubr.bf16.mxu0 0
      %1016 = vmatmul.mubr.bf16.gmra.mrb[0].mxu0 %v700
      %v1017 = vpop.f32.mrb[0].mxu0
      %v1018 = vadd.f32 %v314, %v1017
      %v1019 = vpop.f32.mrb[0].mxu0
      %v1020 = vpop.f32.mrb[0].mxu0
      %v1021 = vadd.f32 %v314, %v1020
      %v1022 = vpop.f32.mrb[0].mxu0
      %1023 = vmatprep.mubr.bf16.mxu0 0
      %1024 = vmatmul.mubr.bf16.gmra.mrb[0].mxu0 %v703
      %v1025 = vpop.f32.mrb[0].mxu0
      %v1026 = vadd.f32 %v314, %v1025
      %v1027 = vpop.f32.mrb[0].mxu0
      %v1028 = vpop.f32.mrb[0].mxu0
      %v1029 = vadd.f32 %v314, %v1028
      %v1030 = vpop.f32.mrb[0].mxu0
      %1031 = vmatprep.mubr.bf16.mxu0 0
      %1032 = vmatmul.mubr.bf16.gmra.mrb[0].mxu0 %v706
      %v1033 = vpop.f32.mrb[0].mxu0
      %v1034 = vadd.f32 %v314, %v1033
      %v1035 = vpop.f32.mrb[0].mxu0
      %v1036 = vpop.f32.mrb[0].mxu0
      %v1037 = vadd.f32 %v314, %v1036
      %v1038 = vpop.f32.mrb[0].mxu0
      %1039 = vmatprep.mubr.bf16.mxu0 0
      %1040 = vmatmul.mubr.bf16.gmra.mrb[0].mxu0 %v709
      %v1041 = vpop.f32.mrb[0].mxu0
      %v1042 = vadd.f32 %v314, %v1041
      %v1043 = vpop.f32.mrb[0].mxu0
      %v1044 = vpop.f32.mrb[0].mxu0
      %v1045 = vadd.f32 %v314, %v1044
      %v1046 = vpop.f32.mrb[0].mxu0
      %1047 = vmatprep.mubr.bf16.mxu0 0
      %1048 = vmatmul.mubr.bf16.gmra.mrb[0].mxu0 %v712
      %v1049 = vpop.f32.mrb[0].mxu0
      %v1050 = vadd.f32 %v314, %v1049
      %v1051 = vpop.f32.mrb[0].mxu0
      %v1052 = vpop.f32.mrb[0].mxu0
      %v1053 = vadd.f32 %v314, %v1052
      %v1054 = vpop.f32.mrb[0].mxu0
      %1055 = vmatprep.mubr.bf16.mxu0 0
      %1056 = vmatmul.mubr.bf16.gmra.mrb[0].mxu0 %v715
      %v1057 = vpop.f32.mrb[0].mxu0
      %v1058 = vadd.f32 %v314, %v1057
      %v1059 = vpop.f32.mrb[0].mxu0
      %v1060 = vpop.f32.mrb[0].mxu0
      %v1061 = vadd.f32 %v314, %v1060
      %v1062 = vpop.f32.mrb[0].mxu0
      %1063 = vmatprep.mubr.bf16.mxu0 0
      %1064 = vmatmul.mubr.bf16.gmra.mrb[0].mxu0 %v718
      %v1065 = vpop.f32.mrb[0].mxu0
      %v1066 = vadd.f32 %v314, %v1065
      %v1067 = vpop.f32.mrb[0].mxu0
      %v1068 = vpop.f32.mrb[0].mxu0
      %v1069 = vadd.f32 %v314, %v1068
      %v1070 = vpop.f32.mrb[0].mxu0
      %1071 = vmatprep.mubr.bf16.mxu0 0
      %1072 = vmatmul.mubr.bf16.gmra.mrb[0].mxu0 %v721
      %v1073 = vpop.f32.mrb[0].mxu0
      %v1074 = vadd.f32 %v314, %v1073
      %v1075 = vpop.f32.mrb[0].mxu0
      %v1076 = vpop.f32.mrb[0].mxu0
      %v1077 = vadd.f32 %v314, %v1076
      %v1078 = vpop.f32.mrb[0].mxu0
      %1079 = vmatprep.mubr.bf16.mxu0 0
      %1080 = vmatmul.mubr.bf16.gmra.mrb[0].mxu0 %v724
      %v1081 = vpop.f32.mrb[0].mxu0
      %v1082 = vadd.f32 %v314, %v1081
      %v1083 = vpop.f32.mrb[0].mxu0
      %v1084 = vpop.f32.mrb[0].mxu0
      %v1085 = vadd.f32 %v314, %v1084
      %v1086 = vpop.f32.mrb[0].mxu0
      %1087 = vmatprep.mubr.bf16.mxu0 0
      %1088 = vmatmul.mubr.bf16.gmra.mrb[0].mxu0 %v727
      %v1089 = vpop.f32.mrb[0].mxu0
      %v1090 = vadd.f32 %v314, %v1089
      %v1091 = vpop.f32.mrb[0].mxu0
      %v1092 = vpop.f32.mrb[0].mxu0
      %v1093 = vadd.f32 %v314, %v1092
      %v1094 = vpop.f32.mrb[0].mxu0
      %1095 = vmatprep.mubr.bf16.mxu0 0
      %1096 = vmatmul.mubr.bf16.gmra.mrb[0].mxu0 %v730
      %v1097 = vpop.f32.mrb[0].mxu0
      %v1098 = vadd.f32 %v314, %v1097
      %v1099 = vpop.f32.mrb[0].mxu0
      %v1100 = vpop.f32.mrb[0].mxu0
      %v1101 = vadd.f32 %v314, %v1100
      %v1102 = vpop.f32.mrb[0].mxu0
      %1103 = vmatprep.mubr.bf16.mxu0 0
      %1104 = vmatmul.mubr.bf16.gmra.mrb[0].mxu0 %v733
      %v1105 = vpop.f32.mrb[0].mxu0
      %v1106 = vadd.f32 %v314, %v1105
      %v1107 = vpop.f32.mrb[0].mxu0
      %v1108 = vpop.f32.mrb[0].mxu0
      %v1109 = vadd.f32 %v314, %v1108
      %v1110 = vpop.f32.mrb[0].mxu0
      %1111 = vmatprep.mubr.bf16.mxu0 0
      %1112 = vmatmul.mubr.bf16.gmra.mrb[0].mxu0 %v736
      %v1113 = vpop.f32.mrb[0].mxu0
      %v1114 = vadd.f32 %v314, %v1113
      %v1115 = vpop.f32.mrb[0].mxu0
      %v1116 = vpop.f32.mrb[0].mxu0
      %v1117 = vadd.f32 %v314, %v1116
      %v1118 = vpop.f32.mrb[0].mxu0
      %1119 = vmatprep.mubr.bf16.mxu0 0
      %1120 = vmatmul.mubr.bf16.gmra.mrb[0].mxu0 %v739
      %v1121 = vpop.f32.mrb[0].mxu0
      %v1122 = vadd.f32 %v314, %v1121
      %v1123 = vpop.f32.mrb[0].mxu0
      %v1124 = vpop.f32.mrb[0].mxu0
      %v1125 = vadd.f32 %v314, %v1124
      %v1126 = vpop.f32.mrb[0].mxu0
      %1127 = vmatprep.mubr.bf16.mxu0 0
      %1128 = vmatmul.mubr.bf16.gmra.mrb[0].mxu0 %v742
      %v1129 = vpop.f32.mrb[0].mxu0
      %v1130 = vadd.f32 %v314, %v1129
      %v1131 = vpop.f32.mrb[0].mxu0
      %v1132 = vpop.f32.mrb[0].mxu0
      %v1133 = vadd.f32 %v314, %v1132
      %v1134 = vpop.f32.mrb[0].mxu0
      %1135 = vmatprep.mubr.bf16.mxu0 0
      %1136 = vmatmul.mubr.bf16.gmra.mrb[0].mxu0 %v745
      %v1137 = vpop.f32.mrb[0].mxu0
      %v1138 = vadd.f32 %v314, %v1137
      %v1139 = vpop.f32.mrb[0].mxu0
      %v1140 = vpop.f32.mrb[0].mxu0
      %v1141 = vadd.f32 %v314, %v1140
      %v1142 = vpop.f32.mrb[0].mxu0
      %1143 = vmatprep.mubr.bf16.mxu0 0
      %1144 = vmatmul.mubr.bf16.gmra.mrb[0].mxu0 %v748
      %v1145 = vpop.f32.mrb[0].mxu0
      %v1146 = vadd.f32 %v314, %v1145
      %v1147 = vpop.f32.mrb[0].mxu0
      %v1148 = vpop.f32.mrb[0].mxu0
      %v1149 = vadd.f32 %v314, %v1148
      %v1150 = vpop.f32.mrb[0].mxu0
      %1151 = vmatprep.mubr.bf16.mxu0 0
      %1152 = vmatmul.mubr.bf16.gmra.mrb[0].mxu0 %v751
      %v1153 = vpop.f32.mrb[0].mxu0
      %v1154 = vadd.f32 %v314, %v1153
      %v1155 = vpop.f32.mrb[0].mxu0
      %v1156 = vpop.f32.mrb[0].mxu0
      %v1157 = vadd.f32 %v314, %v1156
      %v1158 = vpop.f32.mrb[0].mxu0
      %1159 = vmatprep.mubr.bf16.mxu0 0
      %1160 = vmatmul.mubr.bf16.gmra.mrb[0].mxu0 %v754
      %v1161 = vpop.f32.mrb[0].mxu0
      %v1162 = vadd.f32 %v314, %v1161
      %v1163 = vpop.f32.mrb[0].mxu0
      %v1164 = vpop.f32.mrb[0].mxu0
      %v1165 = vadd.f32 %v314, %v1164
      %v1166 = vpop.f32.mrb[0].mxu0
      %1167 = vmatprep.mubr.bf16.mxu0 0
      %1168 = vmatmul.mubr.bf16.gmra.mrb[0].mxu0 %v757
      %v1169 = vpop.f32.mrb[0].mxu0
      %v1170 = vadd.f32 %v314, %v1169
      %v1171 = vpop.f32.mrb[0].mxu0
      %v1172 = vpop.f32.mrb[0].mxu0
      %v1173 = vadd.f32 %v314, %v1172
      %v1174 = vpop.f32.mrb[0].mxu0
      %1175 = vmatprep.mubr.bf16.mxu0 0
      %1176 = vmatmul.mubr.bf16.gmra.mrb[0].mxu0 %v760
      %v1177 = vpop.f32.mrb[0].mxu0
      %v1178 = vadd.f32 %v314, %v1177
      %v1179 = vpop.f32.mrb[0].mxu0
      %v1180 = vpop.f32.mrb[0].mxu0
      %v1181 = vadd.f32 %v314, %v1180
      %v1182 = vpop.f32.mrb[0].mxu0
      %1183 = vmatprep.mubr.bf16.mxu0 0
      %1184 = vmatmul.mubr.bf16.gmra.mrb[0].mxu0 %v763
      %v1185 = vpop.f32.mrb[0].mxu0
      %v1186 = vadd.f32 %v314, %v1185
      %v1187 = vpop.f32.mrb[0].mxu0
      %v1188 = vpop.f32.mrb[0].mxu0
      %v1189 = vadd.f32 %v314, %v1188
      %v1190 = vpop.f32.mrb[0].mxu0
      %1191 = vmatprep.mubr.bf16.mxu0 0
      %1192 = vmatmul.mubr.bf16.gmra.mrb[0].mxu0 %v766
      %v1193 = vpop.f32.mrb[0].mxu0
      %v1194 = vadd.f32 %v314, %v1193
      %v1195 = vpop.f32.mrb[0].mxu0
      %v1196 = vpop.f32.mrb[0].mxu0
      %v1197 = vadd.f32 %v314, %v1196
      %v1198 = vpop.f32.mrb[0].mxu0
      %1199 = vmatprep.mubr.bf16.mxu0 0
      %1200 = vmatmul.mubr.bf16.gmra.mrb[0].mxu0 %v769
      %v1201 = vpop.f32.mrb[0].mxu0
      %v1202 = vadd.f32 %v314, %v1201
      %v1203 = vpop.f32.mrb[0].mxu0
      %v1204 = vpop.f32.mrb[0].mxu0
      %v1205 = vadd.f32 %v314, %v1204
      %v1206 = vpop.f32.mrb[0].mxu0
      %1207 = vmatprep.mubr.bf16.mxu0 0
      %1208 = vmatmul.mubr.bf16.gmra.mrb[0].mxu0 %v772
      %v1209 = vpop.f32.mrb[0].mxu0
      %v1210 = vadd.f32 %v314, %v1209
      %v1211 = vpop.f32.mrb[0].mxu0
      %v1212 = vpop.f32.mrb[0].mxu0
      %v1213 = vadd.f32 %v314, %v1212
      %v1214 = vpop.f32.mrb[0].mxu0
      %1215 = vmatprep.mubr.bf16.mxu0 0
      %1216 = vmatmul.mubr.bf16.gmra.mrb[0].mxu0 %v775
      %v1217 = vpop.f32.mrb[0].mxu0
      %v1218 = vadd.f32 %v314, %v1217
      %v1219 = vpop.f32.mrb[0].mxu0
      %v1220 = vpop.f32.mrb[0].mxu0
      %v1221 = vadd.f32 %v314, %v1220
      %v1222 = vpop.f32.mrb[0].mxu0
      %1223 = vmatprep.mubr.bf16.mxu0 0
      %1224 = vmatmul.mubr.bf16.gmra.mrb[0].mxu0 %v778
      %v1225 = vpop.f32.mrb[0].mxu0
      %v1226 = vadd.f32 %v314, %v1225
      %v1227 = vpop.f32.mrb[0].mxu0
      %v1228 = vpop.f32.mrb[0].mxu0
      %v1229 = vadd.f32 %v314, %v1228
      %v1230 = vpop.f32.mrb[0].mxu0
      %1231 = vmatprep.mubr.bf16.mxu0 0
      %1232 = vmatmul.mubr.bf16.gmra.mrb[0].mxu0 %v781
      %v1233 = vpop.f32.mrb[0].mxu0
      %v1234 = vadd.f32 %v314, %v1233
      %v1235 = vpop.f32.mrb[0].mxu0
      %v1236 = vpop.f32.mrb[0].mxu0
      %v1237 = vadd.f32 %v314, %v1236
      %v1238 = vpop.f32.mrb[0].mxu0
      %1239 = vmatprep.mubr.bf16.mxu0 0
      %1240 = vmatmul.mubr.bf16.gmra.mrb[0].mxu0 %v784
      %v1241 = vpop.f32.mrb[0].mxu0
      %v1242 = vadd.f32 %v314, %v1241
      %v1243 = vpop.f32.mrb[0].mxu0
      %v1244 = vpop.f32.mrb[0].mxu0
      %v1245 = vadd.f32 %v314, %v1244
      %v1246 = vpop.f32.mrb[0].mxu0
      %1247 = vmatprep.mubr.bf16.mxu0 0
      %1248 = vmatmul.mubr.bf16.gmra.mrb[0].mxu0 %v787
      %v1249 = vpop.f32.mrb[0].mxu0
      %v1250 = vadd.f32 %v314, %v1249
      %v1251 = vpop.f32.mrb[0].mxu0
      %v1252 = vpop.f32.mrb[0].mxu0
      %v1253 = vadd.f32 %v314, %v1252
      %v1254 = vpop.f32.mrb[0].mxu0
      %1255 = vmatprep.mubr.bf16.mxu0 0
      %1256 = vmatmul.mubr.bf16.gmra.mrb[0].mxu0 %v790
      %v1257 = vpop.f32.mrb[0].mxu0
      %v1258 = vadd.f32 %v314, %v1257
      %v1259 = vpop.f32.mrb[0].mxu0
      %v1260 = vpop.f32.mrb[0].mxu0
      %v1261 = vadd.f32 %v314, %v1260
      %v1262 = vpop.f32.mrb[0].mxu0
      %1263 = vmatprep.mubr.bf16.mxu0 0
      %1264 = vmatmul.mubr.bf16.gmra.mrb[0].mxu0 %v793
      %v1265 = vpop.f32.mrb[0].mxu0
      %v1266 = vadd.f32 %v314, %v1265
      %v1267 = vpop.f32.mrb[0].mxu0
      %v1268 = vpop.f32.mrb[0].mxu0
      %v1269 = vadd.f32 %v314, %v1268
      %v1270 = vpop.f32.mrb[0].mxu0
      %1271 = vmatprep.mubr.bf16.mxu0 0
      %1272 = vmatmul.mubr.bf16.gmra.mrb[0].mxu0 %v796
      %v1273 = vpop.f32.mrb[0].mxu0
      %v1274 = vadd.f32 %v314, %v1273
      %v1275 = vpop.f32.mrb[0].mxu0
      %v1276 = vpop.f32.mrb[0].mxu0
      %v1277 = vadd.f32 %v314, %v1276
      %v1278 = vpop.f32.mrb[0].mxu0
      %1279 = vmatprep.mubr.bf16.mxu0 0
      %1280 = vmatmul.mubr.bf16.gmra.mrb[0].mxu0 %v799
      %v1281 = vpop.f32.mrb[0].mxu0
      %v1282 = vadd.f32 %v314, %v1281
      %v1283 = vpop.f32.mrb[0].mxu0
      %v1284 = vpop.f32.mrb[0].mxu0
      %v1285 = vadd.f32 %v314, %v1284
      %v1286 = vpop.f32.mrb[0].mxu0
      %1287 = vmatprep.mubr.bf16.mxu0 0
      %1288 = vmatmul.mubr.bf16.gmra.mrb[0].mxu0 %v802
      %v1289 = vpop.f32.mrb[0].mxu0
      %v1290 = vadd.f32 %v314, %v1289
      %v1291 = vpop.f32.mrb[0].mxu0
      %v1292 = vpop.f32.mrb[0].mxu0
      %v1293 = vadd.f32 %v314, %v1292
      %v1294 = vpop.f32.mrb[0].mxu0
      %1295 = vmatprep.mubr.bf16.mxu0 0
      %1296 = vmatmul.mubr.bf16.gmra.mrb[0].mxu0 %v805
      %v1297 = vpop.f32.mrb[0].mxu0
      %v1298 = vadd.f32 %v314, %v1297
      %v1299 = vpop.f32.mrb[0].mxu0
      %v1300 = vpop.f32.mrb[0].mxu0
      %v1301 = vadd.f32 %v314, %v1300
      %v1302 = vpop.f32.mrb[0].mxu0
      %1303 = vmatprep.mubr.bf16.mxu0 0
      %1304 = vmatmul.mubr.bf16.gmra.mrb[0].mxu0 %v808
      %v1305 = vpop.f32.mrb[0].mxu0
      %v1306 = vadd.f32 %v314, %v1305
      %v1307 = vpop.f32.mrb[0].mxu0
      %v1308 = vpop.f32.mrb[0].mxu0
      %v1309 = vadd.f32 %v314, %v1308
      %v1310 = vpop.f32.mrb[0].mxu0
      %1311 = vmatprep.mubr.bf16.mxu0 0
      %1312 = vmatmul.mubr.bf16.gmra.mrb[0].mxu0 %v811
      %v1313 = vpop.f32.mrb[0].mxu0
      %v1314 = vadd.f32 %v314, %v1313
      %v1315 = vpop.f32.mrb[0].mxu0
      %v1316 = vpop.f32.mrb[0].mxu0
      %v1317 = vadd.f32 %v314, %v1316
      %v1318 = vpop.f32.mrb[0].mxu0
      %1319 = vmatprep.mubr.bf16.mxu0 0
      %1320 = vmatmul.mubr.bf16.gmra.mrb[0].mxu0 %v814
      %v1321 = vpop.f32.mrb[0].mxu0
      %v1322 = vadd.f32 %v314, %v1321
      %v1323 = vpop.f32.mrb[0].mxu0
      %v1324 = vpop.f32.mrb[0].mxu0
      %v1325 = vadd.f32 %v314, %v1324
      %v1326 = vpop.f32.mrb[0].mxu0
      %1327 = vmatprep.mubr.bf16.mxu0 0
      %1328 = vmatmul.mubr.bf16.gmra.mrb[0].mxu0 %v817
      %v1329 = vpop.f32.mrb[0].mxu0
      %v1330 = vadd.f32 %v314, %v1329
      %v1331 = vpop.f32.mrb[0].mxu0
      %v1332 = vpop.f32.mrb[0].mxu0
      %v1333 = vadd.f32 %v314, %v1332
      %v1334 = vpop.f32.mrb[0].mxu0
      %1335 = vmatprep.mubr.bf16.mxu0 0
      %1336 = vmatmul.mubr.bf16.gmra.mrb[0].mxu0 %v820
      %v1337 = vpop.f32.mrb[0].mxu0
      %v1338 = vadd.f32 %v314, %v1337
      %v1339 = vpop.f32.mrb[0].mxu0
      %v1340 = vpop.f32.mrb[0].mxu0
      %v1341 = vadd.f32 %v314, %v1340
      %v1342 = vpop.f32.mrb[0].mxu0
      %1343 = vmatprep.mubr.bf16.mxu0 0
      %1344 = vmatmul.mubr.bf16.gmra.mrb[0].mxu0 %v823
      %v1345 = vpop.f32.mrb[0].mxu0
      %v1346 = vadd.f32 %v314, %v1345
      %v1347 = vpop.f32.mrb[0].mxu0
      %v1348 = vpop.f32.mrb[0].mxu0
      %v1349 = vadd.f32 %v314, %v1348
      %v1350 = vpop.f32.mrb[0].mxu0
      %1351 = vmatprep.mubr.bf16.mxu0 0
      %1352 = vmatmul.mubr.bf16.gmra.mrb[0].mxu0 %v826
      %v1353 = vpop.f32.mrb[0].mxu0
      %v1354 = vadd.f32 %v314, %v1353
      %v1355 = vpop.f32.mrb[0].mxu0
      %v1356 = vpop.f32.mrb[0].mxu0
      %v1357 = vadd.f32 %v314, %v1356
      %v1358 = vpop.f32.mrb[0].mxu0
      %1359 = vmatprep.mubr.bf16.mxu0 0
      %1360 = vmatmul.mubr.bf16.gmra.mrb[0].mxu0 %v829
      %v1361 = vpop.f32.mrb[0].mxu0
      %v1362 = vadd.f32 %v314, %v1361
      %v1363 = vpop.f32.mrb[0].mxu0
      %v1364 = vpop.f32.mrb[0].mxu0
      %v1365 = vadd.f32 %v314, %v1364
      %v1366 = vpop.f32.mrb[0].mxu0
      %1367 = vmatprep.mubr.bf16.mxu0 0
      %1368 = vmatmul.mubr.bf16.gmra.mrb[0].mxu0 %v832
      %v1369 = vpop.f32.mrb[0].mxu0
      %v1370 = vadd.f32 %v314, %v1369
      %v1371 = vpop.f32.mrb[0].mxu0
      %v1372 = vpop.f32.mrb[0].mxu0
      %v1373 = vadd.f32 %v314, %v1372
      %v1374 = vpop.f32.mrb[0].mxu0
      %1375 = vmatprep.mubr.bf16.mxu0 0
      %1376 = vmatmul.mubr.bf16.gmra.mrb[0].mxu0 %v835
      %v1377 = vpop.f32.mrb[0].mxu0
      %v1378 = vadd.f32 %v314, %v1377
      %v1379 = vpop.f32.mrb[0].mxu0
      %v1380 = vpop.f32.mrb[0].mxu0
      %v1381 = vadd.f32 %v314, %v1380
      %v1382 = vpop.f32.mrb[0].mxu0
      %1383 = vmatprep.mubr.bf16.mxu0 0
      %1384 = vmatmul.mubr.bf16.gmra.mrb[0].mxu0 %v838
      %v1385 = vpop.f32.mrb[0].mxu0
      %v1386 = vadd.f32 %v314, %v1385
      %v1387 = vpop.f32.mrb[0].mxu0
      %v1388 = vpop.f32.mrb[0].mxu0
      %v1389 = vadd.f32 %v314, %v1388
      %v1390 = vpop.f32.mrb[0].mxu0
      %1391 = vdwg.mxu0
      %v1392 = vmax.f32 %v882, 0.0
      %v1393 = vmax.f32 %v885, 0.0
      %v1394 = vmax.f32 %v890, 0.0
      %v1395 = vmax.f32 %v893, 0.0
      %v1396 = vmax.f32 %v898, 0.0
      %v1397 = vmax.f32 %v901, 0.0
      %v1398 = vmax.f32 %v906, 0.0
      %v1399 = vmax.f32 %v909, 0.0
      %v1400 = vmax.f32 %v914, 0.0
      %v1401 = vmax.f32 %v917, 0.0
      %v1402 = vmax.f32 %v922, 0.0
      %v1403 = vmax.f32 %v925, 0.0
      %v1404 = vmax.f32 %v930, 0.0
      %v1405 = vmax.f32 %v933, 0.0
      %v1406 = vmax.f32 %v938, 0.0
      %v1407 = vmax.f32 %v941, 0.0
      %v1408 = vmax.f32 %v946, 0.0
      %v1409 = vmax.f32 %v949, 0.0
      %v1410 = vmax.f32 %v954, 0.0
      %v1411 = vmax.f32 %v957, 0.0
      %v1412 = vmax.f32 %v962, 0.0
      %v1413 = vmax.f32 %v965, 0.0
      %v1414 = vmax.f32 %v970, 0.0
      %v1415 = vmax.f32 %v973, 0.0
      %v1416 = vmax.f32 %v978, 0.0
      %v1417 = vmax.f32 %v981, 0.0
      %v1418 = vmax.f32 %v986, 0.0
      %v1419 = vmax.f32 %v989, 0.0
      %v1420 = vmax.f32 %v994, 0.0
      %v1421 = vmax.f32 %v997, 0.0
      %v1422 = vmax.f32 %v1002, 0.0
      %v1423 = vmax.f32 %v1005, 0.0
      %v1424 = vmax.f32 %v1010, 0.0
      %v1425 = vmax.f32 %v1013, 0.0
      %v1426 = vmax.f32 %v1018, 0.0
      %v1427 = vmax.f32 %v1021, 0.0
      %v1428 = vmax.f32 %v1026, 0.0
      %v1429 = vmax.f32 %v1029, 0.0
      %v1430 = vmax.f32 %v1034, 0.0
      %v1431 = vmax.f32 %v1037, 0.0
      %v1432 = vmax.f32 %v1042, 0.0
      %v1433 = vmax.f32 %v1045, 0.0
      %v1434 = vmax.f32 %v1050, 0.0
      %v1435 = vmax.f32 %v1053, 0.0
      %v1436 = vmax.f32 %v1058, 0.0
      %v1437 = vmax.f32 %v1061, 0.0
      %v1438 = vmax.f32 %v1066, 0.0
      %v1439 = vmax.f32 %v1069, 0.0
      %v1440 = vmax.f32 %v1074, 0.0
      %v1441 = vmax.f32 %v1077, 0.0
      %v1442 = vmax.f32 %v1082, 0.0
      %v1443 = vmax.f32 %v1085, 0.0
      %v1444 = vmax.f32 %v1090, 0.0
      %v1445 = vmax.f32 %v1093, 0.0
      %v1446 = vmax.f32 %v1098, 0.0
      %v1447 = vmax.f32 %v1101, 0.0
      %v1448 = vmax.f32 %v1106, 0.0
      %v1449 = vmax.f32 %v1109, 0.0
      %v1450 = vmax.f32 %v1114, 0.0
      %v1451 = vmax.f32 %v1117, 0.0
      %v1452 = vmax.f32 %v1122, 0.0
      %v1453 = vmax.f32 %v1125, 0.0
      %v1454 = vmax.f32 %v1130, 0.0
      %v1455 = vmax.f32 %v1133, 0.0
      %v1456 = vmax.f32 %v1138, 0.0
      %v1457 = vmax.f32 %v1141, 0.0
      %v1458 = vmax.f32 %v1146, 0.0
      %v1459 = vmax.f32 %v1149, 0.0
      %v1460 = vmax.f32 %v1154, 0.0
      %v1461 = vmax.f32 %v1157, 0.0
      %v1462 = vmax.f32 %v1162, 0.0
      %v1463 = vmax.f32 %v1165, 0.0
      %v1464 = vmax.f32 %v1170, 0.0
      %v1465 = vmax.f32 %v1173, 0.0
      %v1466 = vmax.f32 %v1178, 0.0
      %v1467 = vmax.f32 %v1181, 0.0
      %v1468 = vmax.f32 %v1186, 0.0
      %v1469 = vmax.f32 %v1189, 0.0
      %v1470 = vmax.f32 %v1194, 0.0
      %v1471 = vmax.f32 %v1197, 0.0
      %v1472 = vmax.f32 %v1202, 0.0
      %v1473 = vmax.f32 %v1205, 0.0
      %v1474 = vmax.f32 %v1210, 0.0
      %v1475 = vmax.f32 %v1213, 0.0
      %v1476 = vmax.f32 %v1218, 0.0
      %v1477 = vmax.f32 %v1221, 0.0
      %v1478 = vmax.f32 %v1226, 0.0
      %v1479 = vmax.f32 %v1229, 0.0
      %v1480 = vmax.f32 %v1234, 0.0
      %v1481 = vmax.f32 %v1237, 0.0
      %v1482 = vmax.f32 %v1242, 0.0
      %v1483 = vmax.f32 %v1245, 0.0
      %v1484 = vmax.f32 %v1250, 0.0
      %v1485 = vmax.f32 %v1253, 0.0
      %v1486 = vmax.f32 %v1258, 0.0
      %v1487 = vmax.f32 %v1261, 0.0
      %v1488 = vmax.f32 %v1266, 0.0
      %v1489 = vmax.f32 %v1269, 0.0
      %v1490 = vmax.f32 %v1274, 0.0
      %v1491 = vmax.f32 %v1277, 0.0
      %v1492 = vmax.f32 %v1282, 0.0
      %v1493 = vmax.f32 %v1285, 0.0
      %v1494 = vmax.f32 %v1290, 0.0
      %v1495 = vmax.f32 %v1293, 0.0
      %v1496 = vmax.f32 %v1298, 0.0
      %v1497 = vmax.f32 %v1301, 0.0
      %v1498 = vmax.f32 %v1306, 0.0
      %v1499 = vmax.f32 %v1309, 0.0
      %v1500 = vmax.f32 %v1314, 0.0
      %v1501 = vmax.f32 %v1317, 0.0
      %v1502 = vmax.f32 %v1322, 0.0
      %v1503 = vmax.f32 %v1325, 0.0
      %v1504 = vmax.f32 %v1330, 0.0
      %v1505 = vmax.f32 %v1333, 0.0
      %v1506 = vmax.f32 %v1338, 0.0
      %v1507 = vmax.f32 %v1341, 0.0
      %v1508 = vmax.f32 %v1346, 0.0
      %v1509 = vmax.f32 %v1349, 0.0
      %v1510 = vmax.f32 %v1354, 0.0
      %v1511 = vmax.f32 %v1357, 0.0
      %v1512 = vmax.f32 %v1362, 0.0
      %v1513 = vmax.f32 %v1365, 0.0
      %v1514 = vmax.f32 %v1370, 0.0
      %v1515 = vmax.f32 %v1373, 0.0
      %v1516 = vmax.f32 %v1378, 0.0
      %v1517 = vmax.f32 %v1381, 0.0
      %v1518 = vmax.f32 %v1386, 0.0
      %v1519 = vmax.f32 %v1389, 0.0
      %v1520 = vmax.f32 %v1392, %v1456
      %v1521 = vmax.f32 %v1393, %v1457
      %v1522 = vmax.f32 %v1394, %v1458
      %v1523 = vmax.f32 %v1395, %v1459
      %v1524 = vmax.f32 %v1396, %v1460
      %v1525 = vmax.f32 %v1397, %v1461
      %v1526 = vmax.f32 %v1398, %v1462
      %v1527 = vmax.f32 %v1399, %v1463
      %v1528 = vmax.f32 %v1400, %v1464
      %v1529 = vmax.f32 %v1401, %v1465
      %v1530 = vmax.f32 %v1402, %v1466
      %v1531 = vmax.f32 %v1403, %v1467
      %v1532 = vmax.f32 %v1404, %v1468
      %v1533 = vmax.f32 %v1405, %v1469
      %v1534 = vmax.f32 %v1406, %v1470
      %v1535 = vmax.f32 %v1407, %v1471
      %v1536 = vmax.f32 %v1408, %v1472
      %v1537 = vmax.f32 %v1409, %v1473
      %v1538 = vmax.f32 %v1410, %v1474
      %v1539 = vmax.f32 %v1411, %v1475
      %v1540 = vmax.f32 %v1412, %v1476
      %v1541 = vmax.f32 %v1413, %v1477
      %v1542 = vmax.f32 %v1414, %v1478
      %v1543 = vmax.f32 %v1415, %v1479
      %v1544 = vmax.f32 %v1416, %v1480
      %v1545 = vmax.f32 %v1417, %v1481
      %v1546 = vmax.f32 %v1418, %v1482
      %v1547 = vmax.f32 %v1419, %v1483
      %v1548 = vmax.f32 %v1420, %v1484
      %v1549 = vmax.f32 %v1421, %v1485
      %v1550 = vmax.f32 %v1422, %v1486
      %v1551 = vmax.f32 %v1423, %v1487
      %v1552 = vmax.f32 %v1424, %v1488
      %v1553 = vmax.f32 %v1425, %v1489
      %v1554 = vmax.f32 %v1426, %v1490
      %v1555 = vmax.f32 %v1427, %v1491
      %v1556 = vmax.f32 %v1428, %v1492
      %v1557 = vmax.f32 %v1429, %v1493
      %v1558 = vmax.f32 %v1430, %v1494
      %v1559 = vmax.f32 %v1431, %v1495
      %v1560 = vmax.f32 %v1432, %v1496
      %v1561 = vmax.f32 %v1433, %v1497
      %v1562 = vmax.f32 %v1434, %v1498
      %v1563 = vmax.f32 %v1435, %v1499
      %v1564 = vmax.f32 %v1436, %v1500
      %v1565 = vmax.f32 %v1437, %v1501
      %v1566 = vmax.f32 %v1438, %v1502
      %v1567 = vmax.f32 %v1439, %v1503
      %v1568 = vmax.f32 %v1440, %v1504
      %v1569 = vmax.f32 %v1441, %v1505
      %v1570 = vmax.f32 %v1442, %v1506
      %v1571 = vmax.f32 %v1443, %v1507
      %v1572 = vmax.f32 %v1444, %v1508
      %v1573 = vmax.f32 %v1445, %v1509
      %v1574 = vmax.f32 %v1446, %v1510
      %v1575 = vmax.f32 %v1447, %v1511
      %v1576 = vmax.f32 %v1448, %v1512
      %v1577 = vmax.f32 %v1449, %v1513
      %v1578 = vmax.f32 %v1450, %v1514
      %v1579 = vmax.f32 %v1451, %v1515
      %v1580 = vmax.f32 %v1452, %v1516
      %v1581 = vmax.f32 %v1453, %v1517
      %v1582 = vmax.f32 %v1454, %v1518
      %v1583 = vmax.f32 %v1455, %v1519
      %v1584 = vmax.f32 %v1520, %v1522
      %v1585 = vmax.f32 %v1521, %v1523
      %v1586 = vmax.f32 %v1524, %v1526
      %v1587 = vmax.f32 %v1525, %v1527
      %v1588 = vmax.f32 %v1528, %v1530
      %v1589 = vmax.f32 %v1529, %v1531
      %v1590 = vmax.f32 %v1532, %v1534
      %v1591 = vmax.f32 %v1533, %v1535
      %v1592 = vmax.f32 %v1536, %v1538
      %v1593 = vmax.f32 %v1537, %v1539
      %v1594 = vmax.f32 %v1540, %v1542
      %v1595 = vmax.f32 %v1541, %v1543
      %v1596 = vmax.f32 %v1544, %v1546
      %v1597 = vmax.f32 %v1545, %v1547
      %v1598 = vmax.f32 %v1548, %v1550
      %v1599 = vmax.f32 %v1549, %v1551
      %v1600 = vmax.f32 %v1552, %v1554
      %v1601 = vmax.f32 %v1553, %v1555
      %v1602 = vmax.f32 %v1556, %v1558
      %v1603 = vmax.f32 %v1557, %v1559
      %v1604 = vmax.f32 %v1560, %v1562
      %v1605 = vmax.f32 %v1561, %v1563
      %v1606 = vmax.f32 %v1564, %v1566
      %v1607 = vmax.f32 %v1565, %v1567
      %v1608 = vmax.f32 %v1568, %v1570
      %v1609 = vmax.f32 %v1569, %v1571
      %v1610 = vmax.f32 %v1572, %v1574
      %v1611 = vmax.f32 %v1573, %v1575
      %v1612 = vmax.f32 %v1576, %v1578
      %v1613 = vmax.f32 %v1577, %v1579
      %v1614 = vmax.f32 %v1580, %v1582
      %v1615 = vmax.f32 %v1581, %v1583
      %v1616 = vpack.c.bf16 %v1585, %v1584
      %v1617 = vpack.c.bf16 %v1587, %v1586
      %v1618 = vpack.c.bf16 %v1589, %v1588
      %v1619 = vpack.c.bf16 %v1591, %v1590
      %v1620 = vpack.c.bf16 %v1593, %v1592
      %v1621 = vpack.c.bf16 %v1595, %v1594
      %v1622 = vpack.c.bf16 %v1597, %v1596
      %v1623 = vpack.c.bf16 %v1599, %v1598
      %v1624 = vpack.c.bf16 %v1601, %v1600
      %v1625 = vpack.c.bf16 %v1603, %v1602
      %v1626 = vpack.c.bf16 %v1605, %v1604
      %v1627 = vpack.c.bf16 %v1607, %v1606
      %v1628 = vpack.c.bf16 %v1609, %v1608
      %v1629 = vpack.c.bf16 %v1611, %v1610
      %v1630 = vpack.c.bf16 %v1613, %v1612
      %v1631 = vpack.c.bf16 %v1615, %v1614
      %v1648 = vunpack.c.l.b16 %v1616
      %v1649 = vunpack.c.h.b16 %v1616
      %v1650 = vunpack.c.l.b16 %v1617
      %v1651 = vunpack.c.h.b16 %v1617
      %v1652 = vunpack.c.l.b16 %v1618
      %v1653 = vunpack.c.h.b16 %v1618
      %v1654 = vunpack.c.l.b16 %v1619
      %v1655 = vunpack.c.h.b16 %v1619
      %v1656 = vunpack.c.l.b16 %v1620
      %v1657 = vunpack.c.h.b16 %v1620
      %v1658 = vunpack.c.l.b16 %v1621
      %v1659 = vunpack.c.h.b16 %v1621
      %v1660 = vunpack.c.l.b16 %v1622
      %v1661 = vunpack.c.h.b16 %v1622
      %v1662 = vunpack.c.l.b16 %v1623
      %v1663 = vunpack.c.h.b16 %v1623
      %v1664 = vunpack.c.l.b16 %v1624
      %v1665 = vunpack.c.h.b16 %v1624
      %v1666 = vunpack.c.l.b16 %v1625
      %v1667 = vunpack.c.h.b16 %v1625
      %v1668 = vunpack.c.l.b16 %v1626
      %v1669 = vunpack.c.h.b16 %v1626
      %v1670 = vunpack.c.l.b16 %v1627
      %v1671 = vunpack.c.h.b16 %v1627
      %v1672 = vunpack.c.l.b16 %v1628
      %v1673 = vunpack.c.h.b16 %v1628
      %v1674 = vunpack.c.l.b16 %v1629
      %v1675 = vunpack.c.h.b16 %v1629
      %v1676 = vunpack.c.l.b16 %v1630
      %v1677 = vunpack.c.h.b16 %v1630
      %v1678 = vunpack.c.l.b16 %v1631
      %v1679 = vunpack.c.h.b16 %v1631
      %v1680 = vpack.c.b16 %v1648, %v1648
      %v1681 = vpack.c.b16 %v1649, %v1649
      %v1682 = vpack.c.b16 %v1650, %v1650
      %v1683 = vpack.c.b16 %v1651, %v1651
      %v1684 = vpack.c.b16 %v1652, %v1652
      %v1685 = vpack.c.b16 %v1653, %v1653
      %v1686 = vpack.c.b16 %v1654, %v1654
      %v1687 = vpack.c.b16 %v1655, %v1655
      %v1688 = vpack.c.b16 %v1656, %v1656
      %v1689 = vpack.c.b16 %v1657, %v1657
      %v1690 = vpack.c.b16 %v1658, %v1658
      %v1691 = vpack.c.b16 %v1659, %v1659
      %v1692 = vpack.c.b16 %v1660, %v1660
      %v1693 = vpack.c.b16 %v1661, %v1661
      %v1694 = vpack.c.b16 %v1662, %v1662
      %v1695 = vpack.c.b16 %v1663, %v1663
      %v1696 = vpack.c.b16 %v1664, %v1664
      %v1697 = vpack.c.b16 %v1665, %v1665
      %v1698 = vpack.c.b16 %v1666, %v1666
      %v1699 = vpack.c.b16 %v1667, %v1667
      %v1700 = vpack.c.b16 %v1668, %v1668
      %v1701 = vpack.c.b16 %v1669, %v1669
      %v1702 = vpack.c.b16 %v1670, %v1670
      %v1703 = vpack.c.b16 %v1671, %v1671
      %v1704 = vpack.c.b16 %v1672, %v1672
      %v1705 = vpack.c.b16 %v1673, %v1673
      %v1706 = vpack.c.b16 %v1674, %v1674
      %v1707 = vpack.c.b16 %v1675, %v1675
      %v1708 = vpack.c.b16 %v1676, %v1676
      %v1709 = vpack.c.b16 %v1677, %v1677
      %v1710 = vpack.c.b16 %v1678, %v1678
      %v1711 = vpack.c.b16 %v1679, %v1679
      %vm1744 = vcmask 125952
      %1745 = vst.msk [vmem:[%s174] sm:$0xf] %vm1744, %v1680
      %1746 = vst.msk [vmem:[%s174 + $0x4] sm:$0xf] %vm1744, %v1681
      %1747 = vst.msk [vmem:[%s174 + $0x8] sm:$0xf] %vm1744, %v1682
      %1748 = vst.msk [vmem:[%s174 + $0xc] sm:$0xf] %vm1744, %v1683
      %1749 = vst.msk [vmem:[%s174 + $0x10] sm:$0xf] %vm1744, %v1684
      %1750 = vst.msk [vmem:[%s174 + $0x14] sm:$0xf] %vm1744, %v1685
      %1751 = vst.msk [vmem:[%s174 + $0x18] sm:$0xf] %vm1744, %v1686
      %1752 = vst.msk [vmem:[%s174 + $0x1c] sm:$0xf] %vm1744, %v1687
      %1753 = vst.msk [vmem:[%s174 + $0x20] sm:$0xf] %vm1744, %v1688
      %1754 = vst.msk [vmem:[%s174 + $0x24] sm:$0xf] %vm1744, %v1689
      %1755 = vst.msk [vmem:[%s174 + $0x28] sm:$0xf] %vm1744, %v1690
      %1756 = vst.msk [vmem:[%s174 + $0x2c] sm:$0xf] %vm1744, %v1691
      %1757 = vst.msk [vmem:[%s174 + $0x30] sm:$0xf] %vm1744, %v1692
      %1758 = vst.msk [vmem:[%s174 + $0x34] sm:$0xf] %vm1744, %v1693
      %1759 = vst.msk [vmem:[%s174 + $0x38] sm:$0xf] %vm1744, %v1694
      %1760 = vst.msk [vmem:[%s174 + $0x3c] sm:$0xf] %vm1744, %v1695
      %1761 = vst.msk [vmem:[%s174 + $0x40] sm:$0xf] %vm1744, %v1696
      %1762 = vst.msk [vmem:[%s174 + $0x44] sm:$0xf] %vm1744, %v1697
      %1763 = vst.msk [vmem:[%s174 + $0x48] sm:$0xf] %vm1744, %v1698
      %1764 = vst.msk [vmem:[%s174 + $0x4c] sm:$0xf] %vm1744, %v1699
      %1765 = vst.msk [vmem:[%s174 + $0x50] sm:$0xf] %vm1744, %v1700
      %1766 = vst.msk [vmem:[%s174 + $0x54] sm:$0xf] %vm1744, %v1701
      %1767 = vst.msk [vmem:[%s174 + $0x58] sm:$0xf] %vm1744, %v1702
      %1768 = vst.msk [vmem:[%s174 + $0x5c] sm:$0xf] %vm1744, %v1703
      %1769 = vst.msk [vmem:[%s174 + $0x60] sm:$0xf] %vm1744, %v1704
      %1770 = vst.msk [vmem:[%s174 + $0x64] sm:$0xf] %vm1744, %v1705
      %1771 = vst.msk [vmem:[%s174 + $0x68] sm:$0xf] %vm1744, %v1706
      %1772 = vst.msk [vmem:[%s174 + $0x6c] sm:$0xf] %vm1744, %v1707
      %1773 = vst.msk [vmem:[%s174 + $0x70] sm:$0xf] %vm1744, %v1708
      %1774 = vst.msk [vmem:[%s174 + $0x74] sm:$0xf] %vm1744, %v1709
      %1775 = vst.msk [vmem:[%s174 + $0x78] sm:$0xf] %vm1744, %v1710
      %1776 = vst.msk [vmem:[%s174 + $0x7c] sm:$0xf] %vm1744, %v1711
      %s1777 = smul.u32 16, %s14
      %p1778 = scmp.lt.s32.totalorder %s1777, 31
      %s1779 = scalar_select %p1778, %s1777, 31
      %s1780 = smul.addr %s1779, 2
      %s1781 = smul.addr %s1780, 4
      %s1782 = scalar_lea.vmem %s3, %s1781
      // Predicated region
      $region33: #{net_forward.3} parent=31 // pred_check
        %p1783 = pneg %p100
      $region34: #{net_forward.3} parent=31 // pred_check_branch
        %1785 = sbr.rel (%p1783) target = $region36
      $region35: #{net_forward.3} parent=31 // pred_region
        %s1786 = smul.u32 16, %s14
      $region36: #{net_forward.3} parent=31 // pred_fallthru
        _
    $region32: #{net_forward.3} parent=5 // pred_fallthru
      _
    %p1787 = scmp.le.s32.totalorder 2, %s9
    // Predicated region
    $region37: #{net_forward.3} parent=5 // pred_check
      %p1788 = pneg %p1787
    $region38: #{net_forward.3} parent=5 // pred_check_branch
      %1790 = sbr.rel (%p1788) target = $region40
    $region39: #{net_forward.3} parent=5 // pred_region
      %s1791 = ssub.s32 %s9, 2
      // Predicated region
      $region41: #{net_forward.3} parent=39 // pred_check
        %p1792 = pneg %p106
      $region42: #{net_forward.3} parent=39 // pred_check_branch
        %1794 = sbr.rel (%p1792) target = $region44
      $region43: #{net_forward.3} parent=39 // pred_region
        %s1795 = smul.u32 16, %s15
        %p1796 = scmp.lt.s32.totalorder %s1795, 31
        %s1797 = scalar_select %p1796, %s1795, 31
        %s1798 = smul.addr %s1797, 2
        %s1799 = smul.addr %s1798, 4
        %s1800 = scalar_lea.vmem %s3, %s1799
      $region44: #{net_forward.3} parent=39 // pred_fallthru
        _
    $region40: #{net_forward.3} parent=5 // pred_fallthru
      _
  $region6: #{net_forward.3} parent=0 // loop_footer
    %s13 = sadd.s32 1, %s9
  $region7: #{net_forward.3} parent=0 // loop_footer_branch
    %8 = sbr.rel target = $region3
  $region8: #{net_forward.3} parent=0 // loop_exit
    _

// kernel: net_forward.4
$region0: #{net_forward.4}
  #allocation0 [shape = 'u32[]', space=smem, size = 0x4, offset = 0x4, fixed_abs, tag = 'smem constant byte address 0x4 - core index']
  #allocation1 [shape = 'u32[144,128]{1,0:T(1,128)}', space=vmem, size = 0x12000, scoped, tag = 'internal scratch']
  %s0 = inlined_call_operand.vmem [shape: bf16[512,144], index: 0, kind: input, shape index: {}]
  %s1 = inlined_call_operand.vmem [shape: bf16[144,32], index: 1, kind: input, shape index: {}]
  %s2 = inlined_call_operand.vmem [shape: f32[1,32], index: 2, kind: input, shape index: {}]
  %s3 = inlined_call_operand.vmem [shape: bf16[16,8,32], index: 3, kind: output, shape index: {}]
  %s4 = sld [smem:[#allocation0]]
  $region45: #{net_forward.4} parent=0
    _
  %s6 = ssub.s32 1, %s4
  %s7 = scalar_select 0, %s6, %s4
  loop: start=0, step=1, limit=4
  $region2: #{net_forward.4} parent=0 // loop_pre_header
    _
  $region3: #{net_forward.4} parent=0 // loop_header
    %s9 = sphi 0, %s13
    %p10 = scmp.ge.s32.totalorder %s9, 4
    %s19 = sphi 0, %s21
    %s22 = sphi 0, %s19
    %s23 = sphi 0, %s22
    %s39 = sphi 0, %s23
    %s43 = sphi 0, %s43
    %s45 = sphi 0, %s43
    %s46 = sphi 0, %s45
    %s60 = sphi 0, %s46
    %s64 = sphi 0, %s64
    %s66 = sphi 0, %s64
    %s67 = sphi 0, %s66
    %s81 = sphi 0, %s67
    %s87 = sphi 0, %s89
    %s90 = sphi 0, %s87
    %s91 = sphi 0, %s90
    %s107 = sphi 0, %s91
  $region4: #{net_forward.4} parent=0 // loop_header_branch
    %12 = sbr.rel (%p10) target = $region8
  $region5: #{net_forward.4} parent=0 // loop_body
    %s14 = ssub.s32 %s9, 1
    %s15 = ssub.s32 %s9, 2
    %s16 = sadd.s32 %s9, 1
    %s17 = ssub.s32 %s9, %s16
    %p18 = scmp.eq.s32.totalorder %s17, 0
    %s20 = sadd.s32 %s19, 1
    %s21 = scalar_select %p18, %s19, %s20
    %p24 = pneg %p18
    %p25 = scmp.eq.s32.totalorder %s9, 1
    %p26 = por %p24, %p25
    %p27 = scmp.ne.s32.totalorder %s19, %s22
    %p28 = scmp.eq.s32.totalorder %s9, 0
    %p29 = por %p27, %p28
    %p30 = scmp.ne.s32.totalorder %s19, %s22
    %p31 = scmp.eq.s32.totalorder %s14, 1
    %p32 = por %p30, %p31
    %p33 = scmp.ne.s32.totalorder %s22, %s23
    %p34 = scmp.eq.s32.totalorder %s14, 0
    %p35 = por %p33, %p34
    %p36 = scmp.ne.s32.totalorder %s22, %s23
    %p37 = scmp.eq.s32.totalorder %s15, 1
    %p38 = por %p36, %p37
    %p40 = scmp.ne.s32.totalorder %s23, %s39
    %p41 = scmp.eq.s32.totalorder %s15, 0
    %p42 = por %p40, %p41
    %s44 = sadd.s32 %s43, 1
    %p47 = scmp.eq.s32.totalorder %s9, 1
    %p48 = scmp.ne.s32.totalorder %s43, %s45
    %p49 = scmp.eq.s32.totalorder %s9, 0
    %p50 = por %p48, %p49
    %p51 = scmp.ne.s32.totalorder %s43, %s45
    %p52 = scmp.eq.s32.totalorder %s14, 1
    %p53 = por %p51, %p52
    %p54 = scmp.ne.s32.totalorder %s45, %s46
    %p55 = scmp.eq.s32.totalorder %s14, 0
    %p56 = por %p54, %p55
    %p57 = scmp.ne.s32.totalorder %s45, %s46
    %p58 = scmp.eq.s32.totalorder %s15, 1
    %p59 = por %p57, %p58
    %p61 = scmp.ne.s32.totalorder %s46, %s60
    %p62 = scmp.eq.s32.totalorder %s15, 0
    %p63 = por %p61, %p62
    %s65 = sadd.s32 %s64, 1
    %p68 = scmp.eq.s32.totalorder %s9, 1
    %p69 = scmp.ne.s32.totalorder %s64, %s66
    %p70 = scmp.eq.s32.totalorder %s9, 0
    %p71 = por %p69, %p70
    %p72 = scmp.ne.s32.totalorder %s64, %s66
    %p73 = scmp.eq.s32.totalorder %s14, 1
    %p74 = por %p72, %p73
    %p75 = scmp.ne.s32.totalorder %s66, %s67
    %p76 = scmp.eq.s32.totalorder %s14, 0
    %p77 = por %p75, %p76
    %p78 = scmp.ne.s32.totalorder %s66, %s67
    %p79 = scmp.eq.s32.totalorder %s15, 1
    %p80 = por %p78, %p79
    %p82 = scmp.ne.s32.totalorder %s67, %s81
    %p83 = scmp.eq.s32.totalorder %s15, 0
    %p84 = por %p82, %p83
    %s85 = ssub.s32 %s9, %s16
    %p86 = scmp.eq.s32.totalorder %s85, 0
    %s88 = sadd.s32 %s87, 1
    %s89 = scalar_select %p86, %s87, %s88
    %p92 = pneg %p86
    %p93 = scmp.eq.s32.totalorder %s9, 1
    %p94 = por %p92, %p93
    %p95 = scmp.ne.s32.totalorder %s87, %s90
    %p96 = scmp.eq.s32.totalorder %s9, 0
    %p97 = por %p95, %p96
    %p98 = scmp.ne.s32.totalorder %s87, %s90
    %p99 = scmp.eq.s32.totalorder %s14, 1
    %p100 = por %p98, %p99
    %p101 = scmp.ne.s32.totalorder %s90, %s91
    %p102 = scmp.eq.s32.totalorder %s14, 0
    %p103 = por %p101, %p102
    %p104 = scmp.ne.s32.totalorder %s90, %s91
    %p105 = scmp.eq.s32.totalorder %s15, 1
    %p106 = por %p104, %p105
    %p108 = scmp.ne.s32.totalorder %s91, %s107
    %p109 = scmp.eq.s32.totalorder %s15, 0
    %p110 = por %p108, %p109
    %p111 = scmp.le.s32.totalorder 1, %s9
    %p112 = scmp.lt.s32.totalorder %s9, 3
    %p113 = pnand %p111, %p112
    %p114 = pneg %p113
    // Predicated region
    $region9: #{net_forward.4} parent=5 // pred_check
      _
    $region10: #{net_forward.4} parent=5 // pred_check_branch
      %116 = sbr.rel (%p113) target = $region12
    $region11: #{net_forward.4} parent=5 // pred_region
      %s117 = ssub.s32 %s9, 1
      // Predicated region
      $region13: #{net_forward.4} parent=11 // pred_check
        %p118 = pneg %p56
      $region14: #{net_forward.4} parent=11 // pred_check_branch
        %120 = sbr.rel (%p118) target = $region16
      $region15: #{net_forward.4} parent=11 // pred_region
        _
      $region16: #{net_forward.4} parent=11 // pred_fallthru
        _
      // Predicated region
      $region17: #{net_forward.4} parent=11 // pred_check
        %p121 = pneg %p77
      $region18: #{net_forward.4} parent=11 // pred_check_branch
        %123 = sbr.rel (%p121) target = $region20
      $region19: #{net_forward.4} parent=11 // pred_region
        _
      $region20: #{net_forward.4} parent=11 // pred_fallthru
        _
    $region12: #{net_forward.4} parent=5 // pred_fallthru
      _
    %p124 = scmp.lt.s32.totalorder %s9, 2
    // Predicated region
    $region21: #{net_forward.4} parent=5 // pred_check
      %p125 = pneg %p124
    $region22: #{net_forward.4} parent=5 // pred_check_branch
      %127 = sbr.rel (%p125) target = $region24
    $region23: #{net_forward.4} parent=5 // pred_region
      // Predicated region
      $region25: #{net_forward.4} parent=23 // pred_check
        %p128 = pneg %p29
      $region26: #{net_forward.4} parent=23 // pred_check_branch
        %130 = sbr.rel (%p128) target = $region28
      $region27: #{net_forward.4} parent=23 // pred_region
        %s131 = smul.u32 32, %s9
        %p132 = scmp.lt.s32.totalorder %s131, 63
        %s133 = scalar_select %p132, %s131, 63
        %s134 = smul.addr %s133, 2
        %s135 = smul.addr %s134, 4
        %s136 = scalar_lea.vmem %s0, %s135
        %s137 = smul.u32 32, %s9
      $region28: #{net_forward.4} parent=23 // pred_fallthru
        _
    $region24: #{net_forward.4} parent=5 // pred_fallthru
      _
    %p138 = scmp.le.s32.totalorder 1, %s9
    %p139 = scmp.lt.s32.totalorder %s9, 3
    %p140 = pnand %p138, %p139
    %p141 = pneg %p140
    // Predicated region
    $region29: #{net_forward.4} parent=5 // pred_check
      _
    $region30: #{net_forward.4} parent=5 // pred_check_branch
      %143 = sbr.rel (%p140) target = $region32
    $region31: #{net_forward.4} parent=5 // pred_region
      %s144 = ssub.s32 %s9, 1
      %s145 = smul.u32 32, %s14
      %p146 = scmp.lt.s32.totalorder %s145, 63
      %s147 = scalar_select %p146, %s145, 63
      %s148 = smul.addr %s147, 2
      %s149 = smul.addr %s148, 4
      %s150 = scalar_lea.vmem %s0, %s149
      %p151 = pneg %p35
      %p152 = pneg %p32
      %p153 = pneg %p56
      %p154 = pneg %p53
      %p155 = pneg %p77
      %p156 = pneg %p74
      %p157 = pneg %p103
      %p158 = pneg %p100
      %s159 = smul.u32 8, %s14
      %p160 = scmp.lt.s32.totalorder %s159, 15
      %s161 = scalar_select %p160, %s159, 15
      %s162 = smul.addr %s161, 4
      %s163 = scalar_lea.vmem %s3, %s162
      %s164 = smul.u32 32, %s14
      %p165 = scmp.lt.s32.totalorder %s164, 63
      %s166 = scalar_select %p165, %s164, 63
      %s167 = smul.addr %s166, 2
      %s168 = smul.addr %s167, 4
      %s169 = scalar_lea.vmem %s0, %s168
      %s170 = smul.u32 32, %s14
      %s171 = smul.u32 8, %s14
      %p172 = scmp.lt.s32.totalorder %s171, 15
      %s173 = scalar_select %p172, %s171, 15
      %s174 = smul.addr %s173, 4
      %s175 = scalar_lea.vmem %s3, %s174
      %s176 = smul.u32 8, %s14
      %v178 = vld [vmem:[%s169] sm:$0xff]
      %v179 = vld [vmem:[%s169 + $0x8] sm:$0xff]
      %v180 = vld [vmem:[%s169 + $0x10] sm:$0xff]
      %v181 = vld [vmem:[%s169 + $0x18] sm:$0xff]
      %v182 = vld [vmem:[%s169 + $0x20] sm:$0xff]
      %v183 = vld [vmem:[%s169 + $0x28] sm:$0xff]
      %v184 = vld [vmem:[%s169 + $0x30] sm:$0xff]
      %v185 = vld [vmem:[%s169 + $0x38] sm:$0xff]
      %v186 = vld [vmem:[%s169 + $0x40] sm:$0xff]
      %v187 = vld [vmem:[%s169 + $0x48] sm:$0xff]
      %v188 = vld [vmem:[%s169 + $0x50] sm:$0xff]
      %v189 = vld [vmem:[%s169 + $0x58] sm:$0xff]
      %v190 = vld [vmem:[%s169 + $0x60] sm:$0xff]
      %v191 = vld [vmem:[%s169 + $0x68] sm:$0xff]
      %v192 = vld [vmem:[%s169 + $0x70] sm:$0xff]
      %v193 = vld [vmem:[%s169 + $0x78] sm:$0xff]
      %v194 = vld [vmem:[%s169 + $0x80] sm:$0xff]
      %v195 = vld [vmem:[%s169 + $0x88] sm:$0xff]
      %v196 = vld [vmem:[%s169 + $0x90] sm:$0xff]
      %v197 = vld [vmem:[%s169 + $0x98] sm:$0xff]
      %v198 = vld [vmem:[%s169 + $0xa0] sm:$0xff]
      %v199 = vld [vmem:[%s169 + $0xa8] sm:$0xff]
      %v200 = vld [vmem:[%s169 + $0xb0] sm:$0xff]
      %v201 = vld [vmem:[%s169 + $0xb8] sm:$0xff]
      %v202 = vld [vmem:[%s169 + $0xc0] sm:$0xff]
      %v203 = vld [vmem:[%s169 + $0xc8] sm:$0xff]
      %v204 = vld [vmem:[%s169 + $0xd0] sm:$0xff]
      %v205 = vld [vmem:[%s169 + $0xd8] sm:$0xff]
      %v206 = vld [vmem:[%s169 + $0xe0] sm:$0xff]
      %v207 = vld [vmem:[%s169 + $0xe8] sm:$0xff]
      %v208 = vld [vmem:[%s169 + $0xf0] sm:$0xff]
      %v209 = vld [vmem:[%s169 + $0xf8] sm:$0xff]
      %v210 = vld [vmem:[%s1] sm:$0xf]
      %v211 = vld [vmem:[%s1 + $0x4] sm:$0xf]
      %v212 = vld [vmem:[%s1 + $0x8] sm:$0xf]
      %v213 = vld [vmem:[%s1 + $0xc] sm:$0xf]
      %v214 = vld [vmem:[%s1 + $0x10] sm:$0xf]
      %v215 = vld [vmem:[%s1 + $0x14] sm:$0xf]
      %v216 = vld [vmem:[%s1 + $0x18] sm:$0xf]
      %v217 = vld [vmem:[%s1 + $0x1c] sm:$0xf]
      %v218 = vld [vmem:[%s1 + $0x20] sm:$0xf]
      %v219 = vld [vmem:[%s1 + $0x24] sm:$0xf]
      %v220 = vld [vmem:[%s1 + $0x28] sm:$0xf]
      %v221 = vld [vmem:[%s1 + $0x2c] sm:$0xf]
      %v222 = vld [vmem:[%s1 + $0x30] sm:$0xf]
      %v223 = vld [vmem:[%s1 + $0x34] sm:$0xf]
      %v224 = vld [vmem:[%s1 + $0x38] sm:$0xf]
      %v225 = vld [vmem:[%s1 + $0x3c] sm:$0xf]
      %v226 = vld [vmem:[%s1 + $0x40] sm:$0xf]
      %v227 = vld [vmem:[%s1 + $0x44] sm:$0xf]
      %v228 = vld [vmem:[%s2] sm:$0x1]
      %v230 = vlaneseq
      %v231 = vshrl.u32 %v230, 7
      %v232 = vsub.s32 0, %v231
      %v233 = vrot.slane %v228, %v232
      %v267 = vunpack.c.l.b16 %v178
      %v268 = vunpack.c.h.b16 %v178
      %v269 = vunpack.c.l.b16 %v179
      %v270 = vunpack.c.h.b16 %v179
      %v271 = vunpack.c.l.b16 %v180
      %v272 = vunpack.c.h.b16 %v180
      %v273 = vunpack.c.l.b16 %v181
      %v274 = vunpack.c.h.b16 %v181
      %v275 = vunpack.c.l.b16 %v182
      %v276 = vunpack.c.h.b16 %v182
      %v277 = vunpack.c.l.b16 %v183
      %v278 = vunpack.c.h.b16 %v183
      %v279 = vunpack.c.l.b16 %v184
      %v280 = vunpack.c.h.b16 %v184
      %v281 = vunpack.c.l.b16 %v185
      %v282 = vunpack.c.h.b16 %v185
      %v283 = vunpack.c.l.b16 %v186
      %v284 = vunpack.c.h.b16 %v186
      %v285 = vunpack.c.l.b16 %v187
      %v286 = vunpack.c.h.b16 %v187
      %v287 = vunpack.c.l.b16 %v188
      %v288 = vunpack.c.h.b16 %v188
      %v289 = vunpack.c.l.b16 %v189
      %v290 = vunpack.c.h.b16 %v189
      %v291 = vunpack.c.l.b16 %v190
      %v292 = vunpack.c.h.b16 %v190
      %v293 = vunpack.c.l.b16 %v191
      %v294 = vunpack.c.h.b16 %v191
      %v295 = vunpack.c.l.b16 %v192
      %v296 = vunpack.c.h.b16 %v192
      %v297 = vunpack.c.l.b16 %v193
      %v298 = vunpack.c.h.b16 %v193
      %v299 = vunpack.c.l.b16 %v194
      %v300 = vunpack.c.h.b16 %v194
      %v301 = vunpack.c.l.b16 %v195
      %v302 = vunpack.c.h.b16 %v195
      %v303 = vunpack.c.l.b16 %v196
      %v304 = vunpack.c.h.b16 %v196
      %v305 = vunpack.c.l.b16 %v197
      %v306 = vunpack.c.h.b16 %v197
      %v307 = vunpack.c.l.b16 %v198
      %v308 = vunpack.c.h.b16 %v198
      %v309 = vunpack.c.l.b16 %v199
      %v310 = vunpack.c.h.b16 %v199
      %v311 = vunpack.c.l.b16 %v200
      %v312 = vunpack.c.h.b16 %v200
      %v313 = vunpack.c.l.b16 %v201
      %v314 = vunpack.c.h.b16 %v201
      %v315 = vunpack.c.l.b16 %v202
      %v316 = vunpack.c.h.b16 %v202
      %v317 = vunpack.c.l.b16 %v203
      %v318 = vunpack.c.h.b16 %v203
      %v319 = vunpack.c.l.b16 %v204
      %v320 = vunpack.c.h.b16 %v204
      %v321 = vunpack.c.l.b16 %v205
      %v322 = vunpack.c.h.b16 %v205
      %v323 = vunpack.c.l.b16 %v206
      %v324 = vunpack.c.h.b16 %v206
      %v325 = vunpack.c.l.b16 %v207
      %v326 = vunpack.c.h.b16 %v207
      %v327 = vunpack.c.l.b16 %v208
      %v328 = vunpack.c.h.b16 %v208
      %v329 = vunpack.c.l.b16 %v209
      %v330 = vunpack.c.h.b16 %v209
      %v331 = vpack.c.b16 %v269, %v267
      %v332 = vpack.c.b16 %v270, %v268
      %v333 = vpack.c.b16 %v273, %v271
      %v334 = vpack.c.b16 %v274, %v272
      %v335 = vpack.c.b16 %v277, %v275
      %v336 = vpack.c.b16 %v278, %v276
      %v337 = vpack.c.b16 %v281, %v279
      %v338 = vpack.c.b16 %v282, %v280
      %v339 = vpack.c.b16 %v285, %v283
      %v340 = vpack.c.b16 %v286, %v284
      %v341 = vpack.c.b16 %v289, %v287
      %v342 = vpack.c.b16 %v290, %v288
      %v343 = vpack.c.b16 %v293, %v291
      %v344 = vpack.c.b16 %v294, %v292
      %v345 = vpack.c.b16 %v297, %v295
      %v346 = vpack.c.b16 %v298, %v296
      %v347 = vpack.c.b16 %v301, %v299
      %v348 = vpack.c.b16 %v302, %v300
      %v349 = vpack.c.b16 %v305, %v303
      %v350 = vpack.c.b16 %v306, %v304
      %v351 = vpack.c.b16 %v309, %v307
      %v352 = vpack.c.b16 %v310, %v308
      %v353 = vpack.c.b16 %v313, %v311
      %v354 = vpack.c.b16 %v314, %v312
      %v355 = vpack.c.b16 %v317, %v315
      %v356 = vpack.c.b16 %v318, %v316
      %v357 = vpack.c.b16 %v321, %v319
      %v358 = vpack.c.b16 %v322, %v320
      %v359 = vpack.c.b16 %v325, %v323
      %v360 = vpack.c.b16 %v326, %v324
      %v361 = vpack.c.b16 %v329, %v327
      %v362 = vpack.c.b16 %v330, %v328
      %v397 = vunpack.c.l.b16 %v210
      %v398 = vunpack.c.l.b16 %v211
      %v399 = vunpack.c.l.b16 %v212
      %v400 = vunpack.c.l.b16 %v213
      %v401 = vunpack.c.l.b16 %v214
      %v402 = vunpack.c.l.b16 %v215
      %v403 = vunpack.c.l.b16 %v216
      %v404 = vunpack.c.l.b16 %v217
      %v405 = vunpack.c.l.b16 %v218
      %v406 = vunpack.c.l.b16 %v219
      %v407 = vunpack.c.l.b16 %v220
      %v408 = vunpack.c.l.b16 %v221
      %v409 = vunpack.c.l.b16 %v222
      %v410 = vunpack.c.l.b16 %v223
      %v411 = vunpack.c.l.b16 %v224
      %v412 = vunpack.c.l.b16 %v225
      %v413 = vunpack.c.l.b16 %v226
      %v414 = vunpack.c.l.b16 %v227
      %v415 = vpack.c.b16 %v398, %v397
      %v416 = vpack.c.b16 %v400, %v399
      %v417 = vpack.c.b16 %v402, %v401
      %v418 = vpack.c.b16 %v404, %v403
      %v419 = vpack.c.b16 %v406, %v405
      %v420 = vpack.c.b16 %v408, %v407
      %v421 = vpack.c.b16 %v410, %v409
      %v422 = vpack.c.b16 %v412, %v411
      %v423 = vpack.c.b16 %v414, %v413
      %vm433 = vcmask 130048
      %v435 = vsel %vm433, %v332, 0
      %v438 = vsel %vm433, %v334, 0
      %v441 = vsel %vm433, %v336, 0
      %v444 = vsel %vm433, %v338, 0
      %v447 = vsel %vm433, %v340, 0
      %v450 = vsel %vm433, %v342, 0
      %v453 = vsel %vm433, %v344, 0
      %v456 = vsel %vm433, %v346, 0
      %v459 = vsel %vm433, %v348, 0
      %v462 = vsel %vm433, %v350, 0
      %v465 = vsel %vm433, %v352, 0
      %v468 = vsel %vm433, %v354, 0
      %v471 = vsel %vm433, %v356, 0
      %v474 = vsel %vm433, %v358, 0
      %v477 = vsel %vm433, %v360, 0
      %v480 = vsel %vm433, %v362, 0
      %482 = vmatprep.subr.bf16.mxu0 0
      %483 = vmatpush1.bf16.msra.mxu0 %v415
      %484 = vmatprep.subr.bf16.mxu0 0
      %485 = vmatpush1.bf16.msra.mxu0 %v416
      %486 = vmatprep.subr.bf16.mxu0 0
      %487 = vmatpush1.bf16.msra.mxu0 %v417
      %488 = vmatprep.subr.bf16.mxu0 0
      %489 = vmatpush1.bf16.msra.mxu0 %v418
      %490 = vmatprep.subr.bf16.mxu0 0
      %491 = vmatpush1.bf16.msra.mxu0 %v419
      %492 = vmatprep.subr.bf16.mxu0 0
      %493 = vmatpush1.bf16.msra.mxu0 %v420
      %494 = vmatprep.subr.bf16.mxu0 0
      %495 = vmatpush1.bf16.msra.mxu0 %v421
      %496 = vmatprep.subr.bf16.mxu0 0
      %497 = vmatpush1.bf16.msra.mxu0 %v422
      %498 = vmatprep.subr.bf16.mxu0 0
      %499 = vmatpush1.bf16.msra.mxu0 %v423
      %500 = vmatprep.subr.bf16.mxu0 0
      %501 = vmatpush1.bf16.msra.mxu0 0
      %502 = vmatprep.subr.bf16.mxu0 0
      %503 = vmatpush1.bf16.msra.mxu0 0
      %504 = vmatprep.subr.bf16.mxu0 0
      %505 = vmatpush1.bf16.msra.mxu0 0
      %506 = vmatprep.subr.bf16.mxu0 0
      %507 = vmatpush1.bf16.msra.mxu0 0
      %508 = vmatprep.subr.bf16.mxu0 0
      %509 = vmatpush1.bf16.msra.mxu0 0
      %510 = vmatprep.subr.bf16.mxu0 0
      %511 = vmatpush1.bf16.msra.mxu0 0
      %512 = vmatprep.subr.bf16.mxu0 0
      %513 = vmatpush1.bf16.msra.mxu0 0
      %514 = vmatprep.mubr.bf16.mxu0 %v435
      %515 = vmatmul.mubr.bf16.gmra.mrb[0].mxu0 %v331
      %v516 = vpop.f32.mrb[0].mxu0
      %v517 = vadd.f32 %v233, %v516
      %v518 = vpop.f32.mrb[0].mxu0
      %v519 = vpop.f32.mrb[0].mxu0
      %v520 = vadd.f32 %v233, %v519
      %v521 = vpop.f32.mrb[0].mxu0
      %522 = vmatprep.mubr.bf16.mxu0 %v438
      %523 = vmatmul.mubr.bf16.gmra.mrb[0].mxu0 %v333
      %v524 = vpop.f32.mrb[0].mxu0
      %v525 = vadd.f32 %v233, %v524
      %v526 = vpop.f32.mrb[0].mxu0
      %v527 = vpop.f32.mrb[0].mxu0
      %v528 = vadd.f32 %v233, %v527
      %v529 = vpop.f32.mrb[0].mxu0
      %530 = vmatprep.mubr.bf16.mxu0 %v441
      %531 = vmatmul.mubr.bf16.gmra.mrb[0].mxu0 %v335
      %v532 = vpop.f32.mrb[0].mxu0
      %v533 = vadd.f32 %v233, %v532
      %v534 = vpop.f32.mrb[0].mxu0
      %v535 = vpop.f32.mrb[0].mxu0
      %v536 = vadd.f32 %v233, %v535
      %v537 = vpop.f32.mrb[0].mxu0
      %538 = vmatprep.mubr.bf16.mxu0 %v444
      %539 = vmatmul.mubr.bf16.gmra.mrb[0].mxu0 %v337
      %v540 = vpop.f32.mrb[0].mxu0
      %v541 = vadd.f32 %v233, %v540
      %v542 = vpop.f32.mrb[0].mxu0
      %v543 = vpop.f32.mrb[0].mxu0
      %v544 = vadd.f32 %v233, %v543
      %v545 = vpop.f32.mrb[0].mxu0
      %546 = vmatprep.mubr.bf16.mxu0 %v447
      %547 = vmatmul.mubr.bf16.gmra.mrb[0].mxu0 %v339
      %v548 = vpop.f32.mrb[0].mxu0
      %v549 = vadd.f32 %v233, %v548
      %v550 = vpop.f32.mrb[0].mxu0
      %v551 = vpop.f32.mrb[0].mxu0
      %v552 = vadd.f32 %v233, %v551
      %v553 = vpop.f32.mrb[0].mxu0
      %554 = vmatprep.mubr.bf16.mxu0 %v450
      %555 = vmatmul.mubr.bf16.gmra.mrb[0].mxu0 %v341
      %v556 = vpop.f32.mrb[0].mxu0
      %v557 = vadd.f32 %v233, %v556
      %v558 = vpop.f32.mrb[0].mxu0
      %v559 = vpop.f32.mrb[0].mxu0
      %v560 = vadd.f32 %v233, %v559
      %v561 = vpop.f32.mrb[0].mxu0
      %562 = vmatprep.mubr.bf16.mxu0 %v453
      %563 = vmatmul.mubr.bf16.gmra.mrb[0].mxu0 %v343
      %v564 = vpop.f32.mrb[0].mxu0
      %v565 = vadd.f32 %v233, %v564
      %v566 = vpop.f32.mrb[0].mxu0
      %v567 = vpop.f32.mrb[0].mxu0
      %v568 = vadd.f32 %v233, %v567
      %v569 = vpop.f32.mrb[0].mxu0
      %570 = vmatprep.mubr.bf16.mxu0 %v456
      %571 = vmatmul.mubr.bf16.gmra.mrb[0].mxu0 %v345
      %v572 = vpop.f32.mrb[0].mxu0
      %v573 = vadd.f32 %v233, %v572
      %v574 = vpop.f32.mrb[0].mxu0
      %v575 = vpop.f32.mrb[0].mxu0
      %v576 = vadd.f32 %v233, %v575
      %v577 = vpop.f32.mrb[0].mxu0
      %578 = vmatprep.mubr.bf16.mxu0 %v459
      %579 = vmatmul.mubr.bf16.gmra.mrb[0].mxu0 %v347
      %v580 = vpop.f32.mrb[0].mxu0
      %v581 = vadd.f32 %v233, %v580
      %v582 = vpop.f32.mrb[0].mxu0
      %v583 = vpop.f32.mrb[0].mxu0
      %v584 = vadd.f32 %v233, %v583
      %v585 = vpop.f32.mrb[0].mxu0
      %586 = vmatprep.mubr.bf16.mxu0 %v462
      %587 = vmatmul.mubr.bf16.gmra.mrb[0].mxu0 %v349
      %v588 = vpop.f32.mrb[0].mxu0
      %v589 = vadd.f32 %v233, %v588
      %v590 = vpop.f32.mrb[0].mxu0
      %v591 = vpop.f32.mrb[0].mxu0
      %v592 = vadd.f32 %v233, %v591
      %v593 = vpop.f32.mrb[0].mxu0
      %594 = vmatprep.mubr.bf16.mxu0 %v465
      %595 = vmatmul.mubr.bf16.gmra.mrb[0].mxu0 %v351
      %v596 = vpop.f32.mrb[0].mxu0
      %v597 = vadd.f32 %v233, %v596
      %v598 = vpop.f32.mrb[0].mxu0
      %v599 = vpop.f32.mrb[0].mxu0
      %v600 = vadd.f32 %v233, %v599
      %v601 = vpop.f32.mrb[0].mxu0
      %602 = vmatprep.mubr.bf16.mxu0 %v468
      %603 = vmatmul.mubr.bf16.gmra.mrb[0].mxu0 %v353
      %v604 = vpop.f32.mrb[0].mxu0
      %v605 = vadd.f32 %v233, %v604
      %v606 = vpop.f32.mrb[0].mxu0
      %v607 = vpop.f32.mrb[0].mxu0
      %v608 = vadd.f32 %v233, %v607
      %v609 = vpop.f32.mrb[0].mxu0
      %610 = vmatprep.mubr.bf16.mxu0 %v471
      %611 = vmatmul.mubr.bf16.gmra.mrb[0].mxu0 %v355
      %v612 = vpop.f32.mrb[0].mxu0
      %v613 = vadd.f32 %v233, %v612
      %v614 = vpop.f32.mrb[0].mxu0
      %v615 = vpop.f32.mrb[0].mxu0
      %v616 = vadd.f32 %v233, %v615
      %v617 = vpop.f32.mrb[0].mxu0
      %618 = vmatprep.mubr.bf16.mxu0 %v474
      %619 = vmatmul.mubr.bf16.gmra.mrb[0].mxu0 %v357
      %v620 = vpop.f32.mrb[0].mxu0
      %v621 = vadd.f32 %v233, %v620
      %v622 = vpop.f32.mrb[0].mxu0
      %v623 = vpop.f32.mrb[0].mxu0
      %v624 = vadd.f32 %v233, %v623
      %v625 = vpop.f32.mrb[0].mxu0
      %626 = vmatprep.mubr.bf16.mxu0 %v477
      %627 = vmatmul.mubr.bf16.gmra.mrb[0].mxu0 %v359
      %v628 = vpop.f32.mrb[0].mxu0
      %v629 = vadd.f32 %v233, %v628
      %v630 = vpop.f32.mrb[0].mxu0
      %v631 = vpop.f32.mrb[0].mxu0
      %v632 = vadd.f32 %v233, %v631
      %v633 = vpop.f32.mrb[0].mxu0
      %634 = vmatprep.mubr.bf16.mxu0 %v480
      %635 = vmatmul.mubr.bf16.gmra.mrb[0].mxu0 %v361
      %v636 = vpop.f32.mrb[0].mxu0
      %v637 = vadd.f32 %v233, %v636
      %v638 = vpop.f32.mrb[0].mxu0
      %v639 = vpop.f32.mrb[0].mxu0
      %v640 = vadd.f32 %v233, %v639
      %v641 = vpop.f32.mrb[0].mxu0
      %642 = vdwg.mxu0
      %v643 = vmax.f32 %v517, 0.0
      %v644 = vmax.f32 %v520, 0.0
      %v645 = vmax.f32 %v525, 0.0
      %v646 = vmax.f32 %v528, 0.0
      %v647 = vmax.f32 %v533, 0.0
      %v648 = vmax.f32 %v536, 0.0
      %v649 = vmax.f32 %v541, 0.0
      %v650 = vmax.f32 %v544, 0.0
      %v651 = vmax.f32 %v549, 0.0
      %v652 = vmax.f32 %v552, 0.0
      %v653 = vmax.f32 %v557, 0.0
      %v654 = vmax.f32 %v560, 0.0
      %v655 = vmax.f32 %v565, 0.0
      %v656 = vmax.f32 %v568, 0.0
      %v657 = vmax.f32 %v573, 0.0
      %v658 = vmax.f32 %v576, 0.0
      %v659 = vmax.f32 %v581, 0.0
      %v660 = vmax.f32 %v584, 0.0
      %v661 = vmax.f32 %v589, 0.0
      %v662 = vmax.f32 %v592, 0.0
      %v663 = vmax.f32 %v597, 0.0
      %v664 = vmax.f32 %v600, 0.0
      %v665 = vmax.f32 %v605, 0.0
      %v666 = vmax.f32 %v608, 0.0
      %v667 = vmax.f32 %v613, 0.0
      %v668 = vmax.f32 %v616, 0.0
      %v669 = vmax.f32 %v621, 0.0
      %v670 = vmax.f32 %v624, 0.0
      %v671 = vmax.f32 %v629, 0.0
      %v672 = vmax.f32 %v632, 0.0
      %v673 = vmax.f32 %v637, 0.0
      %v674 = vmax.f32 %v640, 0.0
      %v675 = vmax.f32 %v643, %v659
      %v676 = vmax.f32 %v644, %v660
      %v677 = vmax.f32 %v645, %v661
      %v678 = vmax.f32 %v646, %v662
      %v679 = vmax.f32 %v647, %v663
      %v680 = vmax.f32 %v648, %v664
      %v681 = vmax.f32 %v649, %v665
      %v682 = vmax.f32 %v650, %v666
      %v683 = vmax.f32 %v651, %v667
      %v684 = vmax.f32 %v652, %v668
      %v685 = vmax.f32 %v653, %v669
      %v686 = vmax.f32 %v654, %v670
      %v687 = vmax.f32 %v655, %v671
      %v688 = vmax.f32 %v656, %v672
      %v689 = vmax.f32 %v657, %v673
      %v690 = vmax.f32 %v658, %v674
      %v691 = vmax.f32 %v675, %v676
      %v692 = vmax.f32 %v677, %v678
      %v693 = vmax.f32 %v679, %v680
      %v694 = vmax.f32 %v681, %v682
      %v695 = vmax.f32 %v683, %v684
      %v696 = vmax.f32 %v685, %v686
      %v697 = vmax.f32 %v687, %v688
      %v698 = vmax.f32 %v689, %v690
      %v699 = vpack.c.bf16 %v691, %v691
      %v700 = vpack.c.bf16 %v692, %v692
      %v701 = vpack.c.bf16 %v693, %v693
      %v702 = vpack.c.bf16 %v694, %v694
      %v703 = vpack.c.bf16 %v695, %v695
      %v704 = vpack.c.bf16 %v696, %v696
      %v705 = vpack.c.bf16 %v697, %v697
      %v706 = vpack.c.bf16 %v698, %v698
      %vm707 = vcmask 257024
      %708 = vst.msk [vmem:[%s175] sm:$0xf] %vm707, %v699
      %709 = vst.msk [vmem:[%s175 + $0x4] sm:$0xf] %vm707, %v700
      %710 = vst.msk [vmem:[%s175 + $0x8] sm:$0xf] %vm707, %v701
      %711 = vst.msk [vmem:[%s175 + $0xc] sm:$0xf] %vm707, %v702
      %712 = vst.msk [vmem:[%s175 + $0x10] sm:$0xf] %vm707, %v703
      %713 = vst.msk [vmem:[%s175 + $0x14] sm:$0xf] %vm707, %v704
      %714 = vst.msk [vmem:[%s175 + $0x18] sm:$0xf] %vm707, %v705
      %715 = vst.msk [vmem:[%s175 + $0x1c] sm:$0xf] %vm707, %v706
      %s716 = smul.u32 8, %s14
      %p717 = scmp.lt.s32.totalorder %s716, 15
      %s718 = scalar_select %p717, %s716, 15
      %s719 = smul.addr %s718, 4
      %s720 = scalar_lea.vmem %s3, %s719
      // Predicated region
      $region33: #{net_forward.4} parent=31 // pred_check
        %p721 = pneg %p100
      $region34: #{net_forward.4} parent=31 // pred_check_branch
        %723 = sbr.rel (%p721) target = $region36
      $region35: #{net_forward.4} parent=31 // pred_region
        %s724 = smul.u32 8, %s14
      $region36: #{net_forward.4} parent=31 // pred_fallthru
        _
    $region32: #{net_forward.4} parent=5 // pred_fallthru
      _
    %p725 = scmp.le.s32.totalorder 2, %s9
    // Predicated region
    $region37: #{net_forward.4} parent=5 // pred_check
      %p726 = pneg %p725
    $region38: #{net_forward.4} parent=5 // pred_check_branch
      %728 = sbr.rel (%p726) target = $region40
    $region39: #{net_forward.4} parent=5 // pred_region
      %s729 = ssub.s32 %s9, 2
      // Predicated region
      $region41: #{net_forward.4} parent=39 // pred_check
        %p730 = pneg %p106
      $region42: #{net_forward.4} parent=39 // pred_check_branch
        %732 = sbr.rel (%p730) target = $region44
      $region43: #{net_forward.4} parent=39 // pred_region
        %s733 = smul.u32 8, %s15
        %p734 = scmp.lt.s32.totalorder %s733, 15
        %s735 = scalar_select %p734, %s733, 15
        %s736 = smul.addr %s735, 4
        %s737 = scalar_lea.vmem %s3, %s736
      $region44: #{net_forward.4} parent=39 // pred_fallthru
        _
    $region40: #{net_forward.4} parent=5 // pred_fallthru
      _
  $region6: #{net_forward.4} parent=0 // loop_footer
    %s13 = sadd.s32 1, %s9
  $region7: #{net_forward.4} parent=0 // loop_footer_branch
    %8 = sbr.rel target = $region3
  $region8: #{net_forward.4} parent=0 // loop_exit
    _

// kernel: net_forward.5
$region0: #{net_forward.5}
  #allocation0 [shape = 'u32[]', space=smem, size = 0x4, offset = 0x4, fixed_abs, tag = 'smem constant byte address 0x4 - core index']
  #allocation1 [shape = 'u32[144,128]{1,0:T(1,128)}', space=vmem, size = 0x12000, scoped, tag = 'internal scratch']
  %s0 = inlined_call_operand.vmem [shape: bf16[2,2048], index: 0, kind: input, shape index: {}]
  %s1 = inlined_call_operand.vmem [shape: bf16[2048,128], index: 1, kind: input, shape index: {}]
  %s2 = inlined_call_operand.vmem [shape: f32[1,128], index: 2, kind: input, shape index: {}]
  %s3 = inlined_call_operand.vmem [shape: bf16[128,10], index: 3, kind: input, shape index: {}]
  %s4 = inlined_call_operand.vmem [shape: f32[1,10], index: 4, kind: input, shape index: {}]
  %s5 = inlined_call_operand.hbm [shape: f32[2,10], index: 5, kind: output, shape index: {}]
  %s6 = sld [smem:[#allocation0]]
  $region30: #{net_forward.5} parent=0
    _
  %s8 = ssub.s32 1, %s6
  %s9 = scalar_select 0, %s8, %s6
  $region1: #{net_forward.5} parent=0
    #allocation2 [shape = 'u8[1024]{0}', space=vmem, size = 0x400, scoped, tag = 'output window, operand 0, single buffered']
    #allocation3 [shape = 's32[1]{0}', space=sflag, size = 0x4, scoped, tag = 'scoped memory for net_forward.5']
    %10 = vsyncpa [#allocation3], 0
    // Predicated region
    $region2: #{net_forward.5} parent=1 // pred_check
      _
    $region3: #{net_forward.5} parent=1 // pred_check_branch
      %12 = sbr.rel (0) target = $region5
    $region4: #{net_forward.5} parent=1 // pred_region
      _
    $region5: #{net_forward.5} parent=1 // pred_fallthru
      _
    // Predicated region
    $region6: #{net_forward.5} parent=1 // pred_check
      _
    $region7: #{net_forward.5} parent=1 // pred_check_branch
      %14 = sbr.rel (0) target = $region9
    $region8: #{net_forward.5} parent=1 // pred_region
      _
    $region9: #{net_forward.5} parent=1 // pred_fallthru
      _
    // Predicated region
    $region10: #{net_forward.5} parent=1 // pred_check
      _
    $region11: #{net_forward.5} parent=1 // pred_check_branch
      %16 = sbr.rel (0) target = $region13
    $region12: #{net_forward.5} parent=1 // pred_region
      _
    $region13: #{net_forward.5} parent=1 // pred_fallthru
      _
    // Predicated region
    $region14: #{net_forward.5} parent=1 // pred_check
      _
    $region15: #{net_forward.5} parent=1 // pred_check_branch
      %18 = sbr.rel (0) target = $region17
    $region16: #{net_forward.5} parent=1 // pred_region
      _
    $region17: #{net_forward.5} parent=1 // pred_fallthru
      _
    // Predicated region
    $region18: #{net_forward.5} parent=1 // pred_check
      _
    $region19: #{net_forward.5} parent=1 // pred_check_branch
      %20 = sbr.rel (0) target = $region21
    $region20: #{net_forward.5} parent=1 // pred_region
      _
    $region21: #{net_forward.5} parent=1 // pred_fallthru
      _
    %v22 = vld [vmem:[%s0] sm:$0xff]
    %v23 = vld [vmem:[%s0 + $0x8] sm:$0xff]
    %v24 = vld [vmem:[%s1] sm:$0xf]
    %v25 = vld [vmem:[%s1 + $0x4] sm:$0xf]
    %v26 = vld [vmem:[%s1 + $0x8] sm:$0xf]
    %v27 = vld [vmem:[%s1 + $0xc] sm:$0xf]
    %v28 = vld [vmem:[%s1 + $0x10] sm:$0xf]
    %v29 = vld [vmem:[%s1 + $0x14] sm:$0xf]
    %v30 = vld [vmem:[%s1 + $0x18] sm:$0xf]
    %v31 = vld [vmem:[%s1 + $0x1c] sm:$0xf]
    %v32 = vld [vmem:[%s1 + $0x20] sm:$0xf]
    %v33 = vld [vmem:[%s1 + $0x24] sm:$0xf]
    %v34 = vld [vmem:[%s1 + $0x28] sm:$0xf]
    %v35 = vld [vmem:[%s1 + $0x2c] sm:$0xf]
    %v36 = vld [vmem:[%s1 + $0x30] sm:$0xf]
    %v37 = vld [vmem:[%s1 + $0x34] sm:$0xf]
    %v38 = vld [vmem:[%s1 + $0x38] sm:$0xf]
    %v39 = vld [vmem:[%s1 + $0x3c] sm:$0xf]
    %v40 = vld [vmem:[%s1 + $0x40] sm:$0xf]
    %v41 = vld [vmem:[%s1 + $0x44] sm:$0xf]
    %v42 = vld [vmem:[%s1 + $0x48] sm:$0xf]
    %v43 = vld [vmem:[%s1 + $0x4c] sm:$0xf]
    %v44 = vld [vmem:[%s1 + $0x50] sm:$0xf]
    %v45 = vld [vmem:[%s1 + $0x54] sm:$0xf]
    %v46 = vld [vmem:[%s1 + $0x58] sm:$0xf]
    %v47 = vld [vmem:[%s1 + $0x5c] sm:$0xf]
    %v48 = vld [vmem:[%s1 + $0x60] sm:$0xf]
    %v49 = vld [vmem:[%s1 + $0x64] sm:$0xf]
    %v50 = vld [vmem:[%s1 + $0x68] sm:$0xf]
    %v51 = vld [vmem:[%s1 + $0x6c] sm:$0xf]
    %v52 = vld [vmem:[%s1 + $0x70] sm:$0xf]
    %v53 = vld [vmem:[%s1 + $0x74] sm:$0xf]
    %v54 = vld [vmem:[%s1 + $0x78] sm:$0xf]
    %v55 = vld [vmem:[%s1 + $0x7c] sm:$0xf]
    %v56 = vld [vmem:[%s1 + $0x80] sm:$0xf]
    %v57 = vld [vmem:[%s1 + $0x84] sm:$0xf]
    %v58 = vld [vmem:[%s1 + $0x88] sm:$0xf]
    %v59 = vld [vmem:[%s1 + $0x8c] sm:$0xf]
    %v60 = vld [vmem:[%s1 + $0x90] sm:$0xf]
    %v61 = vld [vmem:[%s1 + $0x94] sm:$0xf]
    %v62 = vld [vmem:[%s1 + $0x98] sm:$0xf]
    %v63 = vld [vmem:[%s1 + $0x9c] sm:$0xf]
    %v64 = vld [vmem:[%s1 + $0xa0] sm:$0xf]
    %v65 = vld [vmem:[%s1 + $0xa4] sm:$0xf]
    %v66 = vld [vmem:[%s1 + $0xa8] sm:$0xf]
    %v67 = vld [vmem:[%s1 + $0xac] sm:$0xf]
    %v68 = vld [vmem:[%s1 + $0xb0] sm:$0xf]
    %v69 = vld [vmem:[%s1 + $0xb4] sm:$0xf]
    %v70 = vld [vmem:[%s1 + $0xb8] sm:$0xf]
    %v71 = vld [vmem:[%s1 + $0xbc] sm:$0xf]
    %v72 = vld [vmem:[%s1 + $0xc0] sm:$0xf]
    %v73 = vld [vmem:[%s1 + $0xc4] sm:$0xf]
    %v74 = vld [vmem:[%s1 + $0xc8] sm:$0xf]
    %v75 = vld [vmem:[%s1 + $0xcc] sm:$0xf]
    %v76 = vld [vmem:[%s1 + $0xd0] sm:$0xf]
    %v77 = vld [vmem:[%s1 + $0xd4] sm:$0xf]
    %v78 = vld [vmem:[%s1 + $0xd8] sm:$0xf]
    %v79 = vld [vmem:[%s1 + $0xdc] sm:$0xf]
    %v80 = vld [vmem:[%s1 + $0xe0] sm:$0xf]
    %v81 = vld [vmem:[%s1 + $0xe4] sm:$0xf]
    %v82 = vld [vmem:[%s1 + $0xe8] sm:$0xf]
    %v83 = vld [vmem:[%s1 + $0xec] sm:$0xf]
    %v84 = vld [vmem:[%s1 + $0xf0] sm:$0xf]
    %v85 = vld [vmem:[%s1 + $0xf4] sm:$0xf]
    %v86 = vld [vmem:[%s1 + $0xf8] sm:$0xf]
    %v87 = vld [vmem:[%s1 + $0xfc] sm:$0xf]
    %v88 = vld [vmem:[%s1 + $0x100] sm:$0xf]
    %v89 = vld [vmem:[%s1 + $0x104] sm:$0xf]
    %v90 = vld [vmem:[%s1 + $0x108] sm:$0xf]
    %v91 = vld [vmem:[%s1 + $0x10c] sm:$0xf]
    %v92 = vld [vmem:[%s1 + $0x110] sm:$0xf]
    %v93 = vld [vmem:[%s1 + $0x114] sm:$0xf]
    %v94 = vld [vmem:[%s1 + $0x118] sm:$0xf]
    %v95 = vld [vmem:[%s1 + $0x11c] sm:$0xf]
    %v96 = vld [vmem:[%s1 + $0x120] sm:$0xf]
    %v97 = vld [vmem:[%s1 + $0x124] sm:$0xf]
    %v98 = vld [vmem:[%s1 + $0x128] sm:$0xf]
    %v99 = vld [vmem:[%s1 + $0x12c] sm:$0xf]
    %v100 = vld [vmem:[%s1 + $0x130] sm:$0xf]
    %v101 = vld [vmem:[%s1 + $0x134] sm:$0xf]
    %v102 = vld [vmem:[%s1 + $0x138] sm:$0xf]
    %v103 = vld [vmem:[%s1 + $0x13c] sm:$0xf]
    %v104 = vld [vmem:[%s1 + $0x140] sm:$0xf]
    %v105 = vld [vmem:[%s1 + $0x144] sm:$0xf]
    %v106 = vld [vmem:[%s1 + $0x148] sm:$0xf]
    %v107 = vld [vmem:[%s1 + $0x14c] sm:$0xf]
    %v108 = vld [vmem:[%s1 + $0x150] sm:$0xf]
    %v109 = vld [vmem:[%s1 + $0x154] sm:$0xf]
    %v110 = vld [vmem:[%s1 + $0x158] sm:$0xf]
    %v111 = vld [vmem:[%s1 + $0x15c] sm:$0xf]
    %v112 = vld [vmem:[%s1 + $0x160] sm:$0xf]
    %v113 = vld [vmem:[%s1 + $0x164] sm:$0xf]
    %v114 = vld [vmem:[%s1 + $0x168] sm:$0xf]
    %v115 = vld [vmem:[%s1 + $0x16c] sm:$0xf]
    %v116 = vld [vmem:[%s1 + $0x170] sm:$0xf]
    %v117 = vld [vmem:[%s1 + $0x174] sm:$0xf]
    %v118 = vld [vmem:[%s1 + $0x178] sm:$0xf]
    %v119 = vld [vmem:[%s1 + $0x17c] sm:$0xf]
    %v120 = vld [vmem:[%s1 + $0x180] sm:$0xf]
    %v121 = vld [vmem:[%s1 + $0x184] sm:$0xf]
    %v122 = vld [vmem:[%s1 + $0x188] sm:$0xf]
    %v123 = vld [vmem:[%s1 + $0x18c] sm:$0xf]
    %v124 = vld [vmem:[%s1 + $0x190] sm:$0xf]
    %v125 = vld [vmem:[%s1 + $0x194] sm:$0xf]
    %v126 = vld [vmem:[%s1 + $0x198] sm:$0xf]
    %v127 = vld [vmem:[%s1 + $0x19c] sm:$0xf]
    %v128 = vld [vmem:[%s1 + $0x1a0] sm:$0xf]
    %v129 = vld [vmem:[%s1 + $0x1a4] sm:$0xf]
    %v130 = vld [vmem:[%s1 + $0x1a8] sm:$0xf]
    %v131 = vld [vmem:[%s1 + $0x1ac] sm:$0xf]
    %v132 = vld [vmem:[%s1 + $0x1b0] sm:$0xf]
    %v133 = vld [vmem:[%s1 + $0x1b4] sm:$0xf]
    %v134 = vld [vmem:[%s1 + $0x1b8] sm:$0xf]
    %v135 = vld [vmem:[%s1 + $0x1bc] sm:$0xf]
    %v136 = vld [vmem:[%s1 + $0x1c0] sm:$0xf]
    %v137 = vld [vmem:[%s1 + $0x1c4] sm:$0xf]
    %v138 = vld [vmem:[%s1 + $0x1c8] sm:$0xf]
    %v139 = vld [vmem:[%s1 + $0x1cc] sm:$0xf]
    %v140 = vld [vmem:[%s1 + $0x1d0] sm:$0xf]
    %v141 = vld [vmem:[%s1 + $0x1d4] sm:$0xf]
    %v142 = vld [vmem:[%s1 + $0x1d8] sm:$0xf]
    %v143 = vld [vmem:[%s1 + $0x1dc] sm:$0xf]
    %v144 = vld [vmem:[%s1 + $0x1e0] sm:$0xf]
    %v145 = vld [vmem:[%s1 + $0x1e4] sm:$0xf]
    %v146 = vld [vmem:[%s1 + $0x1e8] sm:$0xf]
    %v147 = vld [vmem:[%s1 + $0x1ec] sm:$0xf]
    %v148 = vld [vmem:[%s1 + $0x1f0] sm:$0xf]
    %v149 = vld [vmem:[%s1 + $0x1f4] sm:$0xf]
    %v150 = vld [vmem:[%s1 + $0x1f8] sm:$0xf]
    %v151 = vld [vmem:[%s1 + $0x1fc] sm:$0xf]
    %v152 = vld [vmem:[%s1 + $0x200] sm:$0xf]
    %v153 = vld [vmem:[%s1 + $0x204] sm:$0xf]
    %v154 = vld [vmem:[%s1 + $0x208] sm:$0xf]
    %v155 = vld [vmem:[%s1 + $0x20c] sm:$0xf]
    %v156 = vld [vmem:[%s1 + $0x210] sm:$0xf]
    %v157 = vld [vmem:[%s1 + $0x214] sm:$0xf]
    %v158 = vld [vmem:[%s1 + $0x218] sm:$0xf]
    %v159 = vld [vmem:[%s1 + $0x21c] sm:$0xf]
    %v160 = vld [vmem:[%s1 + $0x220] sm:$0xf]
    %v161 = vld [vmem:[%s1 + $0x224] sm:$0xf]
    %v162 = vld [vmem:[%s1 + $0x228] sm:$0xf]
    %v163 = vld [vmem:[%s1 + $0x22c] sm:$0xf]
    %v164 = vld [vmem:[%s1 + $0x230] sm:$0xf]
    %v165 = vld [vmem:[%s1 + $0x234] sm:$0xf]
    %v166 = vld [vmem:[%s1 + $0x238] sm:$0xf]
    %v167 = vld [vmem:[%s1 + $0x23c] sm:$0xf]
    %v168 = vld [vmem:[%s1 + $0x240] sm:$0xf]
    %v169 = vld [vmem:[%s1 + $0x244] sm:$0xf]
    %v170 = vld [vmem:[%s1 + $0x248] sm:$0xf]
    %v171 = vld [vmem:[%s1 + $0x24c] sm:$0xf]
    %v172 = vld [vmem:[%s1 + $0x250] sm:$0xf]
    %v173 = vld [vmem:[%s1 + $0x254] sm:$0xf]
    %v174 = vld [vmem:[%s1 + $0x258] sm:$0xf]
    %v175 = vld [vmem:[%s1 + $0x25c] sm:$0xf]
    %v176 = vld [vmem:[%s1 + $0x260] sm:$0xf]
    %v177 = vld [vmem:[%s1 + $0x264] sm:$0xf]
    %v178 = vld [vmem:[%s1 + $0x268] sm:$0xf]
    %v179 = vld [vmem:[%s1 + $0x26c] sm:$0xf]
    %v180 = vld [vmem:[%s1 + $0x270] sm:$0xf]
    %v181 = vld [vmem:[%s1 + $0x274] sm:$0xf]
    %v182 = vld [vmem:[%s1 + $0x278] sm:$0xf]
    %v183 = vld [vmem:[%s1 + $0x27c] sm:$0xf]
    %v184 = vld [vmem:[%s1 + $0x280] sm:$0xf]
    %v185 = vld [vmem:[%s1 + $0x284] sm:$0xf]
    %v186 = vld [vmem:[%s1 + $0x288] sm:$0xf]
    %v187 = vld [vmem:[%s1 + $0x28c] sm:$0xf]
    %v188 = vld [vmem:[%s1 + $0x290] sm:$0xf]
    %v189 = vld [vmem:[%s1 + $0x294] sm:$0xf]
    %v190 = vld [vmem:[%s1 + $0x298] sm:$0xf]
    %v191 = vld [vmem:[%s1 + $0x29c] sm:$0xf]
    %v192 = vld [vmem:[%s1 + $0x2a0] sm:$0xf]
    %v193 = vld [vmem:[%s1 + $0x2a4] sm:$0xf]
    %v194 = vld [vmem:[%s1 + $0x2a8] sm:$0xf]
    %v195 = vld [vmem:[%s1 + $0x2ac] sm:$0xf]
    %v196 = vld [vmem:[%s1 + $0x2b0] sm:$0xf]
    %v197 = vld [vmem:[%s1 + $0x2b4] sm:$0xf]
    %v198 = vld [vmem:[%s1 + $0x2b8] sm:$0xf]
    %v199 = vld [vmem:[%s1 + $0x2bc] sm:$0xf]
    %v200 = vld [vmem:[%s1 + $0x2c0] sm:$0xf]
    %v201 = vld [vmem:[%s1 + $0x2c4] sm:$0xf]
    %v202 = vld [vmem:[%s1 + $0x2c8] sm:$0xf]
    %v203 = vld [vmem:[%s1 + $0x2cc] sm:$0xf]
    %v204 = vld [vmem:[%s1 + $0x2d0] sm:$0xf]
    %v205 = vld [vmem:[%s1 + $0x2d4] sm:$0xf]
    %v206 = vld [vmem:[%s1 + $0x2d8] sm:$0xf]
    %v207 = vld [vmem:[%s1 + $0x2dc] sm:$0xf]
    %v208 = vld [vmem:[%s1 + $0x2e0] sm:$0xf]
    %v209 = vld [vmem:[%s1 + $0x2e4] sm:$0xf]
    %v210 = vld [vmem:[%s1 + $0x2e8] sm:$0xf]
    %v211 = vld [vmem:[%s1 + $0x2ec] sm:$0xf]
    %v212 = vld [vmem:[%s1 + $0x2f0] sm:$0xf]
    %v213 = vld [vmem:[%s1 + $0x2f4] sm:$0xf]
    %v214 = vld [vmem:[%s1 + $0x2f8] sm:$0xf]
    %v215 = vld [vmem:[%s1 + $0x2fc] sm:$0xf]
    %v216 = vld [vmem:[%s1 + $0x300] sm:$0xf]
    %v217 = vld [vmem:[%s1 + $0x304] sm:$0xf]
    %v218 = vld [vmem:[%s1 + $0x308] sm:$0xf]
    %v219 = vld [vmem:[%s1 + $0x30c] sm:$0xf]
    %v220 = vld [vmem:[%s1 + $0x310] sm:$0xf]
    %v221 = vld [vmem:[%s1 + $0x314] sm:$0xf]
    %v222 = vld [vmem:[%s1 + $0x318] sm:$0xf]
    %v223 = vld [vmem:[%s1 + $0x31c] sm:$0xf]
    %v224 = vld [vmem:[%s1 + $0x320] sm:$0xf]
    %v225 = vld [vmem:[%s1 + $0x324] sm:$0xf]
    %v226 = vld [vmem:[%s1 + $0x328] sm:$0xf]
    %v227 = vld [vmem:[%s1 + $0x32c] sm:$0xf]
    %v228 = vld [vmem:[%s1 + $0x330] sm:$0xf]
    %v229 = vld [vmem:[%s1 + $0x334] sm:$0xf]
    %v230 = vld [vmem:[%s1 + $0x338] sm:$0xf]
    %v231 = vld [vmem:[%s1 + $0x33c] sm:$0xf]
    %v232 = vld [vmem:[%s1 + $0x340] sm:$0xf]
    %v233 = vld [vmem:[%s1 + $0x344] sm:$0xf]
    %v234 = vld [vmem:[%s1 + $0x348] sm:$0xf]
    %v235 = vld [vmem:[%s1 + $0x34c] sm:$0xf]
    %v236 = vld [vmem:[%s1 + $0x350] sm:$0xf]
    %v237 = vld [vmem:[%s1 + $0x354] sm:$0xf]
    %v238 = vld [vmem:[%s1 + $0x358] sm:$0xf]
    %v239 = vld [vmem:[%s1 + $0x35c] sm:$0xf]
    %v240 = vld [vmem:[%s1 + $0x360] sm:$0xf]
    %v241 = vld [vmem:[%s1 + $0x364] sm:$0xf]
    %v242 = vld [vmem:[%s1 + $0x368] sm:$0xf]
    %v243 = vld [vmem:[%s1 + $0x36c] sm:$0xf]
    %v244 = vld [vmem:[%s1 + $0x370] sm:$0xf]
    %v245 = vld [vmem:[%s1 + $0x374] sm:$0xf]
    %v246 = vld [vmem:[%s1 + $0x378] sm:$0xf]
    %v247 = vld [vmem:[%s1 + $0x37c] sm:$0xf]
    %v248 = vld [vmem:[%s1 + $0x380] sm:$0xf]
    %v249 = vld [vmem:[%s1 + $0x384] sm:$0xf]
    %v250 = vld [vmem:[%s1 + $0x388] sm:$0xf]
    %v251 = vld [vmem:[%s1 + $0x38c] sm:$0xf]
    %v252 = vld [vmem:[%s1 + $0x390] sm:$0xf]
    %v253 = vld [vmem:[%s1 + $0x394] sm:$0xf]
    %v254 = vld [vmem:[%s1 + $0x398] sm:$0xf]
    %v255 = vld [vmem:[%s1 + $0x39c] sm:$0xf]
    %v256 = vld [vmem:[%s1 + $0x3a0] sm:$0xf]
    %v257 = vld [vmem:[%s1 + $0x3a4] sm:$0xf]
    %v258 = vld [vmem:[%s1 + $0x3a8] sm:$0xf]
    %v259 = vld [vmem:[%s1 + $0x3ac] sm:$0xf]
    %v260 = vld [vmem:[%s1 + $0x3b0] sm:$0xf]
    %v261 = vld [vmem:[%s1 + $0x3b4] sm:$0xf]
    %v262 = vld [vmem:[%s1 + $0x3b8] sm:$0xf]
    %v263 = vld [vmem:[%s1 + $0x3bc] sm:$0xf]
    %v264 = vld [vmem:[%s1 + $0x3c0] sm:$0xf]
    %v265 = vld [vmem:[%s1 + $0x3c4] sm:$0xf]
    %v266 = vld [vmem:[%s1 + $0x3c8] sm:$0xf]
    %v267 = vld [vmem:[%s1 + $0x3cc] sm:$0xf]
    %v268 = vld [vmem:[%s1 + $0x3d0] sm:$0xf]
    %v269 = vld [vmem:[%s1 + $0x3d4] sm:$0xf]
    %v270 = vld [vmem:[%s1 + $0x3d8] sm:$0xf]
    %v271 = vld [vmem:[%s1 + $0x3dc] sm:$0xf]
    %v272 = vld [vmem:[%s1 + $0x3e0] sm:$0xf]
    %v273 = vld [vmem:[%s1 + $0x3e4] sm:$0xf]
    %v274 = vld [vmem:[%s1 + $0x3e8] sm:$0xf]
    %v275 = vld [vmem:[%s1 + $0x3ec] sm:$0xf]
    %v276 = vld [vmem:[%s1 + $0x3f0] sm:$0xf]
    %v277 = vld [vmem:[%s1 + $0x3f4] sm:$0xf]
    %v278 = vld [vmem:[%s1 + $0x3f8] sm:$0xf]
    %v279 = vld [vmem:[%s1 + $0x3fc] sm:$0xf]
    %v280 = vld [vmem:[%s2] sm:$0x1]
    %v282 = vlaneseq
    %v283 = vshrl.u32 %v282, 7
    %v284 = vsub.s32 0, %v283
    %v285 = vrot.slane %v280, %v284
    %v289 = vcombine.high %v22, %v22
    %v291 = vunpack.c.l.s4 1966171168
    %v292 = vunpack.c.0.s8 %v291
    %v293 = vlaneseq
    %v294 = vshrl.u32 %v293, 7
    %v295 = vsub.s32 %v292, %v294
    %v296 = vrot.slane %v22, %v295
    %v298 = vunpack.c.l.s4 1966171168
    %v299 = vunpack.c.0.s8 %v298
    %v300 = vlaneseq
    %v301 = vshrl.u32 %v300, 7
    %v302 = vsub.s32 %v299, %v301
    %v303 = vrot.slane %v289, %v302
    %v304 = vcombine.high %v296, %v296
    %v305 = vcombine.high %v303, %v303
    %v307 = vunpack.c.l.s4 1966171168
    %v308 = vunpack.c.0.s8 %v307
    %v309 = vlaneseq
    %v310 = vshrl.u32 %v309, 7
    %v311 = vsub.s32 %v308, %v310
    %v312 = vrot.slane %v296, %v311
    %v314 = vunpack.c.l.s4 1966171168
    %v315 = vunpack.c.0.s8 %v314
    %v316 = vlaneseq
    %v317 = vshrl.u32 %v316, 7
    %v318 = vsub.s32 %v315, %v317
    %v319 = vrot.slane %v303, %v318
    %v321 = vunpack.c.l.s4 1966171168
    %v322 = vunpack.c.0.s8 %v321
    %v323 = vlaneseq
    %v324 = vshrl.u32 %v323, 7
    %v325 = vsub.s32 %v322, %v324
    %v326 = vrot.slane %v304, %v325
    %v328 = vunpack.c.l.s4 1966171168
    %v329 = vunpack.c.0.s8 %v328
    %v330 = vlaneseq
    %v331 = vshrl.u32 %v330, 7
    %v332 = vsub.s32 %v329, %v331
    %v333 = vrot.slane %v305, %v332
    %v334 = vcombine.high %v312, %v312
    %v335 = vcombine.high %v319, %v319
    %v336 = vcombine.high %v326, %v326
    %v337 = vcombine.high %v333, %v333
    %v338 = vcombine.high %v23, %v23
    %v340 = vunpack.c.l.s4 1966171168
    %v341 = vunpack.c.0.s8 %v340
    %v342 = vlaneseq
    %v343 = vshrl.u32 %v342, 7
    %v344 = vsub.s32 %v341, %v343
    %v345 = vrot.slane %v23, %v344
    %v347 = vunpack.c.l.s4 1966171168
    %v348 = vunpack.c.0.s8 %v347
    %v349 = vlaneseq
    %v350 = vshrl.u32 %v349, 7
    %v351 = vsub.s32 %v348, %v350
    %v352 = vrot.slane %v338, %v351
    %v353 = vcombine.high %v345, %v345
    %v354 = vcombine.high %v352, %v352
    %v356 = vunpack.c.l.s4 1966171168
    %v357 = vunpack.c.0.s8 %v356
    %v358 = vlaneseq
    %v359 = vshrl.u32 %v358, 7
    %v360 = vsub.s32 %v357, %v359
    %v361 = vrot.slane %v345, %v360
    %v363 = vunpack.c.l.s4 1966171168
    %v364 = vunpack.c.0.s8 %v363
    %v365 = vlaneseq
    %v366 = vshrl.u32 %v365, 7
    %v367 = vsub.s32 %v364, %v366
    %v368 = vrot.slane %v352, %v367
    %v370 = vunpack.c.l.s4 1966171168
    %v371 = vunpack.c.0.s8 %v370
    %v372 = vlaneseq
    %v373 = vshrl.u32 %v372, 7
    %v374 = vsub.s32 %v371, %v373
    %v375 = vrot.slane %v353, %v374
    %v377 = vunpack.c.l.s4 1966171168
    %v378 = vunpack.c.0.s8 %v377
    %v379 = vlaneseq
    %v380 = vshrl.u32 %v379, 7
    %v381 = vsub.s32 %v378, %v380
    %v382 = vrot.slane %v354, %v381
    %v383 = vcombine.high %v361, %v361
    %v384 = vcombine.high %v368, %v368
    %v385 = vcombine.high %v375, %v375
    %v386 = vcombine.high %v382, %v382
    %v659 = vunpack.c.l.b16 %v24
    %v660 = vunpack.c.l.b16 %v25
    %v661 = vunpack.c.l.b16 %v26
    %v662 = vunpack.c.l.b16 %v27
    %v663 = vunpack.c.l.b16 %v28
    %v664 = vunpack.c.l.b16 %v29
    %v665 = vunpack.c.l.b16 %v30
    %v666 = vunpack.c.l.b16 %v31
    %v667 = vunpack.c.l.b16 %v32
    %v668 = vunpack.c.l.b16 %v33
    %v669 = vunpack.c.l.b16 %v34
    %v670 = vunpack.c.l.b16 %v35
    %v671 = vunpack.c.l.b16 %v36
    %v672 = vunpack.c.l.b16 %v37
    %v673 = vunpack.c.l.b16 %v38
    %v674 = vunpack.c.l.b16 %v39
    %v675 = vunpack.c.l.b16 %v40
    %v676 = vunpack.c.l.b16 %v41
    %v677 = vunpack.c.l.b16 %v42
    %v678 = vunpack.c.l.b16 %v43
    %v679 = vunpack.c.l.b16 %v44
    %v680 = vunpack.c.l.b16 %v45
    %v681 = vunpack.c.l.b16 %v46
    %v682 = vunpack.c.l.b16 %v47
    %v683 = vunpack.c.l.b16 %v48
    %v684 = vunpack.c.l.b16 %v49
    %v685 = vunpack.c.l.b16 %v50
    %v686 = vunpack.c.l.b16 %v51
    %v687 = vunpack.c.l.b16 %v52
    %v688 = vunpack.c.l.b16 %v53
    %v689 = vunpack.c.l.b16 %v54
    %v690 = vunpack.c.l.b16 %v55
    %v691 = vunpack.c.l.b16 %v56
    %v692 = vunpack.c.l.b16 %v57
    %v693 = vunpack.c.l.b16 %v58
    %v694 = vunpack.c.l.b16 %v59
    %v695 = vunpack.c.l.b16 %v60
    %v696 = vunpack.c.l.b16 %v61
    %v697 = vunpack.c.l.b16 %v62
    %v698 = vunpack.c.l.b16 %v63
    %v699 = vunpack.c.l.b16 %v64
    %v700 = vunpack.c.l.b16 %v65
    %v701 = vunpack.c.l.b16 %v66
    %v702 = vunpack.c.l.b16 %v67
    %v703 = vunpack.c.l.b16 %v68
    %v704 = vunpack.c.l.b16 %v69
    %v705 = vunpack.c.l.b16 %v70
    %v706 = vunpack.c.l.b16 %v71
    %v707 = vunpack.c.l.b16 %v72
    %v708 = vunpack.c.l.b16 %v73
    %v709 = vunpack.c.l.b16 %v74
    %v710 = vunpack.c.l.b16 %v75
    %v711 = vunpack.c.l.b16 %v76
    %v712 = vunpack.c.l.b16 %v77
    %v713 = vunpack.c.l.b16 %v78
    %v714 = vunpack.c.l.b16 %v79
    %v715 = vunpack.c.l.b16 %v80
    %v716 = vunpack.c.l.b16 %v81
    %v717 = vunpack.c.l.b16 %v82
    %v718 = vunpack.c.l.b16 %v83
    %v719 = vunpack.c.l.b16 %v84
    %v720 = vunpack.c.l.b16 %v85
    %v721 = vunpack.c.l.b16 %v86
    %v722 = vunpack.c.l.b16 %v87
    %v723 = vunpack.c.l.b16 %v88
    %v724 = vunpack.c.l.b16 %v89
    %v725 = vunpack.c.l.b16 %v90
    %v726 = vunpack.c.l.b16 %v91
    %v727 = vunpack.c.l.b16 %v92
    %v728 = vunpack.c.l.b16 %v93
    %v729 = vunpack.c.l.b16 %v94
    %v730 = vunpack.c.l.b16 %v95
    %v731 = vunpack.c.l.b16 %v96
    %v732 = vunpack.c.l.b16 %v97
    %v733 = vunpack.c.l.b16 %v98
    %v734 = vunpack.c.l.b16 %v99
    %v735 = vunpack.c.l.b16 %v100
    %v736 = vunpack.c.l.b16 %v101
    %v737 = vunpack.c.l.b16 %v102
    %v738 = vunpack.c.l.b16 %v103
    %v739 = vunpack.c.l.b16 %v104
    %v740 = vunpack.c.l.b16 %v105
    %v741 = vunpack.c.l.b16 %v106
    %v742 = vunpack.c.l.b16 %v107
    %v743 = vunpack.c.l.b16 %v108
    %v744 = vunpack.c.l.b16 %v109
    %v745 = vunpack.c.l.b16 %v110
    %v746 = vunpack.c.l.b16 %v111
    %v747 = vunpack.c.l.b16 %v112
    %v748 = vunpack.c.l.b16 %v113
    %v749 = vunpack.c.l.b16 %v114
    %v750 = vunpack.c.l.b16 %v115
    %v751 = vunpack.c.l.b16 %v116
    %v752 = vunpack.c.l.b16 %v117
    %v753 = vunpack.c.l.b16 %v118
    %v754 = vunpack.c.l.b16 %v119
    %v755 = vunpack.c.l.b16 %v120
    %v756 = vunpack.c.l.b16 %v121
    %v757 = vunpack.c.l.b16 %v122
    %v758 = vunpack.c.l.b16 %v123
    %v759 = vunpack.c.l.b16 %v124
    %v760 = vunpack.c.l.b16 %v125
    %v761 = vunpack.c.l.b16 %v126
    %v762 = vunpack.c.l.b16 %v127
    %v763 = vunpack.c.l.b16 %v128
    %v764 = vunpack.c.l.b16 %v129
    %v765 = vunpack.c.l.b16 %v130
    %v766 = vunpack.c.l.b16 %v131
    %v767 = vunpack.c.l.b16 %v132
    %v768 = vunpack.c.l.b16 %v133
    %v769 = vunpack.c.l.b16 %v134
    %v770 = vunpack.c.l.b16 %v135
    %v771 = vunpack.c.l.b16 %v136
    %v772 = vunpack.c.l.b16 %v137
    %v773 = vunpack.c.l.b16 %v138
    %v774 = vunpack.c.l.b16 %v139
    %v775 = vunpack.c.l.b16 %v140
    %v776 = vunpack.c.l.b16 %v141
    %v777 = vunpack.c.l.b16 %v142
    %v778 = vunpack.c.l.b16 %v143
    %v779 = vunpack.c.l.b16 %v144
    %v780 = vunpack.c.l.b16 %v145
    %v781 = vunpack.c.l.b16 %v146
    %v782 = vunpack.c.l.b16 %v147
    %v783 = vunpack.c.l.b16 %v148
    %v784 = vunpack.c.l.b16 %v149
    %v785 = vunpack.c.l.b16 %v150
    %v786 = vunpack.c.l.b16 %v151
    %v787 = vunpack.c.l.b16 %v152
    %v788 = vunpack.c.l.b16 %v153
    %v789 = vunpack.c.l.b16 %v154
    %v790 = vunpack.c.l.b16 %v155
    %v791 = vunpack.c.l.b16 %v156
    %v792 = vunpack.c.l.b16 %v157
    %v793 = vunpack.c.l.b16 %v158
    %v794 = vunpack.c.l.b16 %v159
    %v795 = vunpack.c.l.b16 %v160
    %v796 = vunpack.c.l.b16 %v161
    %v797 = vunpack.c.l.b16 %v162
    %v798 = vunpack.c.l.b16 %v163
    %v799 = vunpack.c.l.b16 %v164
    %v800 = vunpack.c.l.b16 %v165
    %v801 = vunpack.c.l.b16 %v166
    %v802 = vunpack.c.l.b16 %v167
    %v803 = vunpack.c.l.b16 %v168
    %v804 = vunpack.c.l.b16 %v169
    %v805 = vunpack.c.l.b16 %v170
    %v806 = vunpack.c.l.b16 %v171
    %v807 = vunpack.c.l.b16 %v172
    %v808 = vunpack.c.l.b16 %v173
    %v809 = vunpack.c.l.b16 %v174
    %v810 = vunpack.c.l.b16 %v175
    %v811 = vunpack.c.l.b16 %v176
    %v812 = vunpack.c.l.b16 %v177
    %v813 = vunpack.c.l.b16 %v178
    %v814 = vunpack.c.l.b16 %v179
    %v815 = vunpack.c.l.b16 %v180
    %v816 = vunpack.c.l.b16 %v181
    %v817 = vunpack.c.l.b16 %v182
    %v818 = vunpack.c.l.b16 %v183
    %v819 = vunpack.c.l.b16 %v184
    %v820 = vunpack.c.l.b16 %v185
    %v821 = vunpack.c.l.b16 %v186
    %v822 = vunpack.c.l.b16 %v187
    %v823 = vunpack.c.l.b16 %v188
    %v824 = vunpack.c.l.b16 %v189
    %v825 = vunpack.c.l.b16 %v190
    %v826 = vunpack.c.l.b16 %v191
    %v827 = vunpack.c.l.b16 %v192
    %v828 = vunpack.c.l.b16 %v193
    %v829 = vunpack.c.l.b16 %v194
    %v830 = vunpack.c.l.b16 %v195
    %v831 = vunpack.c.l.b16 %v196
    %v832 = vunpack.c.l.b16 %v197
    %v833 = vunpack.c.l.b16 %v198
    %v834 = vunpack.c.l.b16 %v199
    %v835 = vunpack.c.l.b16 %v200
    %v836 = vunpack.c.l.b16 %v201
    %v837 = vunpack.c.l.b16 %v202
    %v838 = vunpack.c.l.b16 %v203
    %v839 = vunpack.c.l.b16 %v204
    %v840 = vunpack.c.l.b16 %v205
    %v841 = vunpack.c.l.b16 %v206
    %v842 = vunpack.c.l.b16 %v207
    %v843 = vunpack.c.l.b16 %v208
    %v844 = vunpack.c.l.b16 %v209
    %v845 = vunpack.c.l.b16 %v210
    %v846 = vunpack.c.l.b16 %v211
    %v847 = vunpack.c.l.b16 %v212
    %v848 = vunpack.c.l.b16 %v213
    %v849 = vunpack.c.l.b16 %v214
    %v850 = vunpack.c.l.b16 %v215
    %v851 = vunpack.c.l.b16 %v216
    %v852 = vunpack.c.l.b16 %v217
    %v853 = vunpack.c.l.b16 %v218
    %v854 = vunpack.c.l.b16 %v219
    %v855 = vunpack.c.l.b16 %v220
    %v856 = vunpack.c.l.b16 %v221
    %v857 = vunpack.c.l.b16 %v222
    %v858 = vunpack.c.l.b16 %v223
    %v859 = vunpack.c.l.b16 %v224
    %v860 = vunpack.c.l.b16 %v225
    %v861 = vunpack.c.l.b16 %v226
    %v862 = vunpack.c.l.b16 %v227
    %v863 = vunpack.c.l.b16 %v228
    %v864 = vunpack.c.l.b16 %v229
    %v865 = vunpack.c.l.b16 %v230
    %v866 = vunpack.c.l.b16 %v231
    %v867 = vunpack.c.l.b16 %v232
    %v868 = vunpack.c.l.b16 %v233
    %v869 = vunpack.c.l.b16 %v234
    %v870 = vunpack.c.l.b16 %v235
    %v871 = vunpack.c.l.b16 %v236
    %v872 = vunpack.c.l.b16 %v237
    %v873 = vunpack.c.l.b16 %v238
    %v874 = vunpack.c.l.b16 %v239
    %v875 = vunpack.c.l.b16 %v240
    %v876 = vunpack.c.l.b16 %v241
    %v877 = vunpack.c.l.b16 %v242
    %v878 = vunpack.c.l.b16 %v243
    %v879 = vunpack.c.l.b16 %v244
    %v880 = vunpack.c.l.b16 %v245
    %v881 = vunpack.c.l.b16 %v246
    %v882 = vunpack.c.l.b16 %v247
    %v883 = vunpack.c.l.b16 %v248
    %v884 = vunpack.c.l.b16 %v249
    %v885 = vunpack.c.l.b16 %v250
    %v886 = vunpack.c.l.b16 %v251
    %v887 = vunpack.c.l.b16 %v252
    %v888 = vunpack.c.l.b16 %v253
    %v889 = vunpack.c.l.b16 %v254
    %v890 = vunpack.c.l.b16 %v255
    %v891 = vunpack.c.l.b16 %v256
    %v892 = vunpack.c.l.b16 %v257
    %v893 = vunpack.c.l.b16 %v258
    %v894 = vunpack.c.l.b16 %v259
    %v895 = vunpack.c.l.b16 %v260
    %v896 = vunpack.c.l.b16 %v261
    %v897 = vunpack.c.l.b16 %v262
    %v898 = vunpack.c.l.b16 %v263
    %v899 = vunpack.c.l.b16 %v264
    %v900 = vunpack.c.l.b16 %v265
    %v901 = vunpack.c.l.b16 %v266
    %v902 = vunpack.c.l.b16 %v267
    %v903 = vunpack.c.l.b16 %v268
    %v904 = vunpack.c.l.b16 %v269
    %v905 = vunpack.c.l.b16 %v270
    %v906 = vunpack.c.l.b16 %v271
    %v907 = vunpack.c.l.b16 %v272
    %v908 = vunpack.c.l.b16 %v273
    %v909 = vunpack.c.l.b16 %v274
    %v910 = vunpack.c.l.b16 %v275
    %v911 = vunpack.c.l.b16 %v276
    %v912 = vunpack.c.l.b16 %v277
    %v913 = vunpack.c.l.b16 %v278
    %v914 = vunpack.c.l.b16 %v279
    %v915 = vpack.c.b16 %v660, %v659
    %v916 = vpack.c.b16 %v662, %v661
    %v917 = vpack.c.b16 %v664, %v663
    %v918 = vpack.c.b16 %v666, %v665
    %v919 = vpack.c.b16 %v668, %v667
    %v920 = vpack.c.b16 %v670, %v669
    %v921 = vpack.c.b16 %v672, %v671
    %v922 = vpack.c.b16 %v674, %v673
    %v923 = vpack.c.b16 %v676, %v675
    %v924 = vpack.c.b16 %v678, %v677
    %v925 = vpack.c.b16 %v680, %v679
    %v926 = vpack.c.b16 %v682, %v681
    %v927 = vpack.c.b16 %v684, %v683
    %v928 = vpack.c.b16 %v686, %v685
    %v929 = vpack.c.b16 %v688, %v687
    %v930 = vpack.c.b16 %v690, %v689
    %v931 = vpack.c.b16 %v692, %v691
    %v932 = vpack.c.b16 %v694, %v693
    %v933 = vpack.c.b16 %v696, %v695
    %v934 = vpack.c.b16 %v698, %v697
    %v935 = vpack.c.b16 %v700, %v699
    %v936 = vpack.c.b16 %v702, %v701
    %v937 = vpack.c.b16 %v704, %v703
    %v938 = vpack.c.b16 %v706, %v705
    %v939 = vpack.c.b16 %v708, %v707
    %v940 = vpack.c.b16 %v710, %v709
    %v941 = vpack.c.b16 %v712, %v711
    %v942 = vpack.c.b16 %v714, %v713
    %v943 = vpack.c.b16 %v716, %v715
    %v944 = vpack.c.b16 %v718, %v717
    %v945 = vpack.c.b16 %v720, %v719
    %v946 = vpack.c.b16 %v722, %v721
    %v947 = vpack.c.b16 %v724, %v723
    %v948 = vpack.c.b16 %v726, %v725
    %v949 = vpack.c.b16 %v728, %v727
    %v950 = vpack.c.b16 %v730, %v729
    %v951 = vpack.c.b16 %v732, %v731
    %v952 = vpack.c.b16 %v734, %v733
    %v953 = vpack.c.b16 %v736, %v735
    %v954 = vpack.c.b16 %v738, %v737
    %v955 = vpack.c.b16 %v740, %v739
    %v956 = vpack.c.b16 %v742, %v741
    %v957 = vpack.c.b16 %v744, %v743
    %v958 = vpack.c.b16 %v746, %v745
    %v959 = vpack.c.b16 %v748, %v747
    %v960 = vpack.c.b16 %v750, %v749
    %v961 = vpack.c.b16 %v752, %v751
    %v962 = vpack.c.b16 %v754, %v753
    %v963 = vpack.c.b16 %v756, %v755
    %v964 = vpack.c.b16 %v758, %v757
    %v965 = vpack.c.b16 %v760, %v759
    %v966 = vpack.c.b16 %v762, %v761
    %v967 = vpack.c.b16 %v764, %v763
    %v968 = vpack.c.b16 %v766, %v765
    %v969 = vpack.c.b16 %v768, %v767
    %v970 = vpack.c.b16 %v770, %v769
    %v971 = vpack.c.b16 %v772, %v771
    %v972 = vpack.c.b16 %v774, %v773
    %v973 = vpack.c.b16 %v776, %v775
    %v974 = vpack.c.b16 %v778, %v777
    %v975 = vpack.c.b16 %v780, %v779
    %v976 = vpack.c.b16 %v782, %v781
    %v977 = vpack.c.b16 %v784, %v783
    %v978 = vpack.c.b16 %v786, %v785
    %v979 = vpack.c.b16 %v788, %v787
    %v980 = vpack.c.b16 %v790, %v789
    %v981 = vpack.c.b16 %v792, %v791
    %v982 = vpack.c.b16 %v794, %v793
    %v983 = vpack.c.b16 %v796, %v795
    %v984 = vpack.c.b16 %v798, %v797
    %v985 = vpack.c.b16 %v800, %v799
    %v986 = vpack.c.b16 %v802, %v801
    %v987 = vpack.c.b16 %v804, %v803
    %v988 = vpack.c.b16 %v806, %v805
    %v989 = vpack.c.b16 %v808, %v807
    %v990 = vpack.c.b16 %v810, %v809
    %v991 = vpack.c.b16 %v812, %v811
    %v992 = vpack.c.b16 %v814, %v813
    %v993 = vpack.c.b16 %v816, %v815
    %v994 = vpack.c.b16 %v818, %v817
    %v995 = vpack.c.b16 %v820, %v819
    %v996 = vpack.c.b16 %v822, %v821
    %v997 = vpack.c.b16 %v824, %v823
    %v998 = vpack.c.b16 %v826, %v825
    %v999 = vpack.c.b16 %v828, %v827
    %v1000 = vpack.c.b16 %v830, %v829
    %v1001 = vpack.c.b16 %v832, %v831
    %v1002 = vpack.c.b16 %v834, %v833
    %v1003 = vpack.c.b16 %v836, %v835
    %v1004 = vpack.c.b16 %v838, %v837
    %v1005 = vpack.c.b16 %v840, %v839
    %v1006 = vpack.c.b16 %v842, %v841
    %v1007 = vpack.c.b16 %v844, %v843
    %v1008 = vpack.c.b16 %v846, %v845
    %v1009 = vpack.c.b16 %v848, %v847
    %v1010 = vpack.c.b16 %v850, %v849
    %v1011 = vpack.c.b16 %v852, %v851
    %v1012 = vpack.c.b16 %v854, %v853
    %v1013 = vpack.c.b16 %v856, %v855
    %v1014 = vpack.c.b16 %v858, %v857
    %v1015 = vpack.c.b16 %v860, %v859
    %v1016 = vpack.c.b16 %v862, %v861
    %v1017 = vpack.c.b16 %v864, %v863
    %v1018 = vpack.c.b16 %v866, %v865
    %v1019 = vpack.c.b16 %v868, %v867
    %v1020 = vpack.c.b16 %v870, %v869
    %v1021 = vpack.c.b16 %v872, %v871
    %v1022 = vpack.c.b16 %v874, %v873
    %v1023 = vpack.c.b16 %v876, %v875
    %v1024 = vpack.c.b16 %v878, %v877
    %v1025 = vpack.c.b16 %v880, %v879
    %v1026 = vpack.c.b16 %v882, %v881
    %v1027 = vpack.c.b16 %v884, %v883
    %v1028 = vpack.c.b16 %v886, %v885
    %v1029 = vpack.c.b16 %v888, %v887
    %v1030 = vpack.c.b16 %v890, %v889
    %v1031 = vpack.c.b16 %v892, %v891
    %v1032 = vpack.c.b16 %v894, %v893
    %v1033 = vpack.c.b16 %v896, %v895
    %v1034 = vpack.c.b16 %v898, %v897
    %v1035 = vpack.c.b16 %v900, %v899
    %v1036 = vpack.c.b16 %v902, %v901
    %v1037 = vpack.c.b16 %v904, %v903
    %v1038 = vpack.c.b16 %v906, %v905
    %v1039 = vpack.c.b16 %v908, %v907
    %v1040 = vpack.c.b16 %v910, %v909
    %v1041 = vpack.c.b16 %v912, %v911
    %v1042 = vpack.c.b16 %v914, %v913
    %1171 = vmatprep.subr.bf16.mxu0 0
    %1172 = vmatpush1.bf16.msra.mxu0 %v915
    %1173 = vmatprep.subr.bf16.mxu0 0
    %1174 = vmatpush1.bf16.msra.mxu0 %v916
    %1175 = vmatprep.subr.bf16.mxu0 0
    %1176 = vmatpush1.bf16.msra.mxu0 %v917
    %1177 = vmatprep.subr.bf16.mxu0 0
    %1178 = vmatpush1.bf16.msra.mxu0 %v918
    %1179 = vmatprep.subr.bf16.mxu0 0
    %1180 = vmatpush1.bf16.msra.mxu0 %v919
    %1181 = vmatprep.subr.bf16.mxu0 0
    %1182 = vmatpush1.bf16.msra.mxu0 %v920
    %1183 = vmatprep.subr.bf16.mxu0 0
    %1184 = vmatpush1.bf16.msra.mxu0 %v921
    %1185 = vmatprep.subr.bf16.mxu0 0
    %1186 = vmatpush1.bf16.msra.mxu0 %v922
    %1187 = vmatprep.subr.bf16.mxu0 0
    %1188 = vmatpush1.bf16.msra.mxu0 %v923
    %1189 = vmatprep.subr.bf16.mxu0 0
    %1190 = vmatpush1.bf16.msra.mxu0 %v924
    %1191 = vmatprep.subr.bf16.mxu0 0
    %1192 = vmatpush1.bf16.msra.mxu0 %v925
    %1193 = vmatprep.subr.bf16.mxu0 0
    %1194 = vmatpush1.bf16.msra.mxu0 %v926
    %1195 = vmatprep.subr.bf16.mxu0 0
    %1196 = vmatpush1.bf16.msra.mxu0 %v927
    %1197 = vmatprep.subr.bf16.mxu0 0
    %1198 = vmatpush1.bf16.msra.mxu0 %v928
    %1199 = vmatprep.subr.bf16.mxu0 0
    %1200 = vmatpush1.bf16.msra.mxu0 %v929
    %1201 = vmatprep.subr.bf16.mxu0 0
    %1202 = vmatpush1.bf16.msra.mxu0 %v930
    %1203 = vmatprep.mubr.bf16.mxu0 %v326
    %1204 = vmatmul.mubr.bf16.gmra.mrb[0].mxu0 %v312
    %v1205 = vpop.f32.mrb[0].mxu0
    %v1206 = vadd.f32 %v285, %v1205
    %v1207 = vpop.f32.mrb[0].mxu0
    %v1208 = vpop.f32.mrb[0].mxu0
    %v1209 = vpop.f32.mrb[0].mxu0
    %1210 = vdwg.mxu0
    %1211 = vmatprep.subr.bf16.mxu0 0
    %1212 = vmatpush1.bf16.msra.mxu0 %v931
    %1213 = vmatprep.subr.bf16.mxu0 0
    %1214 = vmatpush1.bf16.msra.mxu0 %v932
    %1215 = vmatprep.subr.bf16.mxu0 0
    %1216 = vmatpush1.bf16.msra.mxu0 %v933
    %1217 = vmatprep.subr.bf16.mxu0 0
    %1218 = vmatpush1.bf16.msra.mxu0 %v934
    %1219 = vmatprep.subr.bf16.mxu0 0
    %1220 = vmatpush1.bf16.msra.mxu0 %v935
    %1221 = vmatprep.subr.bf16.mxu0 0
    %1222 = vmatpush1.bf16.msra.mxu0 %v936
    %1223 = vmatprep.subr.bf16.mxu0 0
    %1224 = vmatpush1.bf16.msra.mxu0 %v937
    %1225 = vmatprep.subr.bf16.mxu0 0
    %1226 = vmatpush1.bf16.msra.mxu0 %v938
    %1227 = vmatprep.subr.bf16.mxu0 0
    %1228 = vmatpush1.bf16.msra.mxu0 %v939
    %1229 = vmatprep.subr.bf16.mxu0 0
    %1230 = vmatpush1.bf16.msra.mxu0 %v940
    %1231 = vmatprep.subr.bf16.mxu0 0
    %1232 = vmatpush1.bf16.msra.mxu0 %v941
    %1233 = vmatprep.subr.bf16.mxu0 0
    %1234 = vmatpush1.bf16.msra.mxu0 %v942
    %1235 = vmatprep.subr.bf16.mxu0 0
    %1236 = vmatpush1.bf16.msra.mxu0 %v943
    %1237 = vmatprep.subr.bf16.mxu0 0
    %1238 = vmatpush1.bf16.msra.mxu0 %v944
    %1239 = vmatprep.subr.bf16.mxu0 0
    %1240 = vmatpush1.bf16.msra.mxu0 %v945
    %1241 = vmatprep.subr.bf16.mxu0 0
    %1242 = vmatpush1.bf16.msra.mxu0 %v946
    %1243 = vmatprep.mubr.bf16.mxu0 %v336
    %1244 = vmatmul.mubr.bf16.gmra.mrb[0].mxu0 %v334
    %v1245 = vpop.f32.mrb[0].mxu0
    %v1246 = vadd.f32 %v1206, %v1245
    %v1247 = vpop.f32.mrb[0].mxu0
    %v1248 = vpop.f32.mrb[0].mxu0
    %v1249 = vpop.f32.mrb[0].mxu0
    %1250 = vdwg.mxu0
    %1251 = vmatprep.subr.bf16.mxu0 0
    %1252 = vmatpush1.bf16.msra.mxu0 %v947
    %1253 = vmatprep.subr.bf16.mxu0 0
    %1254 = vmatpush1.bf16.msra.mxu0 %v948
    %1255 = vmatprep.subr.bf16.mxu0 0
    %1256 = vmatpush1.bf16.msra.mxu0 %v949
    %1257 = vmatprep.subr.bf16.mxu0 0
    %1258 = vmatpush1.bf16.msra.mxu0 %v950
    %1259 = vmatprep.subr.bf16.mxu0 0
    %1260 = vmatpush1.bf16.msra.mxu0 %v951
    %1261 = vmatprep.subr.bf16.mxu0 0
    %1262 = vmatpush1.bf16.msra.mxu0 %v952
    %1263 = vmatprep.subr.bf16.mxu0 0
    %1264 = vmatpush1.bf16.msra.mxu0 %v953
    %1265 = vmatprep.subr.bf16.mxu0 0
    %1266 = vmatpush1.bf16.msra.mxu0 %v954
    %1267 = vmatprep.subr.bf16.mxu0 0
    %1268 = vmatpush1.bf16.msra.mxu0 %v955
    %1269 = vmatprep.subr.bf16.mxu0 0
    %1270 = vmatpush1.bf16.msra.mxu0 %v956
    %1271 = vmatprep.subr.bf16.mxu0 0
    %1272 = vmatpush1.bf16.msra.mxu0 %v957
    %1273 = vmatprep.subr.bf16.mxu0 0
    %1274 = vmatpush1.bf16.msra.mxu0 %v958
    %1275 = vmatprep.subr.bf16.mxu0 0
    %1276 = vmatpush1.bf16.msra.mxu0 %v959
    %1277 = vmatprep.subr.bf16.mxu0 0
    %1278 = vmatpush1.bf16.msra.mxu0 %v960
    %1279 = vmatprep.subr.bf16.mxu0 0
    %1280 = vmatpush1.bf16.msra.mxu0 %v961
    %1281 = vmatprep.subr.bf16.mxu0 0
    %1282 = vmatpush1.bf16.msra.mxu0 %v962
    %1283 = vmatprep.mubr.bf16.mxu0 %v333
    %1284 = vmatmul.mubr.bf16.gmra.mrb[0].mxu0 %v319
    %v1285 = vpop.f32.mrb[0].mxu0
    %v1286 = vadd.f32 %v1246, %v1285
    %v1287 = vpop.f32.mrb[0].mxu0
    %v1288 = vpop.f32.mrb[0].mxu0
    %v1289 = vpop.f32.mrb[0].mxu0
    %1290 = vdwg.mxu0
    %1291 = vmatprep.subr.bf16.mxu0 0
    %1292 = vmatpush1.bf16.msra.mxu0 %v963
    %1293 = vmatprep.subr.bf16.mxu0 0
    %1294 = vmatpush1.bf16.msra.mxu0 %v964
    %1295 = vmatprep.subr.bf16.mxu0 0
    %1296 = vmatpush1.bf16.msra.mxu0 %v965
    %1297 = vmatprep.subr.bf16.mxu0 0
    %1298 = vmatpush1.bf16.msra.mxu0 %v966
    %1299 = vmatprep.subr.bf16.mxu0 0
    %1300 = vmatpush1.bf16.msra.mxu0 %v967
    %1301 = vmatprep.subr.bf16.mxu0 0
    %1302 = vmatpush1.bf16.msra.mxu0 %v968
    %1303 = vmatprep.subr.bf16.mxu0 0
    %1304 = vmatpush1.bf16.msra.mxu0 %v969
    %1305 = vmatprep.subr.bf16.mxu0 0
    %1306 = vmatpush1.bf16.msra.mxu0 %v970
    %1307 = vmatprep.subr.bf16.mxu0 0
    %1308 = vmatpush1.bf16.msra.mxu0 %v971
    %1309 = vmatprep.subr.bf16.mxu0 0
    %1310 = vmatpush1.bf16.msra.mxu0 %v972
    %1311 = vmatprep.subr.bf16.mxu0 0
    %1312 = vmatpush1.bf16.msra.mxu0 %v973
    %1313 = vmatprep.subr.bf16.mxu0 0
    %1314 = vmatpush1.bf16.msra.mxu0 %v974
    %1315 = vmatprep.subr.bf16.mxu0 0
    %1316 = vmatpush1.bf16.msra.mxu0 %v975
    %1317 = vmatprep.subr.bf16.mxu0 0
    %1318 = vmatpush1.bf16.msra.mxu0 %v976
    %1319 = vmatprep.subr.bf16.mxu0 0
    %1320 = vmatpush1.bf16.msra.mxu0 %v977
    %1321 = vmatprep.subr.bf16.mxu0 0
    %1322 = vmatpush1.bf16.msra.mxu0 %v978
    %1323 = vmatprep.mubr.bf16.mxu0 %v337
    %1324 = vmatmul.mubr.bf16.gmra.mrb[0].mxu0 %v335
    %v1325 = vpop.f32.mrb[0].mxu0
    %v1326 = vadd.f32 %v1286, %v1325
    %v1327 = vpop.f32.mrb[0].mxu0
    %v1328 = vpop.f32.mrb[0].mxu0
    %v1329 = vpop.f32.mrb[0].mxu0
    %1330 = vdwg.mxu0
    %1331 = vmatprep.subr.bf16.mxu0 0
    %1332 = vmatpush1.bf16.msra.mxu0 %v979
    %1333 = vmatprep.subr.bf16.mxu0 0
    %1334 = vmatpush1.bf16.msra.mxu0 %v980
    %1335 = vmatprep.subr.bf16.mxu0 0
    %1336 = vmatpush1.bf16.msra.mxu0 %v981
    %1337 = vmatprep.subr.bf16.mxu0 0
    %1338 = vmatpush1.bf16.msra.mxu0 %v982
    %1339 = vmatprep.subr.bf16.mxu0 0
    %1340 = vmatpush1.bf16.msra.mxu0 %v983
    %1341 = vmatprep.subr.bf16.mxu0 0
    %1342 = vmatpush1.bf16.msra.mxu0 %v984
    %1343 = vmatprep.subr.bf16.mxu0 0
    %1344 = vmatpush1.bf16.msra.mxu0 %v985
    %1345 = vmatprep.subr.bf16.mxu0 0
    %1346 = vmatpush1.bf16.msra.mxu0 %v986
    %1347 = vmatprep.subr.bf16.mxu0 0
    %1348 = vmatpush1.bf16.msra.mxu0 %v987
    %1349 = vmatprep.subr.bf16.mxu0 0
    %1350 = vmatpush1.bf16.msra.mxu0 %v988
    %1351 = vmatprep.subr.bf16.mxu0 0
    %1352 = vmatpush1.bf16.msra.mxu0 %v989
    %1353 = vmatprep.subr.bf16.mxu0 0
    %1354 = vmatpush1.bf16.msra.mxu0 %v990
    %1355 = vmatprep.subr.bf16.mxu0 0
    %1356 = vmatpush1.bf16.msra.mxu0 %v991
    %1357 = vmatprep.subr.bf16.mxu0 0
    %1358 = vmatpush1.bf16.msra.mxu0 %v992
    %1359 = vmatprep.subr.bf16.mxu0 0
    %1360 = vmatpush1.bf16.msra.mxu0 %v993
    %1361 = vmatprep.subr.bf16.mxu0 0
    %1362 = vmatpush1.bf16.msra.mxu0 %v994
    %1363 = vmatprep.mubr.bf16.mxu0 %v375
    %1364 = vmatmul.mubr.bf16.gmra.mrb[0].mxu0 %v361
    %v1365 = vpop.f32.mrb[0].mxu0
    %v1366 = vadd.f32 %v1326, %v1365
    %v1367 = vpop.f32.mrb[0].mxu0
    %v1368 = vpop.f32.mrb[0].mxu0
    %v1369 = vpop.f32.mrb[0].mxu0
    %1370 = vdwg.mxu0
    %1371 = vmatprep.subr.bf16.mxu0 0
    %1372 = vmatpush1.bf16.msra.mxu0 %v995
    %1373 = vmatprep.subr.bf16.mxu0 0
    %1374 = vmatpush1.bf16.msra.mxu0 %v996
    %1375 = vmatprep.subr.bf16.mxu0 0
    %1376 = vmatpush1.bf16.msra.mxu0 %v997
    %1377 = vmatprep.subr.bf16.mxu0 0
    %1378 = vmatpush1.bf16.msra.mxu0 %v998
    %1379 = vmatprep.subr.bf16.mxu0 0
    %1380 = vmatpush1.bf16.msra.mxu0 %v999
    %1381 = vmatprep.subr.bf16.mxu0 0
    %1382 = vmatpush1.bf16.msra.mxu0 %v1000
    %1383 = vmatprep.subr.bf16.mxu0 0
    %1384 = vmatpush1.bf16.msra.mxu0 %v1001
    %1385 = vmatprep.subr.bf16.mxu0 0
    %1386 = vmatpush1.bf16.msra.mxu0 %v1002
    %1387 = vmatprep.subr.bf16.mxu0 0
    %1388 = vmatpush1.bf16.msra.mxu0 %v1003
    %1389 = vmatprep.subr.bf16.mxu0 0
    %1390 = vmatpush1.bf16.msra.mxu0 %v1004
    %1391 = vmatprep.subr.bf16.mxu0 0
    %1392 = vmatpush1.bf16.msra.mxu0 %v1005
    %1393 = vmatprep.subr.bf16.mxu0 0
    %1394 = vmatpush1.bf16.msra.mxu0 %v1006
    %1395 = vmatprep.subr.bf16.mxu0 0
    %1396 = vmatpush1.bf16.msra.mxu0 %v1007
    %1397 = vmatprep.subr.bf16.mxu0 0
    %1398 = vmatpush1.bf16.msra.mxu0 %v1008
    %1399 = vmatprep.subr.bf16.mxu0 0
    %1400 = vmatpush1.bf16.msra.mxu0 %v1009
    %1401 = vmatprep.subr.bf16.mxu0 0
    %1402 = vmatpush1.bf16.msra.mxu0 %v1010
    %1403 = vmatprep.mubr.bf16.mxu0 %v385
    %1404 = vmatmul.mubr.bf16.gmra.mrb[0].mxu0 %v383
    %v1405 = vpop.f32.mrb[0].mxu0
    %v1406 = vadd.f32 %v1366, %v1405
    %v1407 = vpop.f32.mrb[0].mxu0
    %v1408 = vpop.f32.mrb[0].mxu0
    %v1409 = vpop.f32.mrb[0].mxu0
    %1410 = vdwg.mxu0
    %1411 = vmatprep.subr.bf16.mxu0 0
    %1412 = vmatpush1.bf16.msra.mxu0 %v1011
    %1413 = vmatprep.subr.bf16.mxu0 0
    %1414 = vmatpush1.bf16.msra.mxu0 %v1012
    %1415 = vmatprep.subr.bf16.mxu0 0
    %1416 = vmatpush1.bf16.msra.mxu0 %v1013
    %1417 = vmatprep.subr.bf16.mxu0 0
    %1418 = vmatpush1.bf16.msra.mxu0 %v1014
    %1419 = vmatprep.subr.bf16.mxu0 0
    %1420 = vmatpush1.bf16.msra.mxu0 %v1015
    %1421 = vmatprep.subr.bf16.mxu0 0
    %1422 = vmatpush1.bf16.msra.mxu0 %v1016
    %1423 = vmatprep.subr.bf16.mxu0 0
    %1424 = vmatpush1.bf16.msra.mxu0 %v1017
    %1425 = vmatprep.subr.bf16.mxu0 0
    %1426 = vmatpush1.bf16.msra.mxu0 %v1018
    %1427 = vmatprep.subr.bf16.mxu0 0
    %1428 = vmatpush1.bf16.msra.mxu0 %v1019
    %1429 = vmatprep.subr.bf16.mxu0 0
    %1430 = vmatpush1.bf16.msra.mxu0 %v1020
    %1431 = vmatprep.subr.bf16.mxu0 0
    %1432 = vmatpush1.bf16.msra.mxu0 %v1021
    %1433 = vmatprep.subr.bf16.mxu0 0
    %1434 = vmatpush1.bf16.msra.mxu0 %v1022
    %1435 = vmatprep.subr.bf16.mxu0 0
    %1436 = vmatpush1.bf16.msra.mxu0 %v1023
    %1437 = vmatprep.subr.bf16.mxu0 0
    %1438 = vmatpush1.bf16.msra.mxu0 %v1024
    %1439 = vmatprep.subr.bf16.mxu0 0
    %1440 = vmatpush1.bf16.msra.mxu0 %v1025
    %1441 = vmatprep.subr.bf16.mxu0 0
    %1442 = vmatpush1.bf16.msra.mxu0 %v1026
    %1443 = vmatprep.mubr.bf16.mxu0 %v382
    %1444 = vmatmul.mubr.bf16.gmra.mrb[0].mxu0 %v368
    %v1445 = vpop.f32.mrb[0].mxu0
    %v1446 = vadd.f32 %v1406, %v1445
    %v1447 = vpop.f32.mrb[0].mxu0
    %v1448 = vpop.f32.mrb[0].mxu0
    %v1449 = vpop.f32.mrb[0].mxu0
    %1450 = vdwg.mxu0
    %1451 = vmatprep.subr.bf16.mxu0 0
    %1452 = vmatpush1.bf16.msra.mxu0 %v1027
    %1453 = vmatprep.subr.bf16.mxu0 0
    %1454 = vmatpush1.bf16.msra.mxu0 %v1028
    %1455 = vmatprep.subr.bf16.mxu0 0
    %1456 = vmatpush1.bf16.msra.mxu0 %v1029
    %1457 = vmatprep.subr.bf16.mxu0 0
    %1458 = vmatpush1.bf16.msra.mxu0 %v1030
    %1459 = vmatprep.subr.bf16.mxu0 0
    %1460 = vmatpush1.bf16.msra.mxu0 %v1031
    %1461 = vmatprep.subr.bf16.mxu0 0
    %1462 = vmatpush1.bf16.msra.mxu0 %v1032
    %1463 = vmatprep.subr.bf16.mxu0 0
    %1464 = vmatpush1.bf16.msra.mxu0 %v1033
    %1465 = vmatprep.subr.bf16.mxu0 0
    %1466 = vmatpush1.bf16.msra.mxu0 %v1034
    %1467 = vmatprep.subr.bf16.mxu0 0
    %1468 = vmatpush1.bf16.msra.mxu0 %v1035
    %1469 = vmatprep.subr.bf16.mxu0 0
    %1470 = vmatpush1.bf16.msra.mxu0 %v1036
    %1471 = vmatprep.subr.bf16.mxu0 0
    %1472 = vmatpush1.bf16.msra.mxu0 %v1037
    %1473 = vmatprep.subr.bf16.mxu0 0
    %1474 = vmatpush1.bf16.msra.mxu0 %v1038
    %1475 = vmatprep.subr.bf16.mxu0 0
    %1476 = vmatpush1.bf16.msra.mxu0 %v1039
    %1477 = vmatprep.subr.bf16.mxu0 0
    %1478 = vmatpush1.bf16.msra.mxu0 %v1040
    %1479 = vmatprep.subr.bf16.mxu0 0
    %1480 = vmatpush1.bf16.msra.mxu0 %v1041
    %1481 = vmatprep.subr.bf16.mxu0 0
    %1482 = vmatpush1.bf16.msra.mxu0 %v1042
    %1483 = vmatprep.mubr.bf16.mxu0 %v386
    %1484 = vmatmul.mubr.bf16.gmra.mrb[0].mxu0 %v384
    %v1485 = vpop.f32.mrb[0].mxu0
    %v1486 = vadd.f32 %v1446, %v1485
    %v1487 = vpop.f32.mrb[0].mxu0
    %v1488 = vpop.f32.mrb[0].mxu0
    %v1489 = vpop.f32.mrb[0].mxu0
    %1490 = vdwg.mxu0
    %v1491 = vmax.f32 %v1486, 0.0
    %v1492 = vpack.c.bf16 %v1491, %v1491
    %v1493 = vld [vmem:[%s3] sm:$0xf]
    %v1494 = vld [vmem:[%s3 + $0x4] sm:$0xf]
    %v1495 = vld [vmem:[%s3 + $0x8] sm:$0xf]
    %v1496 = vld [vmem:[%s3 + $0xc] sm:$0xf]
    %v1497 = vld [vmem:[%s3 + $0x10] sm:$0xf]
    %v1498 = vld [vmem:[%s3 + $0x14] sm:$0xf]
    %v1499 = vld [vmem:[%s3 + $0x18] sm:$0xf]
    %v1500 = vld [vmem:[%s3 + $0x1c] sm:$0xf]
    %v1501 = vld [vmem:[%s3 + $0x20] sm:$0xf]
    %v1502 = vld [vmem:[%s3 + $0x24] sm:$0xf]
    %v1503 = vld [vmem:[%s3 + $0x28] sm:$0xf]
    %v1504 = vld [vmem:[%s3 + $0x2c] sm:$0xf]
    %v1505 = vld [vmem:[%s3 + $0x30] sm:$0xf]
    %v1506 = vld [vmem:[%s3 + $0x34] sm:$0xf]
    %v1507 = vld [vmem:[%s3 + $0x38] sm:$0xf]
    %v1508 = vld [vmem:[%s3 + $0x3c] sm:$0xf]
    %v1509 = vld [vmem:[%s4] sm:$0x1]
    %v1511 = vlaneseq
    %v1512 = vshrl.u32 %v1511, 7
    %v1513 = vsub.s32 0, %v1512
    %v1514 = vrot.slane %v1509, %v1513
    %v1532 = vunpack.c.l.b16 %v1493
    %v1533 = vunpack.c.l.b16 %v1494
    %v1534 = vunpack.c.l.b16 %v1495
    %v1535 = vunpack.c.l.b16 %v1496
    %v1536 = vunpack.c.l.b16 %v1497
    %v1537 = vunpack.c.l.b16 %v1498
    %v1538 = vunpack.c.l.b16 %v1499
    %v1539 = vunpack.c.l.b16 %v1500
    %v1540 = vunpack.c.l.b16 %v1501
    %v1541 = vunpack.c.l.b16 %v1502
    %v1542 = vunpack.c.l.b16 %v1503
    %v1543 = vunpack.c.l.b16 %v1504
    %v1544 = vunpack.c.l.b16 %v1505
    %v1545 = vunpack.c.l.b16 %v1506
    %v1546 = vunpack.c.l.b16 %v1507
    %v1547 = vunpack.c.l.b16 %v1508
    %v1548 = vpack.c.b16 %v1533, %v1532
    %v1549 = vpack.c.b16 %v1535, %v1534
    %v1550 = vpack.c.b16 %v1537, %v1536
    %v1551 = vpack.c.b16 %v1539, %v1538
    %v1552 = vpack.c.b16 %v1541, %v1540
    %v1553 = vpack.c.b16 %v1543, %v1542
    %v1554 = vpack.c.b16 %v1545, %v1544
    %v1555 = vpack.c.b16 %v1547, %v1546
    %1564 = vmatprep.subr.bf16.mxu0 0
    %1565 = vmatpush1.bf16.msra.mxu0 %v1548
    %1566 = vmatprep.subr.bf16.mxu0 0
    %1567 = vmatpush1.bf16.msra.mxu0 %v1549
    %1568 = vmatprep.subr.bf16.mxu0 0
    %1569 = vmatpush1.bf16.msra.mxu0 %v1550
    %1570 = vmatprep.subr.bf16.mxu0 0
    %1571 = vmatpush1.bf16.msra.mxu0 %v1551
    %1572 = vmatprep.subr.bf16.mxu0 0
    %1573 = vmatpush1.bf16.msra.mxu0 %v1552
    %1574 = vmatprep.subr.bf16.mxu0 0
    %1575 = vmatpush1.bf16.msra.mxu0 %v1553
    %1576 = vmatprep.subr.bf16.mxu0 0
    %1577 = vmatpush1.bf16.msra.mxu0 %v1554
    %1578 = vmatprep.subr.bf16.mxu0 0
    %1579 = vmatpush1.bf16.msra.mxu0 %v1555
    %1580 = vmatprep.subr.bf16.mxu0 0
    %1581 = vmatpush1.bf16.msra.mxu0 0
    %1582 = vmatprep.subr.bf16.mxu0 0
    %1583 = vmatpush1.bf16.msra.mxu0 0
    %1584 = vmatprep.subr.bf16.mxu0 0
    %1585 = vmatpush1.bf16.msra.mxu0 0
    %1586 = vmatprep.subr.bf16.mxu0 0
    %1587 = vmatpush1.bf16.msra.mxu0 0
    %1588 = vmatprep.subr.bf16.mxu0 0
    %1589 = vmatpush1.bf16.msra.mxu0 0
    %1590 = vmatprep.subr.bf16.mxu0 0
    %1591 = vmatpush1.bf16.msra.mxu0 0
    %1592 = vmatprep.subr.bf16.mxu0 0
    %1593 = vmatpush1.bf16.msra.mxu0 0
    %1594 = vmatprep.subr.bf16.mxu0 0
    %1595 = vmatpush1.bf16.msra.mxu0 0
    %1596 = vmatprep.mubr.bf16.mxu0 0
    %1597 = vmatmul.mubr.bf16.gmra.mrb[0].mxu0 %v1492
    %v1598 = vpop.f32.mrb[0].mxu0
    %v1599 = vadd.f32 %v1514, %v1598
    %v1600 = vpop.f32.mrb[0].mxu0
    %v1601 = vpop.f32.mrb[0].mxu0
    %v1602 = vpop.f32.mrb[0].mxu0
    %1603 = vdwg.mxu0
    %vm1604 = vcmask 74752
    %1605 = vst.msk [vmem:[#allocation2] sm:$0x3] %vm1604, %v1599
    // Predicated region
    $region22: #{net_forward.5} parent=1 // pred_check
      _
    $region23: #{net_forward.5} parent=1 // pred_check_branch
      %1607 = sbr.rel (0) target = $region25
    $region24: #{net_forward.5} parent=1 // pred_region
      %s1609 = ssub.s32 32, 32
      %1610 = vsyncadd [#allocation3], %s1609
      %s1612 = sshll.u32 [#allocation2], 4
      %s1613 = int_to_ptr.vmem [resolvable:$true] %s1612
      %1615 = dma.vmem_to_hbm [thread:$0]  %s1613, 32, %s5, [#allocation3]
    $region25: #{net_forward.5} parent=1 // pred_fallthru
      _
    // Predicated region
    $region26: #{net_forward.5} parent=1 // pred_check
      _
    $region27: #{net_forward.5} parent=1 // pred_check_branch
      %1617 = sbr.rel (0) target = $region29
    $region28: #{net_forward.5} parent=1 // pred_region
      %1618 = dma.done [#allocation3], 32
    $region29: #{net_forward.5} parent=1 // pred_fallthru
      _
    %1619 = vsyncpa [#allocation3], 1

</llo_original>
